<compile_context>
chip_gen: v7x
topology: tpu7x:2x2x1
jax: 0.10.0
libtpu: 0.0.40
codegen_flags: <defaults>
</compile_context>

<pallas_src>
import jax
import jax.numpy as jnp
from jax.experimental import pallas as pl
from jax.experimental.pallas import tpu as pltpu


# --------------------------- fused conv-stack kernel -------------------------

def _make_conv_kernel(NB, H, W):
    """conv1+relu -> conv2+relu -> maxpool2x2 -> conv3+relu for NB samples."""
    Hp, Wp = H // 2, W // 2
    S2 = Hp * Wp

    def kernel(x_ref, w1_ref, b1_ref, w2_ref, b2_ref, w3_ref, b3_ref,
               out_ref, xp2, xp3):
        f32 = jnp.float32

        def im2col(xp, Ho, Wo, Cin):
            # xp: (NB, Ho+2, Wo+2, Cin) zero-padded activation (traced value).
            # Returns (NB*Ho*Wo, 9*Cin) patches, rows ordered (n, h, w) and
            # columns ordered (kh, kw, ci) -- matches conv_mat() below.
            slabs = [xp[:, dh:dh + Ho, dw:dw + Wo, :]
                     for dh in range(3) for dw in range(3)]
            return jnp.concatenate(slabs, axis=-1).reshape(NB * Ho * Wo, 9 * Cin)

        # ---------------- conv1 (3 -> 16); input pre-padded by the wrapper ----
        p1 = im2col(x_ref[...], H, W, 3)
        a1 = jnp.maximum(
            jnp.dot(p1, w1_ref[...], preferred_element_type=f32) + b1_ref[...],
            0.0)                                              # (NB*H*W, 16)

        # ---------------- conv2 (16 -> 32) -------------------------------------
        # zero only the 1-pixel border strips (cheap, megacore-safe), then one
        # lane-dense interior store of the previous activation.
        xp2[:, 0:1, :, :] = jnp.zeros((NB, 1, W + 2, 16), f32)
        xp2[:, H + 1:H + 2, :, :] = jnp.zeros((NB, 1, W + 2, 16), f32)
        xp2[:, :, 0:1, :] = jnp.zeros((NB, H + 2, 1, 16), f32)
        xp2[:, :, W + 1:W + 2, :] = jnp.zeros((NB, H + 2, 1, 16), f32)
        xp2[:, 1:H + 1, 1:W + 1, :] = a1.reshape(NB, H, W, 16)

        p2 = im2col(xp2[...], H, W, 16)
        a2 = jnp.maximum(
            jnp.dot(p2, w2_ref[...], preferred_element_type=f32) + b2_ref[...],
            0.0)                                              # (NB*H*W, 32)

        # ---------------- maxpool 2x2, stride 2 (pure VPU) ---------------------
        a2r = a2.reshape(NB * Hp, 2, W, 32)
        rmax = jnp.maximum(a2r[:, 0], a2r[:, 1])              # (NB*Hp, W, 32)
        cpair = rmax.reshape(NB * Hp, Wp, 2, 32)
        pooled = jnp.maximum(cpair[:, :, 0], cpair[:, :, 1])  # (NB*Hp, Wp, 32)

        # ---------------- conv3 (32 -> 64) -------------------------------------
        xp3[:, 0:1, :, :] = jnp.zeros((NB, 1, Wp + 2, 32), f32)
        xp3[:, Hp + 1:Hp + 2, :, :] = jnp.zeros((NB, 1, Wp + 2, 32), f32)
        xp3[:, :, 0:1, :] = jnp.zeros((NB, Hp + 2, 1, 32), f32)
        xp3[:, :, Wp + 1:Wp + 2, :] = jnp.zeros((NB, Hp + 2, 1, 32), f32)
        xp3[:, 1:Hp + 1, 1:Wp + 1, :] = pooled.reshape(NB, Hp, Wp, 32)

        p3 = im2col(xp3[...], Hp, Wp, 32)
        a3 = jnp.maximum(
            jnp.dot(p3, w3_ref[...], preferred_element_type=f32) + b3_ref[...],
            0.0)                                              # (NB*S2, 64)

        out_ref[...] = a3.reshape(NB, S2, 64).astype(out_ref.dtype)

    return kernel


def _pick_batch_block(B, cap=8):
    """Largest NB <= cap dividing B while keeping >= 2 grid steps (so the
    'parallel' batch axis can shard across v7x's two TensorCores)."""
    if B < 2:
        return 1
    best = 1
    for nb in range(1, min(B, cap) + 1):
        if B % nb == 0 and (B // nb) >= 2:
            best = nb
    return best


def conv_stack(prep, x_nchw):
    B, Cin, H, W = x_nchw.shape
    assert Cin == 3 and H % 2 == 0 and W % 2 == 0, (
        "expected NCHW input with 3 channels and even H, W")
    Hp, Wp = H // 2, W // 2
    S2 = Hp * Wp
    NB = _pick_batch_block(B)

    # tiny (~KBs) layout glue: NCHW -> NHWC plus the conv1 zero padding
    x = jnp.transpose(x_nchw, (0, 2, 3, 1)).astype(jnp.float32)
    xpad = jnp.pad(x, ((0, 0), (1, 1), (1, 1), (0, 0)))       # (B, H+2, W+2, 3)

    return pl.pallas_call(
        _make_conv_kernel(NB, H, W),
        out_shape=jax.ShapeDtypeStruct((B, S2, 64), jnp.float32),
        grid=(B // NB,),
        in_specs=[
            pl.BlockSpec((NB, H + 2, W + 2, 3), lambda b: (b, 0, 0, 0)),
            pl.BlockSpec((27, 16), lambda b: (0, 0)),
            pl.BlockSpec((1, 16), lambda b: (0, 0)),
            pl.BlockSpec((144, 32), lambda b: (0, 0)),
            pl.BlockSpec((1, 32), lambda b: (0, 0)),
            pl.BlockSpec((288, 64), lambda b: (0, 0)),
            pl.BlockSpec((1, 64), lambda b: (0, 0)),
        ],
        out_specs=pl.BlockSpec((NB, S2, 64), lambda b: (b, 0, 0)),
        scratch_shapes=[
            pltpu.VMEM((NB, H + 2, W + 2, 16), jnp.float32),   # padded conv2 in
            pltpu.VMEM((NB, Hp + 2, Wp + 2, 32), jnp.float32), # padded conv3 in
        ],
        compiler_params=pltpu.CompilerParams(
            dimension_semantics=("parallel",)),
    )(xpad, prep["w1m"], prep["b1"], prep["w2m"], prep["b2"],
      prep["w3m"], prep["b3"])


# ------------------------------ fused MLP kernel -----------------------------

def _mlp_kernel(x_ref, wf1_ref, bf1_ref, wf2_ref, bf2_ref, o_ref, acc_ref):
    k = pl.program_id(0)

    @pl.when(k == 0)
    def _():
        acc_ref[...] = jnp.zeros_like(acc_ref)

    acc_ref[...] += jnp.dot(x_ref[...], wf1_ref[...],
                            preferred_element_type=jnp.float32)

    @pl.when(k == pl.num_programs(0) - 1)
    def _():
        h = jnp.maximum(acc_ref[...] + bf1_ref[...], 0.0)
        o_ref[...] = (jnp.dot(h, wf2_ref[...], preferred_element_type=jnp.float32)
                      + bf2_ref[...]).astype(o_ref.dtype)


def _vmem_capacity_bytes():
    try:
        return int(pltpu.get_tpu_info().vmem_capacity_bytes)
    except Exception:
        return 64 << 20                 # conservative: v7x per-TensorCore VMEM


def _pick_fc1_block(K, N1, cap_bytes):
    """Largest K block (K itself, or a 128-multiple divisor of K) whose
    double-buffered (bk, N1) f32 fc1 weight block fits cap_bytes."""
    def fits(bk):
        return 2 * bk * N1 * 4 <= cap_bytes
    if fits(K):
        return K
    best = 0
    for bk in range(128, K, 128):
        if K % bk == 0 and fits(bk):
            best = bk
    return best if best else min(K, 128)


def mlp(prep, flat):
    B, K = flat.shape
    wf1, bf1, wf2, bf2 = prep["wf1"], prep["bf1"], prep["wf2"], prep["bf2"]
    N1, N2 = wf1.shape[1], wf2.shape[1]

    vmem_cap = _vmem_capacity_bytes()
    # double-buffered fc1 weight-block budget: generous on 128 MiB v5e/v6e,
    # tighter on v7x's 64 MiB.
    blk_cap = (24 << 20) if vmem_cap >= (100 << 20) else (12 << 20)

    # If K must be tiled but is not a multiple of 128, zero-pad the contraction
    # dim (identity for x @ W) so a clean 128-multiple block always exists.
    if K % 128 != 0 and 2 * K * N1 * 4 > blk_cap:
        Kp = ((K + 127) // 128) * 128
        flat = jnp.pad(flat, ((0, 0), (0, Kp - K)))
        wf1 = jnp.pad(wf1, ((0, Kp - K), (0, 0)))
        K = Kp

    bk = _pick_fc1_block(K, N1, blk_cap)

    needed = (2 * B * bk + 2 * bk * N1 + B * N1
              + 2 * N1 * N2 + 2 * B * N2 + 2 * (N1 + N2)) * 4
    vmem_limit = int(min(vmem_cap * 3 // 4, max(needed + (4 << 20), 32 << 20)))

    return pl.pallas_call(
        _mlp_kernel,
        out_shape=jax.ShapeDtypeStruct((B, N2), jnp.float32),
        grid=(K // bk,),
        in_specs=[
            pl.BlockSpec((B, bk), lambda k: (0, k)),
            pl.BlockSpec((bk, N1), lambda k: (k, 0)),
            pl.BlockSpec((1, N1), lambda k: (0, 0)),
            pl.BlockSpec((N1, N2), lambda k: (0, 0)),
            pl.BlockSpec((1, N2), lambda k: (0, 0)),
        ],
        out_specs=pl.BlockSpec((B, N2), lambda k: (0, 0)),
        scratch_shapes=[pltpu.VMEM((B, N1), jnp.float32)],
        compiler_params=pltpu.CompilerParams(
            dimension_semantics=("arbitrary",),
            vmem_limit_bytes=vmem_limit),
    )(flat, wf1, bf1, wf2, bf2)


# ------------------------------ full forward ---------------------------------

@jax.jit
def cnn_forward(prep, x_nchw):
    conv_out = conv_stack(prep, x_nchw)            # (B, S2, 64), (s, c) rows
    flat = conv_out.reshape(conv_out.shape[0], -1) # free contiguous reshape
    return mlp(prep, flat)                         # (B, 30)


# ------------------------------ parameters -----------------------------------

def init_params(key, sample_length):
    """PyTorch-layout parameters (Conv2d OIHW weights, Linear as (in, out))."""
    ks = jax.random.split(key, 10)

    def conv_init(kw, kb, cout, cin):
        bound = 1.0 / jnp.sqrt(cin * 9.0)
        w = jax.random.uniform(kw, (cout, cin, 3, 3), jnp.float32, -bound, bound)
        b = jax.random.uniform(kb, (cout,), jnp.float32, -bound, bound)
        return w, b

    def fc_init(kw, kb, fan_in, fan_out):
        bound = 1.0 / jnp.sqrt(float(fan_in))
        w = jax.random.uniform(kw, (fan_in, fan_out), jnp.float32, -bound, bound)
        b = jax.random.uniform(kb, (fan_out,), jnp.float32, -bound, bound)
        return w, b

    flat = 64 * 5 * (sample_length // 10 // 2)
    w1, b1 = conv_init(ks[0], ks[1], 16, 3)
    w2, b2 = conv_init(ks[2], ks[3], 32, 16)
    w3, b3 = conv_init(ks[4], ks[5], 64, 32)
    wf1, bf1 = fc_init(ks[6], ks[7], flat, 256)
    wf2, bf2 = fc_init(ks[8], ks[9], 256, 30)
    return dict(w1=w1, b1=b1, w2=w2, b2=b2, w3=w3, b3=b3,
                wf1=wf1, bf1=bf1, wf2=wf2, bf2=bf2)


def prepare_params(params):
    """One-time relayout of PyTorch-style params into the kernel layout."""
    def conv_mat(w):        # (Cout, Cin, 3, 3) -> (9*Cin, Cout), rows (kh, kw, ci)
        return jnp.transpose(w, (2, 3, 1, 0)).reshape(-1, w.shape[0])

    wf1 = params["wf1"]                              # (64*S2, 256), NCHW row order
    n1 = wf1.shape[1]
    S2 = wf1.shape[0] // 64
    # fold the NCHW flatten permutation into fc1: kernel emits (s, c)-ordered rows
    wf1_k = wf1.reshape(64, S2, n1).transpose(1, 0, 2).reshape(64 * S2, n1)
    return dict(
        w1m=conv_mat(params["w1"]), b1=params["b1"].reshape(1, -1),
        w2m=conv_mat(params["w2"]), b2=params["b2"].reshape(1, -1),
        w3m=conv_mat(params["w3"]), b3=params["b3"].reshape(1, -1),
        wf1=wf1_k, bf1=params["bf1"].reshape(1, -1),
        wf2=params["wf2"], bf2=params["bf2"].reshape(1, -1),
    )


# ------------------------- pure-JAX reference (self check) --------------------

def cnn_reference(params, x):
    hi = jax.lax.Precision.HIGHEST

    def conv(h, w, b):
        y = jax.lax.conv_general_dilated(
            h, w, window_strides=(1, 1), padding=((1, 1), (1, 1)),
            dimension_numbers=("NCHW", "OIHW", "NCHW"), precision=hi)
        return jnp.maximum(y + b[None, :, None, None], 0.0)

    h = conv(x, params["w1"], params["b1"])
    h = conv(h, params["w2"], params["b2"])
    h = jax.lax.reduce_window(h, -jnp.inf, jax.lax.max,
                              (1, 1, 2, 2), (1, 1, 2, 2), "VALID")
    h = conv(h, params["w3"], params["b3"])
    h = h.reshape(h.shape[0], -1)
    h = jnp.maximum(jnp.dot(h, params["wf1"], precision=hi) + params["bf1"], 0.0)
    return jnp.dot(h, params["wf2"], precision=hi) + params["bf2"]


# --------------------------------- main ---------------------------------------

if __name__ == "__main__":
    sample_length = 160                 # -> input spatial (10, 16), fc1 in = 2560
    batch = 2
    key = jax.random.PRNGKey(0)
    kx, kp = jax.random.split(key)
    x = jax.random.normal(kx, (batch, 3, 10, sample_length // 10), jnp.float32)
    params = init_params(kp, sample_length)
    prep = prepare_params(params)       # one-time weight relayout

    out = jax.block_until_ready(cnn_forward(prep, x))
    assert out.shape == (batch, 30), out.shape
    assert out.dtype == jnp.float32

    ref = jax.block_until_ready(cnn_reference(params, x))
    err = float(jnp.max(jnp.abs(out - ref)))
    assert err < 2e-2, f"kernel vs reference mismatch: max abs err = {err}"

    print("KERNEL_OK")
</pallas_src>

<mosaic_0001>
module attributes {stable_mosaic.version = 11 : i64} {
  func.func @kernel(%arg0: i32, %arg1: memref<1x12x18x3xf32, #tpu.memory_space<vmem>>, %arg2: memref<27x16xf32, #tpu.memory_space<vmem>>, %arg3: memref<1x16xf32, #tpu.memory_space<vmem>>, %arg4: memref<144x32xf32, #tpu.memory_space<vmem>>, %arg5: memref<1x32xf32, #tpu.memory_space<vmem>>, %arg6: memref<288x64xf32, #tpu.memory_space<vmem>>, %arg7: memref<1x64xf32, #tpu.memory_space<vmem>>, %arg8: memref<1x40x64xf32, #tpu.memory_space<vmem>>, %arg9: memref<1x12x18x16xf32, #tpu.memory_space<vmem>>, %arg10: memref<1x7x10x32xf32, #tpu.memory_space<vmem>>) attributes {dimension_semantics = [#tpu.dimension_semantics<parallel>], iteration_bounds = array<i64: 2>, scalar_prefetch = 0 : i64, scratch_operands = 2 : i64, tpu.core_type = #tpu.core_type<tc>, window_params = [{transform_indices = @transform_0, window_bounds = array<i64: 1, 12, 18, 3>}, {pipeline_mode = #tpu.pipeline_mode<synchronous>, transform_indices = @transform_1, window_bounds = array<i64: 27, 16>}, {pipeline_mode = #tpu.pipeline_mode<synchronous>, transform_indices = @transform_2, window_bounds = array<i64: 1, 16>}, {pipeline_mode = #tpu.pipeline_mode<synchronous>, transform_indices = @transform_3, window_bounds = array<i64: 144, 32>}, {pipeline_mode = #tpu.pipeline_mode<synchronous>, transform_indices = @transform_4, window_bounds = array<i64: 1, 32>}, {pipeline_mode = #tpu.pipeline_mode<synchronous>, transform_indices = @transform_5, window_bounds = array<i64: 288, 64>}, {pipeline_mode = #tpu.pipeline_mode<synchronous>, transform_indices = @transform_6, window_bounds = array<i64: 1, 64>}, {transform_indices = @transform_7, window_bounds = array<i64: 1, 40, 64>}]} {
    %c0 = arith.constant 0 : index
    %c0_0 = arith.constant 0 : index
    %c0_1 = arith.constant 0 : index
    %c0_2 = arith.constant 0 : index
    %0 = vector.load %arg1[%c0, %c0_0, %c0_1, %c0_2] : memref<1x12x18x3xf32, #tpu.memory_space<vmem>>, vector<1x12x18x3xf32>
    %1 = vector.extract_strided_slice %0 {offsets = [0, 0, 0, 0], sizes = [1, 10, 16, 3], strides = [1, 1, 1, 1]} : vector<1x12x18x3xf32> to vector<1x10x16x3xf32>
    %2 = vector.extract_strided_slice %0 {offsets = [0, 0, 1, 0], sizes = [1, 10, 16, 3], strides = [1, 1, 1, 1]} : vector<1x12x18x3xf32> to vector<1x10x16x3xf32>
    %3 = vector.extract_strided_slice %0 {offsets = [0, 0, 2, 0], sizes = [1, 10, 16, 3], strides = [1, 1, 1, 1]} : vector<1x12x18x3xf32> to vector<1x10x16x3xf32>
    %4 = vector.extract_strided_slice %0 {offsets = [0, 1, 0, 0], sizes = [1, 10, 16, 3], strides = [1, 1, 1, 1]} : vector<1x12x18x3xf32> to vector<1x10x16x3xf32>
    %5 = vector.extract_strided_slice %0 {offsets = [0, 1, 1, 0], sizes = [1, 10, 16, 3], strides = [1, 1, 1, 1]} : vector<1x12x18x3xf32> to vector<1x10x16x3xf32>
    %6 = vector.extract_strided_slice %0 {offsets = [0, 1, 2, 0], sizes = [1, 10, 16, 3], strides = [1, 1, 1, 1]} : vector<1x12x18x3xf32> to vector<1x10x16x3xf32>
    %7 = vector.extract_strided_slice %0 {offsets = [0, 2, 0, 0], sizes = [1, 10, 16, 3], strides = [1, 1, 1, 1]} : vector<1x12x18x3xf32> to vector<1x10x16x3xf32>
    %8 = vector.extract_strided_slice %0 {offsets = [0, 2, 1, 0], sizes = [1, 10, 16, 3], strides = [1, 1, 1, 1]} : vector<1x12x18x3xf32> to vector<1x10x16x3xf32>
    %9 = vector.extract_strided_slice %0 {offsets = [0, 2, 2, 0], sizes = [1, 10, 16, 3], strides = [1, 1, 1, 1]} : vector<1x12x18x3xf32> to vector<1x10x16x3xf32>
    %10 = tpu.concatenate %1, %2, %3, %4, %5, %6, %7, %8, %9 in 3 : vector<1x10x16x3xf32>, vector<1x10x16x3xf32>, vector<1x10x16x3xf32>, vector<1x10x16x3xf32>, vector<1x10x16x3xf32>, vector<1x10x16x3xf32>, vector<1x10x16x3xf32>, vector<1x10x16x3xf32>, vector<1x10x16x3xf32> -> vector<1x10x16x27xf32>
    %11 = vector.shape_cast %10 : vector<1x10x16x27xf32> to vector<160x27xf32>
    %c0_3 = arith.constant 0 : index
    %c0_4 = arith.constant 0 : index
    %12 = vector.load %arg2[%c0_3, %c0_4] : memref<27x16xf32, #tpu.memory_space<vmem>>, vector<27x16xf32>
    %cst = arith.constant dense<0.000000e+00> : vector<160x16xf32>
    %13 = tpu.matmul %11, %12, %cst {dimension_numbers = #tpu.dot_dimension_numbers<[1], [0], [0], [1], [0, 0, 1, 1], [], []>} : vector<160x27xf32>, vector<27x16xf32>, vector<160x16xf32> -> vector<160x16xf32>
    %c0_5 = arith.constant 0 : index
    %c0_6 = arith.constant 0 : index
    %14 = vector.load %arg3[%c0_5, %c0_6] : memref<1x16xf32, #tpu.memory_space<vmem>>, vector<1x16xf32>
    %15 = vector.broadcast %14 : vector<1x16xf32> to vector<160x16xf32>
    %16 = arith.addf %13, %15 : vector<160x16xf32>
    %cst_7 = arith.constant 0.000000e+00 : f32
    %17 = vector.broadcast %cst_7 : f32 to vector<160x16xf32>
    %18 = arith.maximumf %16, %17 : vector<160x16xf32>
    %cst_8 = arith.constant 0.000000e+00 : f32
    %19 = vector.broadcast %cst_8 : f32 to vector<1x1x18x16xf32>
    %c0_9 = arith.constant 0 : index
    %c0_10 = arith.constant 0 : index
    %c0_11 = arith.constant 0 : index
    %c0_12 = arith.constant 0 : index
    %20 = vector.load %arg9[%c0_9, %c0_10, %c0_11, %c0_12] : memref<1x12x18x16xf32, #tpu.memory_space<vmem>>, vector<1x1x18x16xf32>
    tpu.vector_store %arg9[%c0_9, %c0_10, %c0_11, %c0_12], %19 {strides = array<i32>} : memref<1x12x18x16xf32, #tpu.memory_space<vmem>>, vector<1x1x18x16xf32>,
    %cst_13 = arith.constant 0.000000e+00 : f32
    %21 = vector.broadcast %cst_13 : f32 to vector<1x1x18x16xf32>
    %c0_14 = arith.constant 0 : index
    %c11 = arith.constant 11 : index
    %c0_15 = arith.constant 0 : index
    %c0_16 = arith.constant 0 : index
    %22 = vector.load %arg9[%c0_14, %c11, %c0_15, %c0_16] : memref<1x12x18x16xf32, #tpu.memory_space<vmem>>, vector<1x1x18x16xf32>
    tpu.vector_store %arg9[%c0_14, %c11, %c0_15, %c0_16], %21 {strides = array<i32>} : memref<1x12x18x16xf32, #tpu.memory_space<vmem>>, vector<1x1x18x16xf32>,
    %cst_17 = arith.constant 0.000000e+00 : f32
    %23 = vector.broadcast %cst_17 : f32 to vector<1x12x1x16xf32>
    %c0_18 = arith.constant 0 : index
    %c0_19 = arith.constant 0 : index
    %c0_20 = arith.constant 0 : index
    %c0_21 = arith.constant 0 : index
    %24 = vector.load %arg9[%c0_18, %c0_19, %c0_20, %c0_21] : memref<1x12x18x16xf32, #tpu.memory_space<vmem>>, vector<1x12x1x16xf32>
    tpu.vector_store %arg9[%c0_18, %c0_19, %c0_20, %c0_21], %23 {strides = array<i32>} : memref<1x12x18x16xf32, #tpu.memory_space<vmem>>, vector<1x12x1x16xf32>,
    %cst_22 = arith.constant 0.000000e+00 : f32
    %25 = vector.broadcast %cst_22 : f32 to vector<1x12x1x16xf32>
    %c0_23 = arith.constant 0 : index
    %c0_24 = arith.constant 0 : index
    %c17 = arith.constant 17 : index
    %c0_25 = arith.constant 0 : index
    %26 = vector.load %arg9[%c0_23, %c0_24, %c17, %c0_25] : memref<1x12x18x16xf32, #tpu.memory_space<vmem>>, vector<1x12x1x16xf32>
    tpu.vector_store %arg9[%c0_23, %c0_24, %c17, %c0_25], %25 {strides = array<i32>} : memref<1x12x18x16xf32, #tpu.memory_space<vmem>>, vector<1x12x1x16xf32>,
    %27 = vector.shape_cast %18 : vector<160x16xf32> to vector<1x10x16x16xf32>
    %c0_26 = arith.constant 0 : index
    %c1 = arith.constant 1 : index
    %c1_27 = arith.constant 1 : index
    %c0_28 = arith.constant 0 : index
    %28 = vector.load %arg9[%c0_26, %c1, %c1_27, %c0_28] : memref<1x12x18x16xf32, #tpu.memory_space<vmem>>, vector<1x10x16x16xf32>
    tpu.vector_store %arg9[%c0_26, %c1, %c1_27, %c0_28], %27 {strides = array<i32>} : memref<1x12x18x16xf32, #tpu.memory_space<vmem>>, vector<1x10x16x16xf32>,
    %c0_29 = arith.constant 0 : index
    %c0_30 = arith.constant 0 : index
    %c0_31 = arith.constant 0 : index
    %c0_32 = arith.constant 0 : index
    %29 = vector.load %arg9[%c0_29, %c0_30, %c0_31, %c0_32] : memref<1x12x18x16xf32, #tpu.memory_space<vmem>>, vector<1x12x18x16xf32>
    %30 = vector.extract_strided_slice %29 {offsets = [0, 0, 0, 0], sizes = [1, 10, 16, 16], strides = [1, 1, 1, 1]} : vector<1x12x18x16xf32> to vector<1x10x16x16xf32>
    %31 = vector.extract_strided_slice %29 {offsets = [0, 0, 1, 0], sizes = [1, 10, 16, 16], strides = [1, 1, 1, 1]} : vector<1x12x18x16xf32> to vector<1x10x16x16xf32>
    %32 = vector.extract_strided_slice %29 {offsets = [0, 0, 2, 0], sizes = [1, 10, 16, 16], strides = [1, 1, 1, 1]} : vector<1x12x18x16xf32> to vector<1x10x16x16xf32>
    %33 = vector.extract_strided_slice %29 {offsets = [0, 1, 0, 0], sizes = [1, 10, 16, 16], strides = [1, 1, 1, 1]} : vector<1x12x18x16xf32> to vector<1x10x16x16xf32>
    %34 = vector.extract_strided_slice %29 {offsets = [0, 1, 1, 0], sizes = [1, 10, 16, 16], strides = [1, 1, 1, 1]} : vector<1x12x18x16xf32> to vector<1x10x16x16xf32>
    %35 = vector.extract_strided_slice %29 {offsets = [0, 1, 2, 0], sizes = [1, 10, 16, 16], strides = [1, 1, 1, 1]} : vector<1x12x18x16xf32> to vector<1x10x16x16xf32>
    %36 = vector.extract_strided_slice %29 {offsets = [0, 2, 0, 0], sizes = [1, 10, 16, 16], strides = [1, 1, 1, 1]} : vector<1x12x18x16xf32> to vector<1x10x16x16xf32>
    %37 = vector.extract_strided_slice %29 {offsets = [0, 2, 1, 0], sizes = [1, 10, 16, 16], strides = [1, 1, 1, 1]} : vector<1x12x18x16xf32> to vector<1x10x16x16xf32>
    %38 = vector.extract_strided_slice %29 {offsets = [0, 2, 2, 0], sizes = [1, 10, 16, 16], strides = [1, 1, 1, 1]} : vector<1x12x18x16xf32> to vector<1x10x16x16xf32>
    %39 = tpu.concatenate %30, %31, %32, %33, %34, %35, %36, %37, %38 in 3 : vector<1x10x16x16xf32>, vector<1x10x16x16xf32>, vector<1x10x16x16xf32>, vector<1x10x16x16xf32>, vector<1x10x16x16xf32>, vector<1x10x16x16xf32>, vector<1x10x16x16xf32>, vector<1x10x16x16xf32>, vector<1x10x16x16xf32> -> vector<1x10x16x144xf32>
    %40 = vector.shape_cast %39 : vector<1x10x16x144xf32> to vector<160x144xf32>
    %c0_33 = arith.constant 0 : index
    %c0_34 = arith.constant 0 : index
    %41 = vector.load %arg4[%c0_33, %c0_34] : memref<144x32xf32, #tpu.memory_space<vmem>>, vector<144x32xf32>
    %cst_35 = arith.constant dense<0.000000e+00> : vector<160x32xf32>
    %42 = tpu.matmul %40, %41, %cst_35 {dimension_numbers = #tpu.dot_dimension_numbers<[1], [0], [0], [1], [0, 0, 1, 1], [], []>} : vector<160x144xf32>, vector<144x32xf32>, vector<160x32xf32> -> vector<160x32xf32>
    %c0_36 = arith.constant 0 : index
    %c0_37 = arith.constant 0 : index
    %43 = vector.load %arg5[%c0_36, %c0_37] : memref<1x32xf32, #tpu.memory_space<vmem>>, vector<1x32xf32>
    %44 = vector.broadcast %43 : vector<1x32xf32> to vector<160x32xf32>
    %45 = arith.addf %42, %44 : vector<160x32xf32>
    %cst_38 = arith.constant 0.000000e+00 : f32
    %46 = vector.broadcast %cst_38 : f32 to vector<160x32xf32>
    %47 = arith.maximumf %45, %46 : vector<160x32xf32>
    %48 = vector.shape_cast %47 : vector<160x32xf32> to vector<5x2x16x32xf32>
    %49 = vector.extract_strided_slice %48 {offsets = [0, 0, 0, 0], sizes = [5, 1, 16, 32], strides = [1, 1, 1, 1]} : vector<5x2x16x32xf32> to vector<5x1x16x32xf32>
    %50 = vector.shape_cast %49 : vector<5x1x16x32xf32> to vector<5x16x32xf32>
    %51 = vector.extract_strided_slice %48 {offsets = [0, 1, 0, 0], sizes = [5, 1, 16, 32], strides = [1, 1, 1, 1]} : vector<5x2x16x32xf32> to vector<5x1x16x32xf32>
    %52 = vector.shape_cast %51 : vector<5x1x16x32xf32> to vector<5x16x32xf32>
    %53 = arith.maximumf %50, %52 : vector<5x16x32xf32>
    %54 = vector.shape_cast %53 : vector<5x16x32xf32> to vector<5x8x2x32xf32>
    %55 = vector.extract_strided_slice %54 {offsets = [0, 0, 0, 0], sizes = [5, 8, 1, 32], strides = [1, 1, 1, 1]} : vector<5x8x2x32xf32> to vector<5x8x1x32xf32>
    %56 = vector.shape_cast %55 : vector<5x8x1x32xf32> to vector<5x8x32xf32>
    %57 = vector.extract_strided_slice %54 {offsets = [0, 0, 1, 0], sizes = [5, 8, 1, 32], strides = [1, 1, 1, 1]} : vector<5x8x2x32xf32> to vector<5x8x1x32xf32>
    %58 = vector.shape_cast %57 : vector<5x8x1x32xf32> to vector<5x8x32xf32>
    %59 = arith.maximumf %56, %58 : vector<5x8x32xf32>
    %cst_39 = arith.constant 0.000000e+00 : f32
    %60 = vector.broadcast %cst_39 : f32 to vector<1x1x10x32xf32>
    %c0_40 = arith.constant 0 : index
    %c0_41 = arith.constant 0 : index
    %c0_42 = arith.constant 0 : index
    %c0_43 = arith.constant 0 : index
    %61 = vector.load %arg10[%c0_40, %c0_41, %c0_42, %c0_43] : memref<1x7x10x32xf32, #tpu.memory_space<vmem>>, vector<1x1x10x32xf32>
    tpu.vector_store %arg10[%c0_40, %c0_41, %c0_42, %c0_43], %60 {strides = array<i32>} : memref<1x7x10x32xf32, #tpu.memory_space<vmem>>, vector<1x1x10x32xf32>,
    %cst_44 = arith.constant 0.000000e+00 : f32
    %62 = vector.broadcast %cst_44 : f32 to vector<1x1x10x32xf32>
    %c0_45 = arith.constant 0 : index
    %c6 = arith.constant 6 : index
    %c0_46 = arith.constant 0 : index
    %c0_47 = arith.constant 0 : index
    %63 = vector.load %arg10[%c0_45, %c6, %c0_46, %c0_47] : memref<1x7x10x32xf32, #tpu.memory_space<vmem>>, vector<1x1x10x32xf32>
    tpu.vector_store %arg10[%c0_45, %c6, %c0_46, %c0_47], %62 {strides = array<i32>} : memref<1x7x10x32xf32, #tpu.memory_space<vmem>>, vector<1x1x10x32xf32>,
    %cst_48 = arith.constant 0.000000e+00 : f32
    %64 = vector.broadcast %cst_48 : f32 to vector<1x7x1x32xf32>
    %c0_49 = arith.constant 0 : index
    %c0_50 = arith.constant 0 : index
    %c0_51 = arith.constant 0 : index
    %c0_52 = arith.constant 0 : index
    %65 = vector.load %arg10[%c0_49, %c0_50, %c0_51, %c0_52] : memref<1x7x10x32xf32, #tpu.memory_space<vmem>>, vector<1x7x1x32xf32>
    tpu.vector_store %arg10[%c0_49, %c0_50, %c0_51, %c0_52], %64 {strides = array<i32>} : memref<1x7x10x32xf32, #tpu.memory_space<vmem>>, vector<1x7x1x32xf32>,
    %cst_53 = arith.constant 0.000000e+00 : f32
    %66 = vector.broadcast %cst_53 : f32 to vector<1x7x1x32xf32>
    %c0_54 = arith.constant 0 : index
    %c0_55 = arith.constant 0 : index
    %c9 = arith.constant 9 : index
    %c0_56 = arith.constant 0 : index
    %67 = vector.load %arg10[%c0_54, %c0_55, %c9, %c0_56] : memref<1x7x10x32xf32, #tpu.memory_space<vmem>>, vector<1x7x1x32xf32>
    tpu.vector_store %arg10[%c0_54, %c0_55, %c9, %c0_56], %66 {strides = array<i32>} : memref<1x7x10x32xf32, #tpu.memory_space<vmem>>, vector<1x7x1x32xf32>,
    %68 = vector.shape_cast %59 : vector<5x8x32xf32> to vector<1x5x8x32xf32>
    %c0_57 = arith.constant 0 : index
    %c1_58 = arith.constant 1 : index
    %c1_59 = arith.constant 1 : index
    %c0_60 = arith.constant 0 : index
    %69 = vector.load %arg10[%c0_57, %c1_58, %c1_59, %c0_60] : memref<1x7x10x32xf32, #tpu.memory_space<vmem>>, vector<1x5x8x32xf32>
    tpu.vector_store %arg10[%c0_57, %c1_58, %c1_59, %c0_60], %68 {strides = array<i32>} : memref<1x7x10x32xf32, #tpu.memory_space<vmem>>, vector<1x5x8x32xf32>,
    %c0_61 = arith.constant 0 : index
    %c0_62 = arith.constant 0 : index
    %c0_63 = arith.constant 0 : index
    %c0_64 = arith.constant 0 : index
    %70 = vector.load %arg10[%c0_61, %c0_62, %c0_63, %c0_64] : memref<1x7x10x32xf32, #tpu.memory_space<vmem>>, vector<1x7x10x32xf32>
    %71 = vector.extract_strided_slice %70 {offsets = [0, 0, 0, 0], sizes = [1, 5, 8, 32], strides = [1, 1, 1, 1]} : vector<1x7x10x32xf32> to vector<1x5x8x32xf32>
    %72 = vector.extract_strided_slice %70 {offsets = [0, 0, 1, 0], sizes = [1, 5, 8, 32], strides = [1, 1, 1, 1]} : vector<1x7x10x32xf32> to vector<1x5x8x32xf32>
    %73 = vector.extract_strided_slice %70 {offsets = [0, 0, 2, 0], sizes = [1, 5, 8, 32], strides = [1, 1, 1, 1]} : vector<1x7x10x32xf32> to vector<1x5x8x32xf32>
    %74 = vector.extract_strided_slice %70 {offsets = [0, 1, 0, 0], sizes = [1, 5, 8, 32], strides = [1, 1, 1, 1]} : vector<1x7x10x32xf32> to vector<1x5x8x32xf32>
    %75 = vector.extract_strided_slice %70 {offsets = [0, 1, 1, 0], sizes = [1, 5, 8, 32], strides = [1, 1, 1, 1]} : vector<1x7x10x32xf32> to vector<1x5x8x32xf32>
    %76 = vector.extract_strided_slice %70 {offsets = [0, 1, 2, 0], sizes = [1, 5, 8, 32], strides = [1, 1, 1, 1]} : vector<1x7x10x32xf32> to vector<1x5x8x32xf32>
    %77 = vector.extract_strided_slice %70 {offsets = [0, 2, 0, 0], sizes = [1, 5, 8, 32], strides = [1, 1, 1, 1]} : vector<1x7x10x32xf32> to vector<1x5x8x32xf32>
    %78 = vector.extract_strided_slice %70 {offsets = [0, 2, 1, 0], sizes = [1, 5, 8, 32], strides = [1, 1, 1, 1]} : vector<1x7x10x32xf32> to vector<1x5x8x32xf32>
    %79 = vector.extract_strided_slice %70 {offsets = [0, 2, 2, 0], sizes = [1, 5, 8, 32], strides = [1, 1, 1, 1]} : vector<1x7x10x32xf32> to vector<1x5x8x32xf32>
    %80 = tpu.concatenate %71, %72, %73, %74, %75, %76, %77, %78, %79 in 3 : vector<1x5x8x32xf32>, vector<1x5x8x32xf32>, vector<1x5x8x32xf32>, vector<1x5x8x32xf32>, vector<1x5x8x32xf32>, vector<1x5x8x32xf32>, vector<1x5x8x32xf32>, vector<1x5x8x32xf32>, vector<1x5x8x32xf32> -> vector<1x5x8x288xf32>
    %81 = vector.shape_cast %80 : vector<1x5x8x288xf32> to vector<40x288xf32>
    %c0_65 = arith.constant 0 : index
    %c0_66 = arith.constant 0 : index
    %82 = vector.load %arg6[%c0_65, %c0_66] : memref<288x64xf32, #tpu.memory_space<vmem>>, vector<288x64xf32>
    %cst_67 = arith.constant dense<0.000000e+00> : vector<40x64xf32>
    %83 = tpu.matmul %81, %82, %cst_67 {dimension_numbers = #tpu.dot_dimension_numbers<[1], [0], [0], [1], [0, 0, 1, 1], [], []>} : vector<40x288xf32>, vector<288x64xf32>, vector<40x64xf32> -> vector<40x64xf32>
    %c0_68 = arith.constant 0 : index
    %c0_69 = arith.constant 0 : index
    %84 = vector.load %arg7[%c0_68, %c0_69] : memref<1x64xf32, #tpu.memory_space<vmem>>, vector<1x64xf32>
    %85 = vector.broadcast %84 : vector<1x64xf32> to vector<40x64xf32>
    %86 = arith.addf %83, %85 : vector<40x64xf32>
    %cst_70 = arith.constant 0.000000e+00 : f32
    %87 = vector.broadcast %cst_70 : f32 to vector<40x64xf32>
    %88 = arith.maximumf %86, %87 : vector<40x64xf32>
    %89 = vector.shape_cast %88 : vector<40x64xf32> to vector<1x40x64xf32>
    %c0_71 = arith.constant 0 : index
    %c0_72 = arith.constant 0 : index
    %c0_73 = arith.constant 0 : index
    %90 = vector.load %arg8[%c0_71, %c0_72, %c0_73] : memref<1x40x64xf32, #tpu.memory_space<vmem>>, vector<1x40x64xf32>
    tpu.vector_store %arg8[%c0_71, %c0_72, %c0_73], %89 {strides = array<i32>} : memref<1x40x64xf32, #tpu.memory_space<vmem>>, vector<1x40x64xf32>,
    return
  }
  func.func @transform_0(%arg0: i32) -> (i32, i32, i32, i32) {
    %c0_i32 = arith.constant 0 : i32
    %c0_i32_0 = arith.constant 0 : i32
    %c0_i32_1 = arith.constant 0 : i32
    %c0_i32_2 = arith.constant 0 : i32
    return %arg0, %c0_i32, %c0_i32_0, %c0_i32_1 : i32, i32, i32, i32
  }
  func.func @transform_1(%arg0: i32) -> (i32, i32) {
    %c0_i32 = arith.constant 0 : i32
    %c0_i32_0 = arith.constant 0 : i32
    %c0_i32_1 = arith.constant 0 : i32
    return %c0_i32, %c0_i32_0 : i32, i32
  }
  func.func @transform_2(%arg0: i32) -> (i32, i32) {
    %c0_i32 = arith.constant 0 : i32
    %c0_i32_0 = arith.constant 0 : i32
    %c0_i32_1 = arith.constant 0 : i32
    return %c0_i32, %c0_i32_0 : i32, i32
  }
  func.func @transform_3(%arg0: i32) -> (i32, i32) {
    %c0_i32 = arith.constant 0 : i32
    %c0_i32_0 = arith.constant 0 : i32
    %c0_i32_1 = arith.constant 0 : i32
    return %c0_i32, %c0_i32_0 : i32, i32
  }
  func.func @transform_4(%arg0: i32) -> (i32, i32) {
    %c0_i32 = arith.constant 0 : i32
    %c0_i32_0 = arith.constant 0 : i32
    %c0_i32_1 = arith.constant 0 : i32
    return %c0_i32, %c0_i32_0 : i32, i32
  }
  func.func @transform_5(%arg0: i32) -> (i32, i32) {
    %c0_i32 = arith.constant 0 : i32
    %c0_i32_0 = arith.constant 0 : i32
    %c0_i32_1 = arith.constant 0 : i32
    return %c0_i32, %c0_i32_0 : i32, i32
  }
  func.func @transform_6(%arg0: i32) -> (i32, i32) {
    %c0_i32 = arith.constant 0 : i32
    %c0_i32_0 = arith.constant 0 : i32
    %c0_i32_1 = arith.constant 0 : i32
    return %c0_i32, %c0_i32_0 : i32, i32
  }
  func.func @transform_7(%arg0: i32) -> (i32, i32, i32) {
    %c0_i32 = arith.constant 0 : i32
    %c0_i32_0 = arith.constant 0 : i32
    %c0_i32_1 = arith.constant 0 : i32
    return %arg0, %c0_i32, %c0_i32_0 : i32, i32, i32
  }
}

module attributes {stable_mosaic.version = 11 : i64} {
  func.func @_mlp_kernel(%arg0: i32, %arg1: memref<2x2560xf32, #tpu.memory_space<vmem>>, %arg2: memref<2560x256xf32, #tpu.memory_space<vmem>>, %arg3: memref<1x256xf32, #tpu.memory_space<vmem>>, %arg4: memref<256x30xf32, #tpu.memory_space<vmem>>, %arg5: memref<1x30xf32, #tpu.memory_space<vmem>>, %arg6: memref<2x30xf32, #tpu.memory_space<vmem>>, %arg7: memref<2x256xf32, #tpu.memory_space<vmem>>) attributes {dimension_semantics = [#tpu.dimension_semantics<arbitrary>], iteration_bounds = array<i64: 1>, scalar_prefetch = 0 : i64, scratch_operands = 1 : i64, tpu.core_type = #tpu.core_type<tc>, window_params = [{transform_indices = @transform_0, window_bounds = array<i64: 2, 2560>}, {transform_indices = @transform_1, window_bounds = array<i64: 2560, 256>}, {pipeline_mode = #tpu.pipeline_mode<synchronous>, transform_indices = @transform_2, window_bounds = array<i64: 1, 256>}, {pipeline_mode = #tpu.pipeline_mode<synchronous>, transform_indices = @transform_3, window_bounds = array<i64: 256, 30>}, {pipeline_mode = #tpu.pipeline_mode<synchronous>, transform_indices = @transform_4, window_bounds = array<i64: 1, 30>}, {pipeline_mode = #tpu.pipeline_mode<synchronous>, transform_indices = @transform_5, window_bounds = array<i64: 2, 30>}]} {
    %c0_i32 = arith.constant 0 : i32
    %0 = arith.cmpi eq, %arg0, %c0_i32 : i32
    %1 = arith.extui %0 : i1 to i32
    %c0_i32_0 = arith.constant 0 : i32
    %2 = arith.cmpi ne, %1, %c0_i32_0 : i32
    scf.if %2 {
      %cst_10 = arith.constant 0.000000e+00 : f32
      %12 = vector.broadcast %cst_10 : f32 to vector<2x256xf32>
      %c0_11 = arith.constant 0 : index
      %c0_12 = arith.constant 0 : index
      %13 = vector.load %arg7[%c0_11, %c0_12] : memref<2x256xf32, #tpu.memory_space<vmem>>, vector<2x256xf32>
      tpu.vector_store %arg7[%c0_11, %c0_12], %12 {strides = array<i32>} : memref<2x256xf32, #tpu.memory_space<vmem>>, vector<2x256xf32>,
    } else {
    }
    %c0 = arith.constant 0 : index
    %c0_1 = arith.constant 0 : index
    %3 = vector.load %arg7[%c0, %c0_1] : memref<2x256xf32, #tpu.memory_space<vmem>>, vector<2x256xf32>
    %c0_2 = arith.constant 0 : index
    %c0_3 = arith.constant 0 : index
    %4 = vector.load %arg1[%c0_2, %c0_3] : memref<2x2560xf32, #tpu.memory_space<vmem>>, vector<2x2560xf32>
    %c0_4 = arith.constant 0 : index
    %c0_5 = arith.constant 0 : index
    %5 = vector.load %arg2[%c0_4, %c0_5] : memref<2560x256xf32, #tpu.memory_space<vmem>>, vector<2560x256xf32>
    %cst = arith.constant dense<0.000000e+00> : vector<2x256xf32>
    %6 = tpu.matmul %4, %5, %cst {dimension_numbers = #tpu.dot_dimension_numbers<[1], [0], [0], [1], [0, 0, 1, 1], [], []>} : vector<2x2560xf32>, vector<2560x256xf32>, vector<2x256xf32> -> vector<2x256xf32>
    %7 = arith.addf %3, %6 : vector<2x256xf32>
    %c0_6 = arith.constant 0 : index
    %c0_7 = arith.constant 0 : index
    %8 = vector.load %arg7[%c0_6, %c0_7] : memref<2x256xf32, #tpu.memory_space<vmem>>, vector<2x256xf32>
    tpu.vector_store %arg7[%c0_6, %c0_7], %7 {strides = array<i32>} : memref<2x256xf32, #tpu.memory_space<vmem>>, vector<2x256xf32>,
    %c0_i32_8 = arith.constant 0 : i32
    %9 = arith.cmpi eq, %arg0, %c0_i32_8 : i32
    %10 = arith.extui %9 : i1 to i32
    %c0_i32_9 = arith.constant 0 : i32
    %11 = arith.cmpi ne, %10, %c0_i32_9 : i32
    scf.if %11 {
      %c0_10 = arith.constant 0 : index
      %c0_11 = arith.constant 0 : index
      %12 = vector.load %arg7[%c0_10, %c0_11] : memref<2x256xf32, #tpu.memory_space<vmem>>, vector<2x256xf32>
      %c0_12 = arith.constant 0 : index
      %c0_13 = arith.constant 0 : index
      %13 = vector.load %arg3[%c0_12, %c0_13] : memref<1x256xf32, #tpu.memory_space<vmem>>, vector<1x256xf32>
      %14 = vector.broadcast %13 : vector<1x256xf32> to vector<2x256xf32>
      %15 = arith.addf %12, %14 : vector<2x256xf32>
      %cst_14 = arith.constant 0.000000e+00 : f32
      %16 = vector.broadcast %cst_14 : f32 to vector<2x256xf32>
      %17 = arith.maximumf %15, %16 : vector<2x256xf32>
      %c0_15 = arith.constant 0 : index
      %c0_16 = arith.constant 0 : index
      %18 = vector.load %arg4[%c0_15, %c0_16] : memref<256x30xf32, #tpu.memory_space<vmem>>, vector<256x30xf32>
      %cst_17 = arith.constant dense<0.000000e+00> : vector<2x30xf32>
      %19 = tpu.matmul %17, %18, %cst_17 {dimension_numbers = #tpu.dot_dimension_numbers<[1], [0], [0], [1], [0, 0, 1, 1], [], []>} : vector<2x256xf32>, vector<256x30xf32>, vector<2x30xf32> -> vector<2x30xf32>
      %c0_18 = arith.constant 0 : index
      %c0_19 = arith.constant 0 : index
      %20 = vector.load %arg5[%c0_18, %c0_19] : memref<1x30xf32, #tpu.memory_space<vmem>>, vector<1x30xf32>
      %21 = vector.broadcast %20 : vector<1x30xf32> to vector<2x30xf32>
      %22 = arith.addf %19, %21 : vector<2x30xf32>
      %c0_20 = arith.constant 0 : index
      %c0_21 = arith.constant 0 : index
      %23 = vector.load %arg6[%c0_20, %c0_21] : memref<2x30xf32, #tpu.memory_space<vmem>>, vector<2x30xf32>
      tpu.vector_store %arg6[%c0_20, %c0_21], %22 {strides = array<i32>} : memref<2x30xf32, #tpu.memory_space<vmem>>, vector<2x30xf32>,
    } else {
    }
    return
  }
  func.func @transform_0(%arg0: i32) -> (i32, i32) {
    %c0_i32 = arith.constant 0 : i32
    %c0_i32_0 = arith.constant 0 : i32
    return %c0_i32, %arg0 : i32, i32
  }
  func.func @transform_1(%arg0: i32) -> (i32, i32) {
    %c0_i32 = arith.constant 0 : i32
    %c0_i32_0 = arith.constant 0 : i32
    return %arg0, %c0_i32 : i32, i32
  }
  func.func @transform_2(%arg0: i32) -> (i32, i32) {
    %c0_i32 = arith.constant 0 : i32
    %c0_i32_0 = arith.constant 0 : i32
    %c0_i32_1 = arith.constant 0 : i32
    return %c0_i32, %c0_i32_0 : i32, i32
  }
  func.func @transform_3(%arg0: i32) -> (i32, i32) {
    %c0_i32 = arith.constant 0 : i32
    %c0_i32_0 = arith.constant 0 : i32
    %c0_i32_1 = arith.constant 0 : i32
    return %c0_i32, %c0_i32_0 : i32, i32
  }
  func.func @transform_4(%arg0: i32) -> (i32, i32) {
    %c0_i32 = arith.constant 0 : i32
    %c0_i32_0 = arith.constant 0 : i32
    %c0_i32_1 = arith.constant 0 : i32
    return %c0_i32, %c0_i32_0 : i32, i32
  }
  func.func @transform_5(%arg0: i32) -> (i32, i32) {
    %c0_i32 = arith.constant 0 : i32
    %c0_i32_0 = arith.constant 0 : i32
    %c0_i32_1 = arith.constant 0 : i32
    return %c0_i32, %c0_i32_0 : i32, i32
  }
}

</mosaic_0001>

<llo_original>
// kernel: cnn_forward.3
$region0: #{cnn_forward.3}
  #allocation0 [shape = 'u32[]', space=smem, size = 0x4, offset = 0x4, fixed_abs, tag = 'smem constant byte address 0x4 - core index']
  #allocation1 [shape = 'u32[144,128]{1,0:T(1,128)}', space=vmem, size = 0x12000, scoped, tag = 'internal scratch']
  #allocation2 [shape = 'f32[2,256]{1,0:T(2,128)}', space=vmem, size = 0x800, scoped, tag = 'scratch operand']
  %s0 = inlined_call_operand.vmem [shape: f32[2,2560], index: 0, kind: input, shape index: {}]
  %s1 = inlined_call_operand.hbm [shape: f32[2560,256], index: 1, kind: input, shape index: {}]
  %s2 = inlined_call_operand.hbm [shape: f32[1,256], index: 2, kind: input, shape index: {}]
  %s3 = inlined_call_operand.vmem [shape: f32[256,30], index: 3, kind: input, shape index: {}]
  %s4 = inlined_call_operand.hbm [shape: f32[1,30], index: 4, kind: input, shape index: {}]
  %s5 = inlined_call_operand.hbm [shape: f32[2,30], index: 5, kind: output, shape index: {}]
  %s6 = sld [smem:[#allocation0]]
  $region50: #{cnn_forward.3} parent=0
    _
  %s8 = ssub.s32 1, %s6
  %s9 = scalar_select 0, %s8, %s6
  $region1: #{cnn_forward.3} parent=0
    #allocation3 [shape = 'u8[2621440]{0}', space=vmem, size = 0x280000, scoped, tag = 'input window, operand 1, single buffered']
    #allocation4 [shape = 's32[1]{0}', space=sflag, size = 0x4, scoped, tag = 'scoped memory for cnn_forward.3']
    #allocation5 [shape = 's32[1]{0}', space=sflag, size = 0x4, scoped, tag = 'scoped memory for cnn_forward.3']
    #allocation6 [shape = 'u8[1024]{0}', space=vmem, size = 0x400, scoped, tag = 'input window, operand 2, single buffered']
    #allocation7 [shape = 's32[1]{0}', space=sflag, size = 0x4, scoped, tag = 'scoped memory for cnn_forward.3']
    #allocation8 [shape = 'u8[512]{0}', space=vmem, size = 0x400, scoped, tag = 'input window, operand 4, single buffered']
    #allocation9 [shape = 'u8[1024]{0}', space=vmem, size = 0x400, scoped, tag = 'output window, operand 0, single buffered']
    %10 = vsyncpa [#allocation4], 0
    %11 = vsyncpa [#allocation7], 0
    %12 = vsyncpa [#allocation5], 0
    // Predicated region
    $region2: #{cnn_forward.3} parent=1 // pred_check
      _
    $region3: #{cnn_forward.3} parent=1 // pred_check_branch
      %14 = sbr.rel (0) target = $region5
    $region4: #{cnn_forward.3} parent=1 // pred_region
      _
    $region5: #{cnn_forward.3} parent=1 // pred_fallthru
      _
    // Predicated region
    $region6: #{cnn_forward.3} parent=1 // pred_check
      _
    $region7: #{cnn_forward.3} parent=1 // pred_check_branch
      %16 = sbr.rel (0) target = $region9
    $region8: #{cnn_forward.3} parent=1 // pred_region
      %s18 = ssub.s32 81920, 81920
      %19 = vsyncadd [#allocation4], %s18
      %s20 = sshll.u32 [#allocation3], 4
      %s21 = int_to_ptr.vmem [resolvable:$true] %s20
      %26 = dma.hbm_to_vmem [thread:$0]  %s1, 81920, %s21, [#allocation4], 256, 256, 16
    $region9: #{cnn_forward.3} parent=1 // pred_fallthru
      _
    // Predicated region
    $region10: #{cnn_forward.3} parent=1 // pred_check
      _
    $region11: #{cnn_forward.3} parent=1 // pred_check_branch
      %28 = sbr.rel (0) target = $region13
    $region12: #{cnn_forward.3} parent=1 // pred_region
      %s30 = ssub.s32 32, 32
      %31 = vsyncadd [#allocation7], %s30
      %s33 = sshll.u32 [#allocation6], 4
      %s34 = int_to_ptr.vmem [resolvable:$true] %s33
      %36 = dma.hbm_to_vmem [thread:$0]  %s2, 32, %s34, [#allocation7]
    $region13: #{cnn_forward.3} parent=1 // pred_fallthru
      _
    // Predicated region
    $region14: #{cnn_forward.3} parent=1 // pred_check
      _
    $region15: #{cnn_forward.3} parent=1 // pred_check_branch
      %38 = sbr.rel (0) target = $region17
    $region16: #{cnn_forward.3} parent=1 // pred_region
      _
    $region17: #{cnn_forward.3} parent=1 // pred_fallthru
      _
    // Predicated region
    $region18: #{cnn_forward.3} parent=1 // pred_check
      _
    $region19: #{cnn_forward.3} parent=1 // pred_check_branch
      %40 = sbr.rel (0) target = $region21
    $region20: #{cnn_forward.3} parent=1 // pred_region
      %s42 = ssub.s32 16, 16
      %43 = vsyncadd [#allocation7], %s42
      %s45 = sshll.u32 [#allocation8], 4
      %s46 = int_to_ptr.vmem [resolvable:$true] %s45
      %48 = dma.hbm_to_vmem [thread:$0]  %s4, 16, %s46, [#allocation7]
    $region21: #{cnn_forward.3} parent=1 // pred_fallthru
      _
    // Predicated region
    $region22: #{cnn_forward.3} parent=1 // pred_check
      _
    $region23: #{cnn_forward.3} parent=1 // pred_check_branch
      %50 = sbr.rel (0) target = $region25
    $region24: #{cnn_forward.3} parent=1 // pred_region
      %51 = dma.done [#allocation4], 81920
    $region25: #{cnn_forward.3} parent=1 // pred_fallthru
      _
    // Predicated region
    $region26: #{cnn_forward.3} parent=1 // pred_check
      _
    $region27: #{cnn_forward.3} parent=1 // pred_check_branch
      %53 = sbr.rel (0) target = $region29
    $region28: #{cnn_forward.3} parent=1 // pred_region
      %54 = dma.done [#allocation7], 32
    $region29: #{cnn_forward.3} parent=1 // pred_fallthru
      _
    // Predicated region
    $region30: #{cnn_forward.3} parent=1 // pred_check
      _
    $region31: #{cnn_forward.3} parent=1 // pred_check_branch
      %56 = sbr.rel (0) target = $region33
    $region32: #{cnn_forward.3} parent=1 // pred_region
      %57 = dma.done [#allocation7], 16
    $region33: #{cnn_forward.3} parent=1 // pred_fallthru
      _
    %p58 = scmp.eq.s32.totalorder 0, 0
    // Predicated region
    $region34: #{cnn_forward.3} parent=1 // pred_check
      %p59 = pneg %p58
    $region35: #{cnn_forward.3} parent=1 // pred_check_branch
      %61 = sbr.rel (%p59) target = $region37
    $region36: #{cnn_forward.3} parent=1 // pred_region
      %62 = vst [vmem:[#allocation2] sm:$0xf] 0.0
    $region37: #{cnn_forward.3} parent=1 // pred_fallthru
      _
    %v63 = vld [vmem:[#allocation2] sm:$0xf]
    %v64 = vld [vmem:[%s0] sm:$0xff]
    %v65 = vld [vmem:[%s0 + $0x8] sm:$0xff]
    %v66 = vld [vmem:[%s0 + $0x10] sm:$0xff]
    %v67 = vld [vmem:[%s0 + $0x18] sm:$0xff]
    %v68 = vld [vmem:[%s0 + $0x20] sm:$0xff]
    %v69 = vld [vmem:[#allocation3] sm:$0xff]
    %v70 = vld [vmem:[#allocation3 + $0x8] sm:$0xff]
    %v71 = vld [vmem:[#allocation3 + $0x10] sm:$0xff]
    %v72 = vld [vmem:[#allocation3 + $0x18] sm:$0xff]
    %v73 = vld [vmem:[#allocation3 + $0x20] sm:$0xff]
    %v74 = vld [vmem:[#allocation3 + $0x28] sm:$0xff]
    %v75 = vld [vmem:[#allocation3 + $0x30] sm:$0xff]
    %v76 = vld [vmem:[#allocation3 + $0x38] sm:$0xff]
    %v77 = vld [vmem:[#allocation3 + $0x40] sm:$0xff]
    %v78 = vld [vmem:[#allocation3 + $0x48] sm:$0xff]
    %v79 = vld [vmem:[#allocation3 + $0x50] sm:$0xff]
    %v80 = vld [vmem:[#allocation3 + $0x58] sm:$0xff]
    %v81 = vld [vmem:[#allocation3 + $0x60] sm:$0xff]
    %v82 = vld [vmem:[#allocation3 + $0x68] sm:$0xff]
    %v83 = vld [vmem:[#allocation3 + $0x70] sm:$0xff]
    %v84 = vld [vmem:[#allocation3 + $0x78] sm:$0xff]
    %v85 = vld [vmem:[#allocation3 + $0x80] sm:$0xff]
    %v86 = vld [vmem:[#allocation3 + $0x88] sm:$0xff]
    %v87 = vld [vmem:[#allocation3 + $0x90] sm:$0xff]
    %v88 = vld [vmem:[#allocation3 + $0x98] sm:$0xff]
    %v89 = vld [vmem:[#allocation3 + $0xa0] sm:$0xff]
    %v90 = vld [vmem:[#allocation3 + $0xa8] sm:$0xff]
    %v91 = vld [vmem:[#allocation3 + $0xb0] sm:$0xff]
    %v92 = vld [vmem:[#allocation3 + $0xb8] sm:$0xff]
    %v93 = vld [vmem:[#allocation3 + $0xc0] sm:$0xff]
    %v94 = vld [vmem:[#allocation3 + $0xc8] sm:$0xff]
    %v95 = vld [vmem:[#allocation3 + $0xd0] sm:$0xff]
    %v96 = vld [vmem:[#allocation3 + $0xd8] sm:$0xff]
    %v97 = vld [vmem:[#allocation3 + $0xe0] sm:$0xff]
    %v98 = vld [vmem:[#allocation3 + $0xe8] sm:$0xff]
    %v99 = vld [vmem:[#allocation3 + $0xf0] sm:$0xff]
    %v100 = vld [vmem:[#allocation3 + $0xf8] sm:$0xff]
    %v101 = vld [vmem:[#allocation3 + $0x100] sm:$0xff]
    %v102 = vld [vmem:[#allocation3 + $0x108] sm:$0xff]
    %v103 = vld [vmem:[#allocation3 + $0x110] sm:$0xff]
    %v104 = vld [vmem:[#allocation3 + $0x118] sm:$0xff]
    %v105 = vld [vmem:[#allocation3 + $0x120] sm:$0xff]
    %v106 = vld [vmem:[#allocation3 + $0x128] sm:$0xff]
    %v107 = vld [vmem:[#allocation3 + $0x130] sm:$0xff]
    %v108 = vld [vmem:[#allocation3 + $0x138] sm:$0xff]
    %v109 = vld [vmem:[#allocation3 + $0x140] sm:$0xff]
    %v110 = vld [vmem:[#allocation3 + $0x148] sm:$0xff]
    %v111 = vld [vmem:[#allocation3 + $0x150] sm:$0xff]
    %v112 = vld [vmem:[#allocation3 + $0x158] sm:$0xff]
    %v113 = vld [vmem:[#allocation3 + $0x160] sm:$0xff]
    %v114 = vld [vmem:[#allocation3 + $0x168] sm:$0xff]
    %v115 = vld [vmem:[#allocation3 + $0x170] sm:$0xff]
    %v116 = vld [vmem:[#allocation3 + $0x178] sm:$0xff]
    %v117 = vld [vmem:[#allocation3 + $0x180] sm:$0xff]
    %v118 = vld [vmem:[#allocation3 + $0x188] sm:$0xff]
    %v119 = vld [vmem:[#allocation3 + $0x190] sm:$0xff]
    %v120 = vld [vmem:[#allocation3 + $0x198] sm:$0xff]
    %v121 = vld [vmem:[#allocation3 + $0x1a0] sm:$0xff]
    %v122 = vld [vmem:[#allocation3 + $0x1a8] sm:$0xff]
    %v123 = vld [vmem:[#allocation3 + $0x1b0] sm:$0xff]
    %v124 = vld [vmem:[#allocation3 + $0x1b8] sm:$0xff]
    %v125 = vld [vmem:[#allocation3 + $0x1c0] sm:$0xff]
    %v126 = vld [vmem:[#allocation3 + $0x1c8] sm:$0xff]
    %v127 = vld [vmem:[#allocation3 + $0x1d0] sm:$0xff]
    %v128 = vld [vmem:[#allocation3 + $0x1d8] sm:$0xff]
    %v129 = vld [vmem:[#allocation3 + $0x1e0] sm:$0xff]
    %v130 = vld [vmem:[#allocation3 + $0x1e8] sm:$0xff]
    %v131 = vld [vmem:[#allocation3 + $0x1f0] sm:$0xff]
    %v132 = vld [vmem:[#allocation3 + $0x1f8] sm:$0xff]
    %v133 = vld [vmem:[#allocation3 + $0x200] sm:$0xff]
    %v134 = vld [vmem:[#allocation3 + $0x208] sm:$0xff]
    %v135 = vld [vmem:[#allocation3 + $0x210] sm:$0xff]
    %v136 = vld [vmem:[#allocation3 + $0x218] sm:$0xff]
    %v137 = vld [vmem:[#allocation3 + $0x220] sm:$0xff]
    %v138 = vld [vmem:[#allocation3 + $0x228] sm:$0xff]
    %v139 = vld [vmem:[#allocation3 + $0x230] sm:$0xff]
    %v140 = vld [vmem:[#allocation3 + $0x238] sm:$0xff]
    %v141 = vld [vmem:[#allocation3 + $0x240] sm:$0xff]
    %v142 = vld [vmem:[#allocation3 + $0x248] sm:$0xff]
    %v143 = vld [vmem:[#allocation3 + $0x250] sm:$0xff]
    %v144 = vld [vmem:[#allocation3 + $0x258] sm:$0xff]
    %v145 = vld [vmem:[#allocation3 + $0x260] sm:$0xff]
    %v146 = vld [vmem:[#allocation3 + $0x268] sm:$0xff]
    %v147 = vld [vmem:[#allocation3 + $0x270] sm:$0xff]
    %v148 = vld [vmem:[#allocation3 + $0x278] sm:$0xff]
    %v149 = vld [vmem:[#allocation3 + $0x280] sm:$0xff]
    %v150 = vld [vmem:[#allocation3 + $0x288] sm:$0xff]
    %v151 = vld [vmem:[#allocation3 + $0x290] sm:$0xff]
    %v152 = vld [vmem:[#allocation3 + $0x298] sm:$0xff]
    %v153 = vld [vmem:[#allocation3 + $0x2a0] sm:$0xff]
    %v154 = vld [vmem:[#allocation3 + $0x2a8] sm:$0xff]
    %v155 = vld [vmem:[#allocation3 + $0x2b0] sm:$0xff]
    %v156 = vld [vmem:[#allocation3 + $0x2b8] sm:$0xff]
    %v157 = vld [vmem:[#allocation3 + $0x2c0] sm:$0xff]
    %v158 = vld [vmem:[#allocation3 + $0x2c8] sm:$0xff]
    %v159 = vld [vmem:[#allocation3 + $0x2d0] sm:$0xff]
    %v160 = vld [vmem:[#allocation3 + $0x2d8] sm:$0xff]
    %v161 = vld [vmem:[#allocation3 + $0x2e0] sm:$0xff]
    %v162 = vld [vmem:[#allocation3 + $0x2e8] sm:$0xff]
    %v163 = vld [vmem:[#allocation3 + $0x2f0] sm:$0xff]
    %v164 = vld [vmem:[#allocation3 + $0x2f8] sm:$0xff]
    %v165 = vld [vmem:[#allocation3 + $0x300] sm:$0xff]
    %v166 = vld [vmem:[#allocation3 + $0x308] sm:$0xff]
    %v167 = vld [vmem:[#allocation3 + $0x310] sm:$0xff]
    %v168 = vld [vmem:[#allocation3 + $0x318] sm:$0xff]
    %v169 = vld [vmem:[#allocation3 + $0x320] sm:$0xff]
    %v170 = vld [vmem:[#allocation3 + $0x328] sm:$0xff]
    %v171 = vld [vmem:[#allocation3 + $0x330] sm:$0xff]
    %v172 = vld [vmem:[#allocation3 + $0x338] sm:$0xff]
    %v173 = vld [vmem:[#allocation3 + $0x340] sm:$0xff]
    %v174 = vld [vmem:[#allocation3 + $0x348] sm:$0xff]
    %v175 = vld [vmem:[#allocation3 + $0x350] sm:$0xff]
    %v176 = vld [vmem:[#allocation3 + $0x358] sm:$0xff]
    %v177 = vld [vmem:[#allocation3 + $0x360] sm:$0xff]
    %v178 = vld [vmem:[#allocation3 + $0x368] sm:$0xff]
    %v179 = vld [vmem:[#allocation3 + $0x370] sm:$0xff]
    %v180 = vld [vmem:[#allocation3 + $0x378] sm:$0xff]
    %v181 = vld [vmem:[#allocation3 + $0x380] sm:$0xff]
    %v182 = vld [vmem:[#allocation3 + $0x388] sm:$0xff]
    %v183 = vld [vmem:[#allocation3 + $0x390] sm:$0xff]
    %v184 = vld [vmem:[#allocation3 + $0x398] sm:$0xff]
    %v185 = vld [vmem:[#allocation3 + $0x3a0] sm:$0xff]
    %v186 = vld [vmem:[#allocation3 + $0x3a8] sm:$0xff]
    %v187 = vld [vmem:[#allocation3 + $0x3b0] sm:$0xff]
    %v188 = vld [vmem:[#allocation3 + $0x3b8] sm:$0xff]
    %v189 = vld [vmem:[#allocation3 + $0x3c0] sm:$0xff]
    %v190 = vld [vmem:[#allocation3 + $0x3c8] sm:$0xff]
    %v191 = vld [vmem:[#allocation3 + $0x3d0] sm:$0xff]
    %v192 = vld [vmem:[#allocation3 + $0x3d8] sm:$0xff]
    %v193 = vld [vmem:[#allocation3 + $0x3e0] sm:$0xff]
    %v194 = vld [vmem:[#allocation3 + $0x3e8] sm:$0xff]
    %v195 = vld [vmem:[#allocation3 + $0x3f0] sm:$0xff]
    %v196 = vld [vmem:[#allocation3 + $0x3f8] sm:$0xff]
    %v197 = vld [vmem:[#allocation3 + $0x400] sm:$0xff]
    %v198 = vld [vmem:[#allocation3 + $0x408] sm:$0xff]
    %v199 = vld [vmem:[#allocation3 + $0x410] sm:$0xff]
    %v200 = vld [vmem:[#allocation3 + $0x418] sm:$0xff]
    %v201 = vld [vmem:[#allocation3 + $0x420] sm:$0xff]
    %v202 = vld [vmem:[#allocation3 + $0x428] sm:$0xff]
    %v203 = vld [vmem:[#allocation3 + $0x430] sm:$0xff]
    %v204 = vld [vmem:[#allocation3 + $0x438] sm:$0xff]
    %v205 = vld [vmem:[#allocation3 + $0x440] sm:$0xff]
    %v206 = vld [vmem:[#allocation3 + $0x448] sm:$0xff]
    %v207 = vld [vmem:[#allocation3 + $0x450] sm:$0xff]
    %v208 = vld [vmem:[#allocation3 + $0x458] sm:$0xff]
    %v209 = vld [vmem:[#allocation3 + $0x460] sm:$0xff]
    %v210 = vld [vmem:[#allocation3 + $0x468] sm:$0xff]
    %v211 = vld [vmem:[#allocation3 + $0x470] sm:$0xff]
    %v212 = vld [vmem:[#allocation3 + $0x478] sm:$0xff]
    %v213 = vld [vmem:[#allocation3 + $0x480] sm:$0xff]
    %v214 = vld [vmem:[#allocation3 + $0x488] sm:$0xff]
    %v215 = vld [vmem:[#allocation3 + $0x490] sm:$0xff]
    %v216 = vld [vmem:[#allocation3 + $0x498] sm:$0xff]
    %v217 = vld [vmem:[#allocation3 + $0x4a0] sm:$0xff]
    %v218 = vld [vmem:[#allocation3 + $0x4a8] sm:$0xff]
    %v219 = vld [vmem:[#allocation3 + $0x4b0] sm:$0xff]
    %v220 = vld [vmem:[#allocation3 + $0x4b8] sm:$0xff]
    %v221 = vld [vmem:[#allocation3 + $0x4c0] sm:$0xff]
    %v222 = vld [vmem:[#allocation3 + $0x4c8] sm:$0xff]
    %v223 = vld [vmem:[#allocation3 + $0x4d0] sm:$0xff]
    %v224 = vld [vmem:[#allocation3 + $0x4d8] sm:$0xff]
    %v225 = vld [vmem:[#allocation3 + $0x4e0] sm:$0xff]
    %v226 = vld [vmem:[#allocation3 + $0x4e8] sm:$0xff]
    %v227 = vld [vmem:[#allocation3 + $0x4f0] sm:$0xff]
    %v228 = vld [vmem:[#allocation3 + $0x4f8] sm:$0xff]
    %v229 = vld [vmem:[#allocation3 + $0x500] sm:$0xff]
    %v230 = vld [vmem:[#allocation3 + $0x508] sm:$0xff]
    %v231 = vld [vmem:[#allocation3 + $0x510] sm:$0xff]
    %v232 = vld [vmem:[#allocation3 + $0x518] sm:$0xff]
    %v233 = vld [vmem:[#allocation3 + $0x520] sm:$0xff]
    %v234 = vld [vmem:[#allocation3 + $0x528] sm:$0xff]
    %v235 = vld [vmem:[#allocation3 + $0x530] sm:$0xff]
    %v236 = vld [vmem:[#allocation3 + $0x538] sm:$0xff]
    %v237 = vld [vmem:[#allocation3 + $0x540] sm:$0xff]
    %v238 = vld [vmem:[#allocation3 + $0x548] sm:$0xff]
    %v239 = vld [vmem:[#allocation3 + $0x550] sm:$0xff]
    %v240 = vld [vmem:[#allocation3 + $0x558] sm:$0xff]
    %v241 = vld [vmem:[#allocation3 + $0x560] sm:$0xff]
    %v242 = vld [vmem:[#allocation3 + $0x568] sm:$0xff]
    %v243 = vld [vmem:[#allocation3 + $0x570] sm:$0xff]
    %v244 = vld [vmem:[#allocation3 + $0x578] sm:$0xff]
    %v245 = vld [vmem:[#allocation3 + $0x580] sm:$0xff]
    %v246 = vld [vmem:[#allocation3 + $0x588] sm:$0xff]
    %v247 = vld [vmem:[#allocation3 + $0x590] sm:$0xff]
    %v248 = vld [vmem:[#allocation3 + $0x598] sm:$0xff]
    %v249 = vld [vmem:[#allocation3 + $0x5a0] sm:$0xff]
    %v250 = vld [vmem:[#allocation3 + $0x5a8] sm:$0xff]
    %v251 = vld [vmem:[#allocation3 + $0x5b0] sm:$0xff]
    %v252 = vld [vmem:[#allocation3 + $0x5b8] sm:$0xff]
    %v253 = vld [vmem:[#allocation3 + $0x5c0] sm:$0xff]
    %v254 = vld [vmem:[#allocation3 + $0x5c8] sm:$0xff]
    %v255 = vld [vmem:[#allocation3 + $0x5d0] sm:$0xff]
    %v256 = vld [vmem:[#allocation3 + $0x5d8] sm:$0xff]
    %v257 = vld [vmem:[#allocation3 + $0x5e0] sm:$0xff]
    %v258 = vld [vmem:[#allocation3 + $0x5e8] sm:$0xff]
    %v259 = vld [vmem:[#allocation3 + $0x5f0] sm:$0xff]
    %v260 = vld [vmem:[#allocation3 + $0x5f8] sm:$0xff]
    %v261 = vld [vmem:[#allocation3 + $0x600] sm:$0xff]
    %v262 = vld [vmem:[#allocation3 + $0x608] sm:$0xff]
    %v263 = vld [vmem:[#allocation3 + $0x610] sm:$0xff]
    %v264 = vld [vmem:[#allocation3 + $0x618] sm:$0xff]
    %v265 = vld [vmem:[#allocation3 + $0x620] sm:$0xff]
    %v266 = vld [vmem:[#allocation3 + $0x628] sm:$0xff]
    %v267 = vld [vmem:[#allocation3 + $0x630] sm:$0xff]
    %v268 = vld [vmem:[#allocation3 + $0x638] sm:$0xff]
    %v269 = vld [vmem:[#allocation3 + $0x640] sm:$0xff]
    %v270 = vld [vmem:[#allocation3 + $0x648] sm:$0xff]
    %v271 = vld [vmem:[#allocation3 + $0x650] sm:$0xff]
    %v272 = vld [vmem:[#allocation3 + $0x658] sm:$0xff]
    %v273 = vld [vmem:[#allocation3 + $0x660] sm:$0xff]
    %v274 = vld [vmem:[#allocation3 + $0x668] sm:$0xff]
    %v275 = vld [vmem:[#allocation3 + $0x670] sm:$0xff]
    %v276 = vld [vmem:[#allocation3 + $0x678] sm:$0xff]
    %v277 = vld [vmem:[#allocation3 + $0x680] sm:$0xff]
    %v278 = vld [vmem:[#allocation3 + $0x688] sm:$0xff]
    %v279 = vld [vmem:[#allocation3 + $0x690] sm:$0xff]
    %v280 = vld [vmem:[#allocation3 + $0x698] sm:$0xff]
    %v281 = vld [vmem:[#allocation3 + $0x6a0] sm:$0xff]
    %v282 = vld [vmem:[#allocation3 + $0x6a8] sm:$0xff]
    %v283 = vld [vmem:[#allocation3 + $0x6b0] sm:$0xff]
    %v284 = vld [vmem:[#allocation3 + $0x6b8] sm:$0xff]
    %v285 = vld [vmem:[#allocation3 + $0x6c0] sm:$0xff]
    %v286 = vld [vmem:[#allocation3 + $0x6c8] sm:$0xff]
    %v287 = vld [vmem:[#allocation3 + $0x6d0] sm:$0xff]
    %v288 = vld [vmem:[#allocation3 + $0x6d8] sm:$0xff]
    %v289 = vld [vmem:[#allocation3 + $0x6e0] sm:$0xff]
    %v290 = vld [vmem:[#allocation3 + $0x6e8] sm:$0xff]
    %v291 = vld [vmem:[#allocation3 + $0x6f0] sm:$0xff]
    %v292 = vld [vmem:[#allocation3 + $0x6f8] sm:$0xff]
    %v293 = vld [vmem:[#allocation3 + $0x700] sm:$0xff]
    %v294 = vld [vmem:[#allocation3 + $0x708] sm:$0xff]
    %v295 = vld [vmem:[#allocation3 + $0x710] sm:$0xff]
    %v296 = vld [vmem:[#allocation3 + $0x718] sm:$0xff]
    %v297 = vld [vmem:[#allocation3 + $0x720] sm:$0xff]
    %v298 = vld [vmem:[#allocation3 + $0x728] sm:$0xff]
    %v299 = vld [vmem:[#allocation3 + $0x730] sm:$0xff]
    %v300 = vld [vmem:[#allocation3 + $0x738] sm:$0xff]
    %v301 = vld [vmem:[#allocation3 + $0x740] sm:$0xff]
    %v302 = vld [vmem:[#allocation3 + $0x748] sm:$0xff]
    %v303 = vld [vmem:[#allocation3 + $0x750] sm:$0xff]
    %v304 = vld [vmem:[#allocation3 + $0x758] sm:$0xff]
    %v305 = vld [vmem:[#allocation3 + $0x760] sm:$0xff]
    %v306 = vld [vmem:[#allocation3 + $0x768] sm:$0xff]
    %v307 = vld [vmem:[#allocation3 + $0x770] sm:$0xff]
    %v308 = vld [vmem:[#allocation3 + $0x778] sm:$0xff]
    %v309 = vld [vmem:[#allocation3 + $0x780] sm:$0xff]
    %v310 = vld [vmem:[#allocation3 + $0x788] sm:$0xff]
    %v311 = vld [vmem:[#allocation3 + $0x790] sm:$0xff]
    %v312 = vld [vmem:[#allocation3 + $0x798] sm:$0xff]
    %v313 = vld [vmem:[#allocation3 + $0x7a0] sm:$0xff]
    %v314 = vld [vmem:[#allocation3 + $0x7a8] sm:$0xff]
    %v315 = vld [vmem:[#allocation3 + $0x7b0] sm:$0xff]
    %v316 = vld [vmem:[#allocation3 + $0x7b8] sm:$0xff]
    %v317 = vld [vmem:[#allocation3 + $0x7c0] sm:$0xff]
    %v318 = vld [vmem:[#allocation3 + $0x7c8] sm:$0xff]
    %v319 = vld [vmem:[#allocation3 + $0x7d0] sm:$0xff]
    %v320 = vld [vmem:[#allocation3 + $0x7d8] sm:$0xff]
    %v321 = vld [vmem:[#allocation3 + $0x7e0] sm:$0xff]
    %v322 = vld [vmem:[#allocation3 + $0x7e8] sm:$0xff]
    %v323 = vld [vmem:[#allocation3 + $0x7f0] sm:$0xff]
    %v324 = vld [vmem:[#allocation3 + $0x7f8] sm:$0xff]
    %v325 = vld [vmem:[#allocation3 + $0x800] sm:$0xff]
    %v326 = vld [vmem:[#allocation3 + $0x808] sm:$0xff]
    %v327 = vld [vmem:[#allocation3 + $0x810] sm:$0xff]
    %v328 = vld [vmem:[#allocation3 + $0x818] sm:$0xff]
    %v329 = vld [vmem:[#allocation3 + $0x820] sm:$0xff]
    %v330 = vld [vmem:[#allocation3 + $0x828] sm:$0xff]
    %v331 = vld [vmem:[#allocation3 + $0x830] sm:$0xff]
    %v332 = vld [vmem:[#allocation3 + $0x838] sm:$0xff]
    %v333 = vld [vmem:[#allocation3 + $0x840] sm:$0xff]
    %v334 = vld [vmem:[#allocation3 + $0x848] sm:$0xff]
    %v335 = vld [vmem:[#allocation3 + $0x850] sm:$0xff]
    %v336 = vld [vmem:[#allocation3 + $0x858] sm:$0xff]
    %v337 = vld [vmem:[#allocation3 + $0x860] sm:$0xff]
    %v338 = vld [vmem:[#allocation3 + $0x868] sm:$0xff]
    %v339 = vld [vmem:[#allocation3 + $0x870] sm:$0xff]
    %v340 = vld [vmem:[#allocation3 + $0x878] sm:$0xff]
    %v341 = vld [vmem:[#allocation3 + $0x880] sm:$0xff]
    %v342 = vld [vmem:[#allocation3 + $0x888] sm:$0xff]
    %v343 = vld [vmem:[#allocation3 + $0x890] sm:$0xff]
    %v344 = vld [vmem:[#allocation3 + $0x898] sm:$0xff]
    %v345 = vld [vmem:[#allocation3 + $0x8a0] sm:$0xff]
    %v346 = vld [vmem:[#allocation3 + $0x8a8] sm:$0xff]
    %v347 = vld [vmem:[#allocation3 + $0x8b0] sm:$0xff]
    %v348 = vld [vmem:[#allocation3 + $0x8b8] sm:$0xff]
    %v349 = vld [vmem:[#allocation3 + $0x8c0] sm:$0xff]
    %v350 = vld [vmem:[#allocation3 + $0x8c8] sm:$0xff]
    %v351 = vld [vmem:[#allocation3 + $0x8d0] sm:$0xff]
    %v352 = vld [vmem:[#allocation3 + $0x8d8] sm:$0xff]
    %v353 = vld [vmem:[#allocation3 + $0x8e0] sm:$0xff]
    %v354 = vld [vmem:[#allocation3 + $0x8e8] sm:$0xff]
    %v355 = vld [vmem:[#allocation3 + $0x8f0] sm:$0xff]
    %v356 = vld [vmem:[#allocation3 + $0x8f8] sm:$0xff]
    %v357 = vld [vmem:[#allocation3 + $0x900] sm:$0xff]
    %v358 = vld [vmem:[#allocation3 + $0x908] sm:$0xff]
    %v359 = vld [vmem:[#allocation3 + $0x910] sm:$0xff]
    %v360 = vld [vmem:[#allocation3 + $0x918] sm:$0xff]
    %v361 = vld [vmem:[#allocation3 + $0x920] sm:$0xff]
    %v362 = vld [vmem:[#allocation3 + $0x928] sm:$0xff]
    %v363 = vld [vmem:[#allocation3 + $0x930] sm:$0xff]
    %v364 = vld [vmem:[#allocation3 + $0x938] sm:$0xff]
    %v365 = vld [vmem:[#allocation3 + $0x940] sm:$0xff]
    %v366 = vld [vmem:[#allocation3 + $0x948] sm:$0xff]
    %v367 = vld [vmem:[#allocation3 + $0x950] sm:$0xff]
    %v368 = vld [vmem:[#allocation3 + $0x958] sm:$0xff]
    %v369 = vld [vmem:[#allocation3 + $0x960] sm:$0xff]
    %v370 = vld [vmem:[#allocation3 + $0x968] sm:$0xff]
    %v371 = vld [vmem:[#allocation3 + $0x970] sm:$0xff]
    %v372 = vld [vmem:[#allocation3 + $0x978] sm:$0xff]
    %v373 = vld [vmem:[#allocation3 + $0x980] sm:$0xff]
    %v374 = vld [vmem:[#allocation3 + $0x988] sm:$0xff]
    %v375 = vld [vmem:[#allocation3 + $0x990] sm:$0xff]
    %v376 = vld [vmem:[#allocation3 + $0x998] sm:$0xff]
    %v377 = vld [vmem:[#allocation3 + $0x9a0] sm:$0xff]
    %v378 = vld [vmem:[#allocation3 + $0x9a8] sm:$0xff]
    %v379 = vld [vmem:[#allocation3 + $0x9b0] sm:$0xff]
    %v380 = vld [vmem:[#allocation3 + $0x9b8] sm:$0xff]
    %v381 = vld [vmem:[#allocation3 + $0x9c0] sm:$0xff]
    %v382 = vld [vmem:[#allocation3 + $0x9c8] sm:$0xff]
    %v383 = vld [vmem:[#allocation3 + $0x9d0] sm:$0xff]
    %v384 = vld [vmem:[#allocation3 + $0x9d8] sm:$0xff]
    %v385 = vld [vmem:[#allocation3 + $0x9e0] sm:$0xff]
    %v386 = vld [vmem:[#allocation3 + $0x9e8] sm:$0xff]
    %v387 = vld [vmem:[#allocation3 + $0x9f0] sm:$0xff]
    %v388 = vld [vmem:[#allocation3 + $0x9f8] sm:$0xff]
    %v389 = vld [vmem:[#allocation3 + $0xa00] sm:$0xff]
    %v390 = vld [vmem:[#allocation3 + $0xa08] sm:$0xff]
    %v391 = vld [vmem:[#allocation3 + $0xa10] sm:$0xff]
    %v392 = vld [vmem:[#allocation3 + $0xa18] sm:$0xff]
    %v393 = vld [vmem:[#allocation3 + $0xa20] sm:$0xff]
    %v394 = vld [vmem:[#allocation3 + $0xa28] sm:$0xff]
    %v395 = vld [vmem:[#allocation3 + $0xa30] sm:$0xff]
    %v396 = vld [vmem:[#allocation3 + $0xa38] sm:$0xff]
    %v397 = vld [vmem:[#allocation3 + $0xa40] sm:$0xff]
    %v398 = vld [vmem:[#allocation3 + $0xa48] sm:$0xff]
    %v399 = vld [vmem:[#allocation3 + $0xa50] sm:$0xff]
    %v400 = vld [vmem:[#allocation3 + $0xa58] sm:$0xff]
    %v401 = vld [vmem:[#allocation3 + $0xa60] sm:$0xff]
    %v402 = vld [vmem:[#allocation3 + $0xa68] sm:$0xff]
    %v403 = vld [vmem:[#allocation3 + $0xa70] sm:$0xff]
    %v404 = vld [vmem:[#allocation3 + $0xa78] sm:$0xff]
    %v405 = vld [vmem:[#allocation3 + $0xa80] sm:$0xff]
    %v406 = vld [vmem:[#allocation3 + $0xa88] sm:$0xff]
    %v407 = vld [vmem:[#allocation3 + $0xa90] sm:$0xff]
    %v408 = vld [vmem:[#allocation3 + $0xa98] sm:$0xff]
    %v409 = vld [vmem:[#allocation3 + $0xaa0] sm:$0xff]
    %v410 = vld [vmem:[#allocation3 + $0xaa8] sm:$0xff]
    %v411 = vld [vmem:[#allocation3 + $0xab0] sm:$0xff]
    %v412 = vld [vmem:[#allocation3 + $0xab8] sm:$0xff]
    %v413 = vld [vmem:[#allocation3 + $0xac0] sm:$0xff]
    %v414 = vld [vmem:[#allocation3 + $0xac8] sm:$0xff]
    %v415 = vld [vmem:[#allocation3 + $0xad0] sm:$0xff]
    %v416 = vld [vmem:[#allocation3 + $0xad8] sm:$0xff]
    %v417 = vld [vmem:[#allocation3 + $0xae0] sm:$0xff]
    %v418 = vld [vmem:[#allocation3 + $0xae8] sm:$0xff]
    %v419 = vld [vmem:[#allocation3 + $0xaf0] sm:$0xff]
    %v420 = vld [vmem:[#allocation3 + $0xaf8] sm:$0xff]
    %v421 = vld [vmem:[#allocation3 + $0xb00] sm:$0xff]
    %v422 = vld [vmem:[#allocation3 + $0xb08] sm:$0xff]
    %v423 = vld [vmem:[#allocation3 + $0xb10] sm:$0xff]
    %v424 = vld [vmem:[#allocation3 + $0xb18] sm:$0xff]
    %v425 = vld [vmem:[#allocation3 + $0xb20] sm:$0xff]
    %v426 = vld [vmem:[#allocation3 + $0xb28] sm:$0xff]
    %v427 = vld [vmem:[#allocation3 + $0xb30] sm:$0xff]
    %v428 = vld [vmem:[#allocation3 + $0xb38] sm:$0xff]
    %v429 = vld [vmem:[#allocation3 + $0xb40] sm:$0xff]
    %v430 = vld [vmem:[#allocation3 + $0xb48] sm:$0xff]
    %v431 = vld [vmem:[#allocation3 + $0xb50] sm:$0xff]
    %v432 = vld [vmem:[#allocation3 + $0xb58] sm:$0xff]
    %v433 = vld [vmem:[#allocation3 + $0xb60] sm:$0xff]
    %v434 = vld [vmem:[#allocation3 + $0xb68] sm:$0xff]
    %v435 = vld [vmem:[#allocation3 + $0xb70] sm:$0xff]
    %v436 = vld [vmem:[#allocation3 + $0xb78] sm:$0xff]
    %v437 = vld [vmem:[#allocation3 + $0xb80] sm:$0xff]
    %v438 = vld [vmem:[#allocation3 + $0xb88] sm:$0xff]
    %v439 = vld [vmem:[#allocation3 + $0xb90] sm:$0xff]
    %v440 = vld [vmem:[#allocation3 + $0xb98] sm:$0xff]
    %v441 = vld [vmem:[#allocation3 + $0xba0] sm:$0xff]
    %v442 = vld [vmem:[#allocation3 + $0xba8] sm:$0xff]
    %v443 = vld [vmem:[#allocation3 + $0xbb0] sm:$0xff]
    %v444 = vld [vmem:[#allocation3 + $0xbb8] sm:$0xff]
    %v445 = vld [vmem:[#allocation3 + $0xbc0] sm:$0xff]
    %v446 = vld [vmem:[#allocation3 + $0xbc8] sm:$0xff]
    %v447 = vld [vmem:[#allocation3 + $0xbd0] sm:$0xff]
    %v448 = vld [vmem:[#allocation3 + $0xbd8] sm:$0xff]
    %v449 = vld [vmem:[#allocation3 + $0xbe0] sm:$0xff]
    %v450 = vld [vmem:[#allocation3 + $0xbe8] sm:$0xff]
    %v451 = vld [vmem:[#allocation3 + $0xbf0] sm:$0xff]
    %v452 = vld [vmem:[#allocation3 + $0xbf8] sm:$0xff]
    %v453 = vld [vmem:[#allocation3 + $0xc00] sm:$0xff]
    %v454 = vld [vmem:[#allocation3 + $0xc08] sm:$0xff]
    %v455 = vld [vmem:[#allocation3 + $0xc10] sm:$0xff]
    %v456 = vld [vmem:[#allocation3 + $0xc18] sm:$0xff]
    %v457 = vld [vmem:[#allocation3 + $0xc20] sm:$0xff]
    %v458 = vld [vmem:[#allocation3 + $0xc28] sm:$0xff]
    %v459 = vld [vmem:[#allocation3 + $0xc30] sm:$0xff]
    %v460 = vld [vmem:[#allocation3 + $0xc38] sm:$0xff]
    %v461 = vld [vmem:[#allocation3 + $0xc40] sm:$0xff]
    %v462 = vld [vmem:[#allocation3 + $0xc48] sm:$0xff]
    %v463 = vld [vmem:[#allocation3 + $0xc50] sm:$0xff]
    %v464 = vld [vmem:[#allocation3 + $0xc58] sm:$0xff]
    %v465 = vld [vmem:[#allocation3 + $0xc60] sm:$0xff]
    %v466 = vld [vmem:[#allocation3 + $0xc68] sm:$0xff]
    %v467 = vld [vmem:[#allocation3 + $0xc70] sm:$0xff]
    %v468 = vld [vmem:[#allocation3 + $0xc78] sm:$0xff]
    %v469 = vld [vmem:[#allocation3 + $0xc80] sm:$0xff]
    %v470 = vld [vmem:[#allocation3 + $0xc88] sm:$0xff]
    %v471 = vld [vmem:[#allocation3 + $0xc90] sm:$0xff]
    %v472 = vld [vmem:[#allocation3 + $0xc98] sm:$0xff]
    %v473 = vld [vmem:[#allocation3 + $0xca0] sm:$0xff]
    %v474 = vld [vmem:[#allocation3 + $0xca8] sm:$0xff]
    %v475 = vld [vmem:[#allocation3 + $0xcb0] sm:$0xff]
    %v476 = vld [vmem:[#allocation3 + $0xcb8] sm:$0xff]
    %v477 = vld [vmem:[#allocation3 + $0xcc0] sm:$0xff]
    %v478 = vld [vmem:[#allocation3 + $0xcc8] sm:$0xff]
    %v479 = vld [vmem:[#allocation3 + $0xcd0] sm:$0xff]
    %v480 = vld [vmem:[#allocation3 + $0xcd8] sm:$0xff]
    %v481 = vld [vmem:[#allocation3 + $0xce0] sm:$0xff]
    %v482 = vld [vmem:[#allocation3 + $0xce8] sm:$0xff]
    %v483 = vld [vmem:[#allocation3 + $0xcf0] sm:$0xff]
    %v484 = vld [vmem:[#allocation3 + $0xcf8] sm:$0xff]
    %v485 = vld [vmem:[#allocation3 + $0xd00] sm:$0xff]
    %v486 = vld [vmem:[#allocation3 + $0xd08] sm:$0xff]
    %v487 = vld [vmem:[#allocation3 + $0xd10] sm:$0xff]
    %v488 = vld [vmem:[#allocation3 + $0xd18] sm:$0xff]
    %v489 = vld [vmem:[#allocation3 + $0xd20] sm:$0xff]
    %v490 = vld [vmem:[#allocation3 + $0xd28] sm:$0xff]
    %v491 = vld [vmem:[#allocation3 + $0xd30] sm:$0xff]
    %v492 = vld [vmem:[#allocation3 + $0xd38] sm:$0xff]
    %v493 = vld [vmem:[#allocation3 + $0xd40] sm:$0xff]
    %v494 = vld [vmem:[#allocation3 + $0xd48] sm:$0xff]
    %v495 = vld [vmem:[#allocation3 + $0xd50] sm:$0xff]
    %v496 = vld [vmem:[#allocation3 + $0xd58] sm:$0xff]
    %v497 = vld [vmem:[#allocation3 + $0xd60] sm:$0xff]
    %v498 = vld [vmem:[#allocation3 + $0xd68] sm:$0xff]
    %v499 = vld [vmem:[#allocation3 + $0xd70] sm:$0xff]
    %v500 = vld [vmem:[#allocation3 + $0xd78] sm:$0xff]
    %v501 = vld [vmem:[#allocation3 + $0xd80] sm:$0xff]
    %v502 = vld [vmem:[#allocation3 + $0xd88] sm:$0xff]
    %v503 = vld [vmem:[#allocation3 + $0xd90] sm:$0xff]
    %v504 = vld [vmem:[#allocation3 + $0xd98] sm:$0xff]
    %v505 = vld [vmem:[#allocation3 + $0xda0] sm:$0xff]
    %v506 = vld [vmem:[#allocation3 + $0xda8] sm:$0xff]
    %v507 = vld [vmem:[#allocation3 + $0xdb0] sm:$0xff]
    %v508 = vld [vmem:[#allocation3 + $0xdb8] sm:$0xff]
    %v509 = vld [vmem:[#allocation3 + $0xdc0] sm:$0xff]
    %v510 = vld [vmem:[#allocation3 + $0xdc8] sm:$0xff]
    %v511 = vld [vmem:[#allocation3 + $0xdd0] sm:$0xff]
    %v512 = vld [vmem:[#allocation3 + $0xdd8] sm:$0xff]
    %v513 = vld [vmem:[#allocation3 + $0xde0] sm:$0xff]
    %v514 = vld [vmem:[#allocation3 + $0xde8] sm:$0xff]
    %v515 = vld [vmem:[#allocation3 + $0xdf0] sm:$0xff]
    %v516 = vld [vmem:[#allocation3 + $0xdf8] sm:$0xff]
    %v517 = vld [vmem:[#allocation3 + $0xe00] sm:$0xff]
    %v518 = vld [vmem:[#allocation3 + $0xe08] sm:$0xff]
    %v519 = vld [vmem:[#allocation3 + $0xe10] sm:$0xff]
    %v520 = vld [vmem:[#allocation3 + $0xe18] sm:$0xff]
    %v521 = vld [vmem:[#allocation3 + $0xe20] sm:$0xff]
    %v522 = vld [vmem:[#allocation3 + $0xe28] sm:$0xff]
    %v523 = vld [vmem:[#allocation3 + $0xe30] sm:$0xff]
    %v524 = vld [vmem:[#allocation3 + $0xe38] sm:$0xff]
    %v525 = vld [vmem:[#allocation3 + $0xe40] sm:$0xff]
    %v526 = vld [vmem:[#allocation3 + $0xe48] sm:$0xff]
    %v527 = vld [vmem:[#allocation3 + $0xe50] sm:$0xff]
    %v528 = vld [vmem:[#allocation3 + $0xe58] sm:$0xff]
    %v529 = vld [vmem:[#allocation3 + $0xe60] sm:$0xff]
    %v530 = vld [vmem:[#allocation3 + $0xe68] sm:$0xff]
    %v531 = vld [vmem:[#allocation3 + $0xe70] sm:$0xff]
    %v532 = vld [vmem:[#allocation3 + $0xe78] sm:$0xff]
    %v533 = vld [vmem:[#allocation3 + $0xe80] sm:$0xff]
    %v534 = vld [vmem:[#allocation3 + $0xe88] sm:$0xff]
    %v535 = vld [vmem:[#allocation3 + $0xe90] sm:$0xff]
    %v536 = vld [vmem:[#allocation3 + $0xe98] sm:$0xff]
    %v537 = vld [vmem:[#allocation3 + $0xea0] sm:$0xff]
    %v538 = vld [vmem:[#allocation3 + $0xea8] sm:$0xff]
    %v539 = vld [vmem:[#allocation3 + $0xeb0] sm:$0xff]
    %v540 = vld [vmem:[#allocation3 + $0xeb8] sm:$0xff]
    %v541 = vld [vmem:[#allocation3 + $0xec0] sm:$0xff]
    %v542 = vld [vmem:[#allocation3 + $0xec8] sm:$0xff]
    %v543 = vld [vmem:[#allocation3 + $0xed0] sm:$0xff]
    %v544 = vld [vmem:[#allocation3 + $0xed8] sm:$0xff]
    %v545 = vld [vmem:[#allocation3 + $0xee0] sm:$0xff]
    %v546 = vld [vmem:[#allocation3 + $0xee8] sm:$0xff]
    %v547 = vld [vmem:[#allocation3 + $0xef0] sm:$0xff]
    %v548 = vld [vmem:[#allocation3 + $0xef8] sm:$0xff]
    %v549 = vld [vmem:[#allocation3 + $0xf00] sm:$0xff]
    %v550 = vld [vmem:[#allocation3 + $0xf08] sm:$0xff]
    %v551 = vld [vmem:[#allocation3 + $0xf10] sm:$0xff]
    %v552 = vld [vmem:[#allocation3 + $0xf18] sm:$0xff]
    %v553 = vld [vmem:[#allocation3 + $0xf20] sm:$0xff]
    %v554 = vld [vmem:[#allocation3 + $0xf28] sm:$0xff]
    %v555 = vld [vmem:[#allocation3 + $0xf30] sm:$0xff]
    %v556 = vld [vmem:[#allocation3 + $0xf38] sm:$0xff]
    %v557 = vld [vmem:[#allocation3 + $0xf40] sm:$0xff]
    %v558 = vld [vmem:[#allocation3 + $0xf48] sm:$0xff]
    %v559 = vld [vmem:[#allocation3 + $0xf50] sm:$0xff]
    %v560 = vld [vmem:[#allocation3 + $0xf58] sm:$0xff]
    %v561 = vld [vmem:[#allocation3 + $0xf60] sm:$0xff]
    %v562 = vld [vmem:[#allocation3 + $0xf68] sm:$0xff]
    %v563 = vld [vmem:[#allocation3 + $0xf70] sm:$0xff]
    %v564 = vld [vmem:[#allocation3 + $0xf78] sm:$0xff]
    %v565 = vld [vmem:[#allocation3 + $0xf80] sm:$0xff]
    %v566 = vld [vmem:[#allocation3 + $0xf88] sm:$0xff]
    %v567 = vld [vmem:[#allocation3 + $0xf90] sm:$0xff]
    %v568 = vld [vmem:[#allocation3 + $0xf98] sm:$0xff]
    %v569 = vld [vmem:[#allocation3 + $0xfa0] sm:$0xff]
    %v570 = vld [vmem:[#allocation3 + $0xfa8] sm:$0xff]
    %v571 = vld [vmem:[#allocation3 + $0xfb0] sm:$0xff]
    %v572 = vld [vmem:[#allocation3 + $0xfb8] sm:$0xff]
    %v573 = vld [vmem:[#allocation3 + $0xfc0] sm:$0xff]
    %v574 = vld [vmem:[#allocation3 + $0xfc8] sm:$0xff]
    %v575 = vld [vmem:[#allocation3 + $0xfd0] sm:$0xff]
    %v576 = vld [vmem:[#allocation3 + $0xfd8] sm:$0xff]
    %v577 = vld [vmem:[#allocation3 + $0xfe0] sm:$0xff]
    %v578 = vld [vmem:[#allocation3 + $0xfe8] sm:$0xff]
    %v579 = vld [vmem:[#allocation3 + $0xff0] sm:$0xff]
    %v580 = vld [vmem:[#allocation3 + $0xff8] sm:$0xff]
    %v581 = vld [vmem:[#allocation3 + $0x1000] sm:$0xff]
    %v582 = vld [vmem:[#allocation3 + $0x1008] sm:$0xff]
    %v583 = vld [vmem:[#allocation3 + $0x1010] sm:$0xff]
    %v584 = vld [vmem:[#allocation3 + $0x1018] sm:$0xff]
    %v585 = vld [vmem:[#allocation3 + $0x1020] sm:$0xff]
    %v586 = vld [vmem:[#allocation3 + $0x1028] sm:$0xff]
    %v587 = vld [vmem:[#allocation3 + $0x1030] sm:$0xff]
    %v588 = vld [vmem:[#allocation3 + $0x1038] sm:$0xff]
    %v589 = vld [vmem:[#allocation3 + $0x1040] sm:$0xff]
    %v590 = vld [vmem:[#allocation3 + $0x1048] sm:$0xff]
    %v591 = vld [vmem:[#allocation3 + $0x1050] sm:$0xff]
    %v592 = vld [vmem:[#allocation3 + $0x1058] sm:$0xff]
    %v593 = vld [vmem:[#allocation3 + $0x1060] sm:$0xff]
    %v594 = vld [vmem:[#allocation3 + $0x1068] sm:$0xff]
    %v595 = vld [vmem:[#allocation3 + $0x1070] sm:$0xff]
    %v596 = vld [vmem:[#allocation3 + $0x1078] sm:$0xff]
    %v597 = vld [vmem:[#allocation3 + $0x1080] sm:$0xff]
    %v598 = vld [vmem:[#allocation3 + $0x1088] sm:$0xff]
    %v599 = vld [vmem:[#allocation3 + $0x1090] sm:$0xff]
    %v600 = vld [vmem:[#allocation3 + $0x1098] sm:$0xff]
    %v601 = vld [vmem:[#allocation3 + $0x10a0] sm:$0xff]
    %v602 = vld [vmem:[#allocation3 + $0x10a8] sm:$0xff]
    %v603 = vld [vmem:[#allocation3 + $0x10b0] sm:$0xff]
    %v604 = vld [vmem:[#allocation3 + $0x10b8] sm:$0xff]
    %v605 = vld [vmem:[#allocation3 + $0x10c0] sm:$0xff]
    %v606 = vld [vmem:[#allocation3 + $0x10c8] sm:$0xff]
    %v607 = vld [vmem:[#allocation3 + $0x10d0] sm:$0xff]
    %v608 = vld [vmem:[#allocation3 + $0x10d8] sm:$0xff]
    %v609 = vld [vmem:[#allocation3 + $0x10e0] sm:$0xff]
    %v610 = vld [vmem:[#allocation3 + $0x10e8] sm:$0xff]
    %v611 = vld [vmem:[#allocation3 + $0x10f0] sm:$0xff]
    %v612 = vld [vmem:[#allocation3 + $0x10f8] sm:$0xff]
    %v613 = vld [vmem:[#allocation3 + $0x1100] sm:$0xff]
    %v614 = vld [vmem:[#allocation3 + $0x1108] sm:$0xff]
    %v615 = vld [vmem:[#allocation3 + $0x1110] sm:$0xff]
    %v616 = vld [vmem:[#allocation3 + $0x1118] sm:$0xff]
    %v617 = vld [vmem:[#allocation3 + $0x1120] sm:$0xff]
    %v618 = vld [vmem:[#allocation3 + $0x1128] sm:$0xff]
    %v619 = vld [vmem:[#allocation3 + $0x1130] sm:$0xff]
    %v620 = vld [vmem:[#allocation3 + $0x1138] sm:$0xff]
    %v621 = vld [vmem:[#allocation3 + $0x1140] sm:$0xff]
    %v622 = vld [vmem:[#allocation3 + $0x1148] sm:$0xff]
    %v623 = vld [vmem:[#allocation3 + $0x1150] sm:$0xff]
    %v624 = vld [vmem:[#allocation3 + $0x1158] sm:$0xff]
    %v625 = vld [vmem:[#allocation3 + $0x1160] sm:$0xff]
    %v626 = vld [vmem:[#allocation3 + $0x1168] sm:$0xff]
    %v627 = vld [vmem:[#allocation3 + $0x1170] sm:$0xff]
    %v628 = vld [vmem:[#allocation3 + $0x1178] sm:$0xff]
    %v629 = vld [vmem:[#allocation3 + $0x1180] sm:$0xff]
    %v630 = vld [vmem:[#allocation3 + $0x1188] sm:$0xff]
    %v631 = vld [vmem:[#allocation3 + $0x1190] sm:$0xff]
    %v632 = vld [vmem:[#allocation3 + $0x1198] sm:$0xff]
    %v633 = vld [vmem:[#allocation3 + $0x11a0] sm:$0xff]
    %v634 = vld [vmem:[#allocation3 + $0x11a8] sm:$0xff]
    %v635 = vld [vmem:[#allocation3 + $0x11b0] sm:$0xff]
    %v636 = vld [vmem:[#allocation3 + $0x11b8] sm:$0xff]
    %v637 = vld [vmem:[#allocation3 + $0x11c0] sm:$0xff]
    %v638 = vld [vmem:[#allocation3 + $0x11c8] sm:$0xff]
    %v639 = vld [vmem:[#allocation3 + $0x11d0] sm:$0xff]
    %v640 = vld [vmem:[#allocation3 + $0x11d8] sm:$0xff]
    %v641 = vld [vmem:[#allocation3 + $0x11e0] sm:$0xff]
    %v642 = vld [vmem:[#allocation3 + $0x11e8] sm:$0xff]
    %v643 = vld [vmem:[#allocation3 + $0x11f0] sm:$0xff]
    %v644 = vld [vmem:[#allocation3 + $0x11f8] sm:$0xff]
    %v645 = vld [vmem:[#allocation3 + $0x1200] sm:$0xff]
    %v646 = vld [vmem:[#allocation3 + $0x1208] sm:$0xff]
    %v647 = vld [vmem:[#allocation3 + $0x1210] sm:$0xff]
    %v648 = vld [vmem:[#allocation3 + $0x1218] sm:$0xff]
    %v649 = vld [vmem:[#allocation3 + $0x1220] sm:$0xff]
    %v650 = vld [vmem:[#allocation3 + $0x1228] sm:$0xff]
    %v651 = vld [vmem:[#allocation3 + $0x1230] sm:$0xff]
    %v652 = vld [vmem:[#allocation3 + $0x1238] sm:$0xff]
    %v653 = vld [vmem:[#allocation3 + $0x1240] sm:$0xff]
    %v654 = vld [vmem:[#allocation3 + $0x1248] sm:$0xff]
    %v655 = vld [vmem:[#allocation3 + $0x1250] sm:$0xff]
    %v656 = vld [vmem:[#allocation3 + $0x1258] sm:$0xff]
    %v657 = vld [vmem:[#allocation3 + $0x1260] sm:$0xff]
    %v658 = vld [vmem:[#allocation3 + $0x1268] sm:$0xff]
    %v659 = vld [vmem:[#allocation3 + $0x1270] sm:$0xff]
    %v660 = vld [vmem:[#allocation3 + $0x1278] sm:$0xff]
    %v661 = vld [vmem:[#allocation3 + $0x1280] sm:$0xff]
    %v662 = vld [vmem:[#allocation3 + $0x1288] sm:$0xff]
    %v663 = vld [vmem:[#allocation3 + $0x1290] sm:$0xff]
    %v664 = vld [vmem:[#allocation3 + $0x1298] sm:$0xff]
    %v665 = vld [vmem:[#allocation3 + $0x12a0] sm:$0xff]
    %v666 = vld [vmem:[#allocation3 + $0x12a8] sm:$0xff]
    %v667 = vld [vmem:[#allocation3 + $0x12b0] sm:$0xff]
    %v668 = vld [vmem:[#allocation3 + $0x12b8] sm:$0xff]
    %v669 = vld [vmem:[#allocation3 + $0x12c0] sm:$0xff]
    %v670 = vld [vmem:[#allocation3 + $0x12c8] sm:$0xff]
    %v671 = vld [vmem:[#allocation3 + $0x12d0] sm:$0xff]
    %v672 = vld [vmem:[#allocation3 + $0x12d8] sm:$0xff]
    %v673 = vld [vmem:[#allocation3 + $0x12e0] sm:$0xff]
    %v674 = vld [vmem:[#allocation3 + $0x12e8] sm:$0xff]
    %v675 = vld [vmem:[#allocation3 + $0x12f0] sm:$0xff]
    %v676 = vld [vmem:[#allocation3 + $0x12f8] sm:$0xff]
    %v677 = vld [vmem:[#allocation3 + $0x1300] sm:$0xff]
    %v678 = vld [vmem:[#allocation3 + $0x1308] sm:$0xff]
    %v679 = vld [vmem:[#allocation3 + $0x1310] sm:$0xff]
    %v680 = vld [vmem:[#allocation3 + $0x1318] sm:$0xff]
    %v681 = vld [vmem:[#allocation3 + $0x1320] sm:$0xff]
    %v682 = vld [vmem:[#allocation3 + $0x1328] sm:$0xff]
    %v683 = vld [vmem:[#allocation3 + $0x1330] sm:$0xff]
    %v684 = vld [vmem:[#allocation3 + $0x1338] sm:$0xff]
    %v685 = vld [vmem:[#allocation3 + $0x1340] sm:$0xff]
    %v686 = vld [vmem:[#allocation3 + $0x1348] sm:$0xff]
    %v687 = vld [vmem:[#allocation3 + $0x1350] sm:$0xff]
    %v688 = vld [vmem:[#allocation3 + $0x1358] sm:$0xff]
    %v689 = vld [vmem:[#allocation3 + $0x1360] sm:$0xff]
    %v690 = vld [vmem:[#allocation3 + $0x1368] sm:$0xff]
    %v691 = vld [vmem:[#allocation3 + $0x1370] sm:$0xff]
    %v692 = vld [vmem:[#allocation3 + $0x1378] sm:$0xff]
    %v693 = vld [vmem:[#allocation3 + $0x1380] sm:$0xff]
    %v694 = vld [vmem:[#allocation3 + $0x1388] sm:$0xff]
    %v695 = vld [vmem:[#allocation3 + $0x1390] sm:$0xff]
    %v696 = vld [vmem:[#allocation3 + $0x1398] sm:$0xff]
    %v697 = vld [vmem:[#allocation3 + $0x13a0] sm:$0xff]
    %v698 = vld [vmem:[#allocation3 + $0x13a8] sm:$0xff]
    %v699 = vld [vmem:[#allocation3 + $0x13b0] sm:$0xff]
    %v700 = vld [vmem:[#allocation3 + $0x13b8] sm:$0xff]
    %v701 = vld [vmem:[#allocation3 + $0x13c0] sm:$0xff]
    %v702 = vld [vmem:[#allocation3 + $0x13c8] sm:$0xff]
    %v703 = vld [vmem:[#allocation3 + $0x13d0] sm:$0xff]
    %v704 = vld [vmem:[#allocation3 + $0x13d8] sm:$0xff]
    %v705 = vld [vmem:[#allocation3 + $0x13e0] sm:$0xff]
    %v706 = vld [vmem:[#allocation3 + $0x13e8] sm:$0xff]
    %v707 = vld [vmem:[#allocation3 + $0x13f0] sm:$0xff]
    %v708 = vld [vmem:[#allocation3 + $0x13f8] sm:$0xff]
    %v714 = vcombine.high %v64, %v64
    %v716 = vunpack.c.l.s4 1983009808
    %v717 = vunpack.c.0.s8 %v716
    %v718 = vlaneseq
    %v719 = vshrl.u32 %v718, 7
    %v720 = vsub.s32 %v717, %v719
    %v721 = vrot.slane %v64, %v720
    %v723 = vunpack.c.l.s4 1983009808
    %v724 = vunpack.c.0.s8 %v723
    %v725 = vlaneseq
    %v726 = vshrl.u32 %v725, 7
    %v727 = vsub.s32 %v724, %v726
    %v728 = vrot.slane %v714, %v727
    %v729 = vcombine.high %v721, %v721
    %v730 = vcombine.high %v728, %v728
    %v731 = vcombine.high %v65, %v65
    %v733 = vunpack.c.l.s4 1983009808
    %v734 = vunpack.c.0.s8 %v733
    %v735 = vlaneseq
    %v736 = vshrl.u32 %v735, 7
    %v737 = vsub.s32 %v734, %v736
    %v738 = vrot.slane %v65, %v737
    %v740 = vunpack.c.l.s4 1983009808
    %v741 = vunpack.c.0.s8 %v740
    %v742 = vlaneseq
    %v743 = vshrl.u32 %v742, 7
    %v744 = vsub.s32 %v741, %v743
    %v745 = vrot.slane %v731, %v744
    %v746 = vcombine.high %v738, %v738
    %v747 = vcombine.high %v745, %v745
    %v748 = vcombine.high %v66, %v66
    %v750 = vunpack.c.l.s4 1983009808
    %v751 = vunpack.c.0.s8 %v750
    %v752 = vlaneseq
    %v753 = vshrl.u32 %v752, 7
    %v754 = vsub.s32 %v751, %v753
    %v755 = vrot.slane %v66, %v754
    %v757 = vunpack.c.l.s4 1983009808
    %v758 = vunpack.c.0.s8 %v757
    %v759 = vlaneseq
    %v760 = vshrl.u32 %v759, 7
    %v761 = vsub.s32 %v758, %v760
    %v762 = vrot.slane %v748, %v761
    %v763 = vcombine.high %v755, %v755
    %v764 = vcombine.high %v762, %v762
    %v765 = vcombine.high %v67, %v67
    %v767 = vunpack.c.l.s4 1983009808
    %v768 = vunpack.c.0.s8 %v767
    %v769 = vlaneseq
    %v770 = vshrl.u32 %v769, 7
    %v771 = vsub.s32 %v768, %v770
    %v772 = vrot.slane %v67, %v771
    %v774 = vunpack.c.l.s4 1983009808
    %v775 = vunpack.c.0.s8 %v774
    %v776 = vlaneseq
    %v777 = vshrl.u32 %v776, 7
    %v778 = vsub.s32 %v775, %v777
    %v779 = vrot.slane %v765, %v778
    %v780 = vcombine.high %v772, %v772
    %v781 = vcombine.high %v779, %v779
    %v782 = vcombine.high %v68, %v68
    %v784 = vunpack.c.l.s4 1983009808
    %v785 = vunpack.c.0.s8 %v784
    %v786 = vlaneseq
    %v787 = vshrl.u32 %v786, 7
    %v788 = vsub.s32 %v785, %v787
    %v789 = vrot.slane %v68, %v788
    %v791 = vunpack.c.l.s4 1983009808
    %v792 = vunpack.c.0.s8 %v791
    %v793 = vlaneseq
    %v794 = vshrl.u32 %v793, 7
    %v795 = vsub.s32 %v792, %v794
    %v796 = vrot.slane %v782, %v795
    %v797 = vcombine.high %v789, %v789
    %v798 = vcombine.high %v796, %v796
    %819 = vmatprep.subr.mxu0 %v70
    %820 = vmatpush1.msra.mxu0 %v69
    %821 = vmatprep.subr.mxu0 %v72
    %822 = vmatpush1.msra.mxu0 %v71
    %823 = vmatprep.subr.mxu0 %v74
    %824 = vmatpush1.msra.mxu0 %v73
    %825 = vmatprep.subr.mxu0 %v76
    %826 = vmatpush1.msra.mxu0 %v75
    %827 = vmatprep.subr.mxu0 %v78
    %828 = vmatpush1.msra.mxu0 %v77
    %829 = vmatprep.subr.mxu0 %v80
    %830 = vmatpush1.msra.mxu0 %v79
    %831 = vmatprep.subr.mxu0 %v82
    %832 = vmatpush1.msra.mxu0 %v81
    %833 = vmatprep.subr.mxu0 %v84
    %834 = vmatpush1.msra.mxu0 %v83
    %835 = vmatprep.subr.mxu0 %v86
    %836 = vmatpush1.msra.mxu0 %v85
    %837 = vmatprep.subr.mxu0 %v88
    %838 = vmatpush1.msra.mxu0 %v87
    %839 = vmatprep.subr.mxu0 %v90
    %840 = vmatpush1.msra.mxu0 %v89
    %841 = vmatprep.subr.mxu0 %v92
    %842 = vmatpush1.msra.mxu0 %v91
    %843 = vmatprep.subr.mxu0 %v94
    %844 = vmatpush1.msra.mxu0 %v93
    %845 = vmatprep.subr.mxu0 %v96
    %846 = vmatpush1.msra.mxu0 %v95
    %847 = vmatprep.subr.mxu0 %v98
    %848 = vmatpush1.msra.mxu0 %v97
    %849 = vmatprep.subr.mxu0 %v100
    %850 = vmatpush1.msra.mxu0 %v99
    %851 = vmatprep.subr.mxu0 %v102
    %852 = vmatpush1.msra.mxu0 %v101
    %853 = vmatprep.subr.mxu0 %v104
    %854 = vmatpush1.msra.mxu0 %v103
    %855 = vmatprep.subr.mxu0 %v106
    %856 = vmatpush1.msra.mxu0 %v105
    %857 = vmatprep.subr.mxu0 %v108
    %858 = vmatpush1.msra.mxu0 %v107
    %859 = vmatprep.subr.mxu0 %v110
    %860 = vmatpush1.msra.mxu0 %v109
    %861 = vmatprep.subr.mxu0 %v112
    %862 = vmatpush1.msra.mxu0 %v111
    %863 = vmatprep.subr.mxu0 %v114
    %864 = vmatpush1.msra.mxu0 %v113
    %865 = vmatprep.subr.mxu0 %v116
    %866 = vmatpush1.msra.mxu0 %v115
    %867 = vmatprep.subr.mxu0 %v118
    %868 = vmatpush1.msra.mxu0 %v117
    %869 = vmatprep.subr.mxu0 %v120
    %870 = vmatpush1.msra.mxu0 %v119
    %871 = vmatprep.subr.mxu0 %v122
    %872 = vmatpush1.msra.mxu0 %v121
    %873 = vmatprep.subr.mxu0 %v124
    %874 = vmatpush1.msra.mxu0 %v123
    %875 = vmatprep.subr.mxu0 %v126
    %876 = vmatpush1.msra.mxu0 %v125
    %877 = vmatprep.subr.mxu0 %v128
    %878 = vmatpush1.msra.mxu0 %v127
    %879 = vmatprep.subr.mxu0 %v130
    %880 = vmatpush1.msra.mxu0 %v129
    %881 = vmatprep.subr.mxu0 %v132
    %882 = vmatpush1.msra.mxu0 %v131
    %883 = vmatprep.mubr.f32.mxu0 %v729
    %884 = vmatmul.mubr.f32.gmra.mrb[0].mxu0 %v721
    %v885 = vpop.f32.mrb[0].mxu0
    %v886 = vadd.f32 0.0, %v885
    %v887 = vpop.f32.mrb[0].mxu0
    %v888 = vadd.f32 0.0, %v887
    %889 = vdwg.mxu0
    %890 = vmatprep.subr.mxu0 %v134
    %891 = vmatpush1.msra.mxu0 %v133
    %892 = vmatprep.subr.mxu0 %v136
    %893 = vmatpush1.msra.mxu0 %v135
    %894 = vmatprep.subr.mxu0 %v138
    %895 = vmatpush1.msra.mxu0 %v137
    %896 = vmatprep.subr.mxu0 %v140
    %897 = vmatpush1.msra.mxu0 %v139
    %898 = vmatprep.subr.mxu0 %v142
    %899 = vmatpush1.msra.mxu0 %v141
    %900 = vmatprep.subr.mxu0 %v144
    %901 = vmatpush1.msra.mxu0 %v143
    %902 = vmatprep.subr.mxu0 %v146
    %903 = vmatpush1.msra.mxu0 %v145
    %904 = vmatprep.subr.mxu0 %v148
    %905 = vmatpush1.msra.mxu0 %v147
    %906 = vmatprep.subr.mxu0 %v150
    %907 = vmatpush1.msra.mxu0 %v149
    %908 = vmatprep.subr.mxu0 %v152
    %909 = vmatpush1.msra.mxu0 %v151
    %910 = vmatprep.subr.mxu0 %v154
    %911 = vmatpush1.msra.mxu0 %v153
    %912 = vmatprep.subr.mxu0 %v156
    %913 = vmatpush1.msra.mxu0 %v155
    %914 = vmatprep.subr.mxu0 %v158
    %915 = vmatpush1.msra.mxu0 %v157
    %916 = vmatprep.subr.mxu0 %v160
    %917 = vmatpush1.msra.mxu0 %v159
    %918 = vmatprep.subr.mxu0 %v162
    %919 = vmatpush1.msra.mxu0 %v161
    %920 = vmatprep.subr.mxu0 %v164
    %921 = vmatpush1.msra.mxu0 %v163
    %922 = vmatprep.subr.mxu0 %v166
    %923 = vmatpush1.msra.mxu0 %v165
    %924 = vmatprep.subr.mxu0 %v168
    %925 = vmatpush1.msra.mxu0 %v167
    %926 = vmatprep.subr.mxu0 %v170
    %927 = vmatpush1.msra.mxu0 %v169
    %928 = vmatprep.subr.mxu0 %v172
    %929 = vmatpush1.msra.mxu0 %v171
    %930 = vmatprep.subr.mxu0 %v174
    %931 = vmatpush1.msra.mxu0 %v173
    %932 = vmatprep.subr.mxu0 %v176
    %933 = vmatpush1.msra.mxu0 %v175
    %934 = vmatprep.subr.mxu0 %v178
    %935 = vmatpush1.msra.mxu0 %v177
    %936 = vmatprep.subr.mxu0 %v180
    %937 = vmatpush1.msra.mxu0 %v179
    %938 = vmatprep.subr.mxu0 %v182
    %939 = vmatpush1.msra.mxu0 %v181
    %940 = vmatprep.subr.mxu0 %v184
    %941 = vmatpush1.msra.mxu0 %v183
    %942 = vmatprep.subr.mxu0 %v186
    %943 = vmatpush1.msra.mxu0 %v185
    %944 = vmatprep.subr.mxu0 %v188
    %945 = vmatpush1.msra.mxu0 %v187
    %946 = vmatprep.subr.mxu0 %v190
    %947 = vmatpush1.msra.mxu0 %v189
    %948 = vmatprep.subr.mxu0 %v192
    %949 = vmatpush1.msra.mxu0 %v191
    %950 = vmatprep.subr.mxu0 %v194
    %951 = vmatpush1.msra.mxu0 %v193
    %952 = vmatprep.subr.mxu0 %v196
    %953 = vmatpush1.msra.mxu0 %v195
    %954 = vmatprep.mubr.f32.mxu0 %v730
    %955 = vmatmul.mubr.f32.gmra.mrb[0].mxu0 %v728
    %v956 = vpop.f32.mrb[0].mxu0
    %v957 = vadd.f32 %v886, %v956
    %v958 = vpop.f32.mrb[0].mxu0
    %v959 = vadd.f32 %v888, %v958
    %960 = vdwg.mxu0
    %961 = vmatprep.subr.mxu0 %v198
    %962 = vmatpush1.msra.mxu0 %v197
    %963 = vmatprep.subr.mxu0 %v200
    %964 = vmatpush1.msra.mxu0 %v199
    %965 = vmatprep.subr.mxu0 %v202
    %966 = vmatpush1.msra.mxu0 %v201
    %967 = vmatprep.subr.mxu0 %v204
    %968 = vmatpush1.msra.mxu0 %v203
    %969 = vmatprep.subr.mxu0 %v206
    %970 = vmatpush1.msra.mxu0 %v205
    %971 = vmatprep.subr.mxu0 %v208
    %972 = vmatpush1.msra.mxu0 %v207
    %973 = vmatprep.subr.mxu0 %v210
    %974 = vmatpush1.msra.mxu0 %v209
    %975 = vmatprep.subr.mxu0 %v212
    %976 = vmatpush1.msra.mxu0 %v211
    %977 = vmatprep.subr.mxu0 %v214
    %978 = vmatpush1.msra.mxu0 %v213
    %979 = vmatprep.subr.mxu0 %v216
    %980 = vmatpush1.msra.mxu0 %v215
    %981 = vmatprep.subr.mxu0 %v218
    %982 = vmatpush1.msra.mxu0 %v217
    %983 = vmatprep.subr.mxu0 %v220
    %984 = vmatpush1.msra.mxu0 %v219
    %985 = vmatprep.subr.mxu0 %v222
    %986 = vmatpush1.msra.mxu0 %v221
    %987 = vmatprep.subr.mxu0 %v224
    %988 = vmatpush1.msra.mxu0 %v223
    %989 = vmatprep.subr.mxu0 %v226
    %990 = vmatpush1.msra.mxu0 %v225
    %991 = vmatprep.subr.mxu0 %v228
    %992 = vmatpush1.msra.mxu0 %v227
    %993 = vmatprep.subr.mxu0 %v230
    %994 = vmatpush1.msra.mxu0 %v229
    %995 = vmatprep.subr.mxu0 %v232
    %996 = vmatpush1.msra.mxu0 %v231
    %997 = vmatprep.subr.mxu0 %v234
    %998 = vmatpush1.msra.mxu0 %v233
    %999 = vmatprep.subr.mxu0 %v236
    %1000 = vmatpush1.msra.mxu0 %v235
    %1001 = vmatprep.subr.mxu0 %v238
    %1002 = vmatpush1.msra.mxu0 %v237
    %1003 = vmatprep.subr.mxu0 %v240
    %1004 = vmatpush1.msra.mxu0 %v239
    %1005 = vmatprep.subr.mxu0 %v242
    %1006 = vmatpush1.msra.mxu0 %v241
    %1007 = vmatprep.subr.mxu0 %v244
    %1008 = vmatpush1.msra.mxu0 %v243
    %1009 = vmatprep.subr.mxu0 %v246
    %1010 = vmatpush1.msra.mxu0 %v245
    %1011 = vmatprep.subr.mxu0 %v248
    %1012 = vmatpush1.msra.mxu0 %v247
    %1013 = vmatprep.subr.mxu0 %v250
    %1014 = vmatpush1.msra.mxu0 %v249
    %1015 = vmatprep.subr.mxu0 %v252
    %1016 = vmatpush1.msra.mxu0 %v251
    %1017 = vmatprep.subr.mxu0 %v254
    %1018 = vmatpush1.msra.mxu0 %v253
    %1019 = vmatprep.subr.mxu0 %v256
    %1020 = vmatpush1.msra.mxu0 %v255
    %1021 = vmatprep.subr.mxu0 %v258
    %1022 = vmatpush1.msra.mxu0 %v257
    %1023 = vmatprep.subr.mxu0 %v260
    %1024 = vmatpush1.msra.mxu0 %v259
    %1025 = vmatprep.mubr.f32.mxu0 %v746
    %1026 = vmatmul.mubr.f32.gmra.mrb[0].mxu0 %v738
    %v1027 = vpop.f32.mrb[0].mxu0
    %v1028 = vadd.f32 %v957, %v1027
    %v1029 = vpop.f32.mrb[0].mxu0
    %v1030 = vadd.f32 %v959, %v1029
    %1031 = vdwg.mxu0
    %1032 = vmatprep.subr.mxu0 %v262
    %1033 = vmatpush1.msra.mxu0 %v261
    %1034 = vmatprep.subr.mxu0 %v264
    %1035 = vmatpush1.msra.mxu0 %v263
    %1036 = vmatprep.subr.mxu0 %v266
    %1037 = vmatpush1.msra.mxu0 %v265
    %1038 = vmatprep.subr.mxu0 %v268
    %1039 = vmatpush1.msra.mxu0 %v267
    %1040 = vmatprep.subr.mxu0 %v270
    %1041 = vmatpush1.msra.mxu0 %v269
    %1042 = vmatprep.subr.mxu0 %v272
    %1043 = vmatpush1.msra.mxu0 %v271
    %1044 = vmatprep.subr.mxu0 %v274
    %1045 = vmatpush1.msra.mxu0 %v273
    %1046 = vmatprep.subr.mxu0 %v276
    %1047 = vmatpush1.msra.mxu0 %v275
    %1048 = vmatprep.subr.mxu0 %v278
    %1049 = vmatpush1.msra.mxu0 %v277
    %1050 = vmatprep.subr.mxu0 %v280
    %1051 = vmatpush1.msra.mxu0 %v279
    %1052 = vmatprep.subr.mxu0 %v282
    %1053 = vmatpush1.msra.mxu0 %v281
    %1054 = vmatprep.subr.mxu0 %v284
    %1055 = vmatpush1.msra.mxu0 %v283
    %1056 = vmatprep.subr.mxu0 %v286
    %1057 = vmatpush1.msra.mxu0 %v285
    %1058 = vmatprep.subr.mxu0 %v288
    %1059 = vmatpush1.msra.mxu0 %v287
    %1060 = vmatprep.subr.mxu0 %v290
    %1061 = vmatpush1.msra.mxu0 %v289
    %1062 = vmatprep.subr.mxu0 %v292
    %1063 = vmatpush1.msra.mxu0 %v291
    %1064 = vmatprep.subr.mxu0 %v294
    %1065 = vmatpush1.msra.mxu0 %v293
    %1066 = vmatprep.subr.mxu0 %v296
    %1067 = vmatpush1.msra.mxu0 %v295
    %1068 = vmatprep.subr.mxu0 %v298
    %1069 = vmatpush1.msra.mxu0 %v297
    %1070 = vmatprep.subr.mxu0 %v300
    %1071 = vmatpush1.msra.mxu0 %v299
    %1072 = vmatprep.subr.mxu0 %v302
    %1073 = vmatpush1.msra.mxu0 %v301
    %1074 = vmatprep.subr.mxu0 %v304
    %1075 = vmatpush1.msra.mxu0 %v303
    %1076 = vmatprep.subr.mxu0 %v306
    %1077 = vmatpush1.msra.mxu0 %v305
    %1078 = vmatprep.subr.mxu0 %v308
    %1079 = vmatpush1.msra.mxu0 %v307
    %1080 = vmatprep.subr.mxu0 %v310
    %1081 = vmatpush1.msra.mxu0 %v309
    %1082 = vmatprep.subr.mxu0 %v312
    %1083 = vmatpush1.msra.mxu0 %v311
    %1084 = vmatprep.subr.mxu0 %v314
    %1085 = vmatpush1.msra.mxu0 %v313
    %1086 = vmatprep.subr.mxu0 %v316
    %1087 = vmatpush1.msra.mxu0 %v315
    %1088 = vmatprep.subr.mxu0 %v318
    %1089 = vmatpush1.msra.mxu0 %v317
    %1090 = vmatprep.subr.mxu0 %v320
    %1091 = vmatpush1.msra.mxu0 %v319
    %1092 = vmatprep.subr.mxu0 %v322
    %1093 = vmatpush1.msra.mxu0 %v321
    %1094 = vmatprep.subr.mxu0 %v324
    %1095 = vmatpush1.msra.mxu0 %v323
    %1096 = vmatprep.mubr.f32.mxu0 %v747
    %1097 = vmatmul.mubr.f32.gmra.mrb[0].mxu0 %v745
    %v1098 = vpop.f32.mrb[0].mxu0
    %v1099 = vadd.f32 %v1028, %v1098
    %v1100 = vpop.f32.mrb[0].mxu0
    %v1101 = vadd.f32 %v1030, %v1100
    %1102 = vdwg.mxu0
    %1103 = vmatprep.subr.mxu0 %v326
    %1104 = vmatpush1.msra.mxu0 %v325
    %1105 = vmatprep.subr.mxu0 %v328
    %1106 = vmatpush1.msra.mxu0 %v327
    %1107 = vmatprep.subr.mxu0 %v330
    %1108 = vmatpush1.msra.mxu0 %v329
    %1109 = vmatprep.subr.mxu0 %v332
    %1110 = vmatpush1.msra.mxu0 %v331
    %1111 = vmatprep.subr.mxu0 %v334
    %1112 = vmatpush1.msra.mxu0 %v333
    %1113 = vmatprep.subr.mxu0 %v336
    %1114 = vmatpush1.msra.mxu0 %v335
    %1115 = vmatprep.subr.mxu0 %v338
    %1116 = vmatpush1.msra.mxu0 %v337
    %1117 = vmatprep.subr.mxu0 %v340
    %1118 = vmatpush1.msra.mxu0 %v339
    %1119 = vmatprep.subr.mxu0 %v342
    %1120 = vmatpush1.msra.mxu0 %v341
    %1121 = vmatprep.subr.mxu0 %v344
    %1122 = vmatpush1.msra.mxu0 %v343
    %1123 = vmatprep.subr.mxu0 %v346
    %1124 = vmatpush1.msra.mxu0 %v345
    %1125 = vmatprep.subr.mxu0 %v348
    %1126 = vmatpush1.msra.mxu0 %v347
    %1127 = vmatprep.subr.mxu0 %v350
    %1128 = vmatpush1.msra.mxu0 %v349
    %1129 = vmatprep.subr.mxu0 %v352
    %1130 = vmatpush1.msra.mxu0 %v351
    %1131 = vmatprep.subr.mxu0 %v354
    %1132 = vmatpush1.msra.mxu0 %v353
    %1133 = vmatprep.subr.mxu0 %v356
    %1134 = vmatpush1.msra.mxu0 %v355
    %1135 = vmatprep.subr.mxu0 %v358
    %1136 = vmatpush1.msra.mxu0 %v357
    %1137 = vmatprep.subr.mxu0 %v360
    %1138 = vmatpush1.msra.mxu0 %v359
    %1139 = vmatprep.subr.mxu0 %v362
    %1140 = vmatpush1.msra.mxu0 %v361
    %1141 = vmatprep.subr.mxu0 %v364
    %1142 = vmatpush1.msra.mxu0 %v363
    %1143 = vmatprep.subr.mxu0 %v366
    %1144 = vmatpush1.msra.mxu0 %v365
    %1145 = vmatprep.subr.mxu0 %v368
    %1146 = vmatpush1.msra.mxu0 %v367
    %1147 = vmatprep.subr.mxu0 %v370
    %1148 = vmatpush1.msra.mxu0 %v369
    %1149 = vmatprep.subr.mxu0 %v372
    %1150 = vmatpush1.msra.mxu0 %v371
    %1151 = vmatprep.subr.mxu0 %v374
    %1152 = vmatpush1.msra.mxu0 %v373
    %1153 = vmatprep.subr.mxu0 %v376
    %1154 = vmatpush1.msra.mxu0 %v375
    %1155 = vmatprep.subr.mxu0 %v378
    %1156 = vmatpush1.msra.mxu0 %v377
    %1157 = vmatprep.subr.mxu0 %v380
    %1158 = vmatpush1.msra.mxu0 %v379
    %1159 = vmatprep.subr.mxu0 %v382
    %1160 = vmatpush1.msra.mxu0 %v381
    %1161 = vmatprep.subr.mxu0 %v384
    %1162 = vmatpush1.msra.mxu0 %v383
    %1163 = vmatprep.subr.mxu0 %v386
    %1164 = vmatpush1.msra.mxu0 %v385
    %1165 = vmatprep.subr.mxu0 %v388
    %1166 = vmatpush1.msra.mxu0 %v387
    %1167 = vmatprep.mubr.f32.mxu0 %v763
    %1168 = vmatmul.mubr.f32.gmra.mrb[0].mxu0 %v755
    %v1169 = vpop.f32.mrb[0].mxu0
    %v1170 = vadd.f32 %v1099, %v1169
    %v1171 = vpop.f32.mrb[0].mxu0
    %v1172 = vadd.f32 %v1101, %v1171
    %1173 = vdwg.mxu0
    %1174 = vmatprep.subr.mxu0 %v390
    %1175 = vmatpush1.msra.mxu0 %v389
    %1176 = vmatprep.subr.mxu0 %v392
    %1177 = vmatpush1.msra.mxu0 %v391
    %1178 = vmatprep.subr.mxu0 %v394
    %1179 = vmatpush1.msra.mxu0 %v393
    %1180 = vmatprep.subr.mxu0 %v396
    %1181 = vmatpush1.msra.mxu0 %v395
    %1182 = vmatprep.subr.mxu0 %v398
    %1183 = vmatpush1.msra.mxu0 %v397
    %1184 = vmatprep.subr.mxu0 %v400
    %1185 = vmatpush1.msra.mxu0 %v399
    %1186 = vmatprep.subr.mxu0 %v402
    %1187 = vmatpush1.msra.mxu0 %v401
    %1188 = vmatprep.subr.mxu0 %v404
    %1189 = vmatpush1.msra.mxu0 %v403
    %1190 = vmatprep.subr.mxu0 %v406
    %1191 = vmatpush1.msra.mxu0 %v405
    %1192 = vmatprep.subr.mxu0 %v408
    %1193 = vmatpush1.msra.mxu0 %v407
    %1194 = vmatprep.subr.mxu0 %v410
    %1195 = vmatpush1.msra.mxu0 %v409
    %1196 = vmatprep.subr.mxu0 %v412
    %1197 = vmatpush1.msra.mxu0 %v411
    %1198 = vmatprep.subr.mxu0 %v414
    %1199 = vmatpush1.msra.mxu0 %v413
    %1200 = vmatprep.subr.mxu0 %v416
    %1201 = vmatpush1.msra.mxu0 %v415
    %1202 = vmatprep.subr.mxu0 %v418
    %1203 = vmatpush1.msra.mxu0 %v417
    %1204 = vmatprep.subr.mxu0 %v420
    %1205 = vmatpush1.msra.mxu0 %v419
    %1206 = vmatprep.subr.mxu0 %v422
    %1207 = vmatpush1.msra.mxu0 %v421
    %1208 = vmatprep.subr.mxu0 %v424
    %1209 = vmatpush1.msra.mxu0 %v423
    %1210 = vmatprep.subr.mxu0 %v426
    %1211 = vmatpush1.msra.mxu0 %v425
    %1212 = vmatprep.subr.mxu0 %v428
    %1213 = vmatpush1.msra.mxu0 %v427
    %1214 = vmatprep.subr.mxu0 %v430
    %1215 = vmatpush1.msra.mxu0 %v429
    %1216 = vmatprep.subr.mxu0 %v432
    %1217 = vmatpush1.msra.mxu0 %v431
    %1218 = vmatprep.subr.mxu0 %v434
    %1219 = vmatpush1.msra.mxu0 %v433
    %1220 = vmatprep.subr.mxu0 %v436
    %1221 = vmatpush1.msra.mxu0 %v435
    %1222 = vmatprep.subr.mxu0 %v438
    %1223 = vmatpush1.msra.mxu0 %v437
    %1224 = vmatprep.subr.mxu0 %v440
    %1225 = vmatpush1.msra.mxu0 %v439
    %1226 = vmatprep.subr.mxu0 %v442
    %1227 = vmatpush1.msra.mxu0 %v441
    %1228 = vmatprep.subr.mxu0 %v444
    %1229 = vmatpush1.msra.mxu0 %v443
    %1230 = vmatprep.subr.mxu0 %v446
    %1231 = vmatpush1.msra.mxu0 %v445
    %1232 = vmatprep.subr.mxu0 %v448
    %1233 = vmatpush1.msra.mxu0 %v447
    %1234 = vmatprep.subr.mxu0 %v450
    %1235 = vmatpush1.msra.mxu0 %v449
    %1236 = vmatprep.subr.mxu0 %v452
    %1237 = vmatpush1.msra.mxu0 %v451
    %1238 = vmatprep.mubr.f32.mxu0 %v764
    %1239 = vmatmul.mubr.f32.gmra.mrb[0].mxu0 %v762
    %v1240 = vpop.f32.mrb[0].mxu0
    %v1241 = vadd.f32 %v1170, %v1240
    %v1242 = vpop.f32.mrb[0].mxu0
    %v1243 = vadd.f32 %v1172, %v1242
    %1244 = vdwg.mxu0
    %1245 = vmatprep.subr.mxu0 %v454
    %1246 = vmatpush1.msra.mxu0 %v453
    %1247 = vmatprep.subr.mxu0 %v456
    %1248 = vmatpush1.msra.mxu0 %v455
    %1249 = vmatprep.subr.mxu0 %v458
    %1250 = vmatpush1.msra.mxu0 %v457
    %1251 = vmatprep.subr.mxu0 %v460
    %1252 = vmatpush1.msra.mxu0 %v459
    %1253 = vmatprep.subr.mxu0 %v462
    %1254 = vmatpush1.msra.mxu0 %v461
    %1255 = vmatprep.subr.mxu0 %v464
    %1256 = vmatpush1.msra.mxu0 %v463
    %1257 = vmatprep.subr.mxu0 %v466
    %1258 = vmatpush1.msra.mxu0 %v465
    %1259 = vmatprep.subr.mxu0 %v468
    %1260 = vmatpush1.msra.mxu0 %v467
    %1261 = vmatprep.subr.mxu0 %v470
    %1262 = vmatpush1.msra.mxu0 %v469
    %1263 = vmatprep.subr.mxu0 %v472
    %1264 = vmatpush1.msra.mxu0 %v471
    %1265 = vmatprep.subr.mxu0 %v474
    %1266 = vmatpush1.msra.mxu0 %v473
    %1267 = vmatprep.subr.mxu0 %v476
    %1268 = vmatpush1.msra.mxu0 %v475
    %1269 = vmatprep.subr.mxu0 %v478
    %1270 = vmatpush1.msra.mxu0 %v477
    %1271 = vmatprep.subr.mxu0 %v480
    %1272 = vmatpush1.msra.mxu0 %v479
    %1273 = vmatprep.subr.mxu0 %v482
    %1274 = vmatpush1.msra.mxu0 %v481
    %1275 = vmatprep.subr.mxu0 %v484
    %1276 = vmatpush1.msra.mxu0 %v483
    %1277 = vmatprep.subr.mxu0 %v486
    %1278 = vmatpush1.msra.mxu0 %v485
    %1279 = vmatprep.subr.mxu0 %v488
    %1280 = vmatpush1.msra.mxu0 %v487
    %1281 = vmatprep.subr.mxu0 %v490
    %1282 = vmatpush1.msra.mxu0 %v489
    %1283 = vmatprep.subr.mxu0 %v492
    %1284 = vmatpush1.msra.mxu0 %v491
    %1285 = vmatprep.subr.mxu0 %v494
    %1286 = vmatpush1.msra.mxu0 %v493
    %1287 = vmatprep.subr.mxu0 %v496
    %1288 = vmatpush1.msra.mxu0 %v495
    %1289 = vmatprep.subr.mxu0 %v498
    %1290 = vmatpush1.msra.mxu0 %v497
    %1291 = vmatprep.subr.mxu0 %v500
    %1292 = vmatpush1.msra.mxu0 %v499
    %1293 = vmatprep.subr.mxu0 %v502
    %1294 = vmatpush1.msra.mxu0 %v501
    %1295 = vmatprep.subr.mxu0 %v504
    %1296 = vmatpush1.msra.mxu0 %v503
    %1297 = vmatprep.subr.mxu0 %v506
    %1298 = vmatpush1.msra.mxu0 %v505
    %1299 = vmatprep.subr.mxu0 %v508
    %1300 = vmatpush1.msra.mxu0 %v507
    %1301 = vmatprep.subr.mxu0 %v510
    %1302 = vmatpush1.msra.mxu0 %v509
    %1303 = vmatprep.subr.mxu0 %v512
    %1304 = vmatpush1.msra.mxu0 %v511
    %1305 = vmatprep.subr.mxu0 %v514
    %1306 = vmatpush1.msra.mxu0 %v513
    %1307 = vmatprep.subr.mxu0 %v516
    %1308 = vmatpush1.msra.mxu0 %v515
    %1309 = vmatprep.mubr.f32.mxu0 %v780
    %1310 = vmatmul.mubr.f32.gmra.mrb[0].mxu0 %v772
    %v1311 = vpop.f32.mrb[0].mxu0
    %v1312 = vadd.f32 %v1241, %v1311
    %v1313 = vpop.f32.mrb[0].mxu0
    %v1314 = vadd.f32 %v1243, %v1313
    %1315 = vdwg.mxu0
    %1316 = vmatprep.subr.mxu0 %v518
    %1317 = vmatpush1.msra.mxu0 %v517
    %1318 = vmatprep.subr.mxu0 %v520
    %1319 = vmatpush1.msra.mxu0 %v519
    %1320 = vmatprep.subr.mxu0 %v522
    %1321 = vmatpush1.msra.mxu0 %v521
    %1322 = vmatprep.subr.mxu0 %v524
    %1323 = vmatpush1.msra.mxu0 %v523
    %1324 = vmatprep.subr.mxu0 %v526
    %1325 = vmatpush1.msra.mxu0 %v525
    %1326 = vmatprep.subr.mxu0 %v528
    %1327 = vmatpush1.msra.mxu0 %v527
    %1328 = vmatprep.subr.mxu0 %v530
    %1329 = vmatpush1.msra.mxu0 %v529
    %1330 = vmatprep.subr.mxu0 %v532
    %1331 = vmatpush1.msra.mxu0 %v531
    %1332 = vmatprep.subr.mxu0 %v534
    %1333 = vmatpush1.msra.mxu0 %v533
    %1334 = vmatprep.subr.mxu0 %v536
    %1335 = vmatpush1.msra.mxu0 %v535
    %1336 = vmatprep.subr.mxu0 %v538
    %1337 = vmatpush1.msra.mxu0 %v537
    %1338 = vmatprep.subr.mxu0 %v540
    %1339 = vmatpush1.msra.mxu0 %v539
    %1340 = vmatprep.subr.mxu0 %v542
    %1341 = vmatpush1.msra.mxu0 %v541
    %1342 = vmatprep.subr.mxu0 %v544
    %1343 = vmatpush1.msra.mxu0 %v543
    %1344 = vmatprep.subr.mxu0 %v546
    %1345 = vmatpush1.msra.mxu0 %v545
    %1346 = vmatprep.subr.mxu0 %v548
    %1347 = vmatpush1.msra.mxu0 %v547
    %1348 = vmatprep.subr.mxu0 %v550
    %1349 = vmatpush1.msra.mxu0 %v549
    %1350 = vmatprep.subr.mxu0 %v552
    %1351 = vmatpush1.msra.mxu0 %v551
    %1352 = vmatprep.subr.mxu0 %v554
    %1353 = vmatpush1.msra.mxu0 %v553
    %1354 = vmatprep.subr.mxu0 %v556
    %1355 = vmatpush1.msra.mxu0 %v555
    %1356 = vmatprep.subr.mxu0 %v558
    %1357 = vmatpush1.msra.mxu0 %v557
    %1358 = vmatprep.subr.mxu0 %v560
    %1359 = vmatpush1.msra.mxu0 %v559
    %1360 = vmatprep.subr.mxu0 %v562
    %1361 = vmatpush1.msra.mxu0 %v561
    %1362 = vmatprep.subr.mxu0 %v564
    %1363 = vmatpush1.msra.mxu0 %v563
    %1364 = vmatprep.subr.mxu0 %v566
    %1365 = vmatpush1.msra.mxu0 %v565
    %1366 = vmatprep.subr.mxu0 %v568
    %1367 = vmatpush1.msra.mxu0 %v567
    %1368 = vmatprep.subr.mxu0 %v570
    %1369 = vmatpush1.msra.mxu0 %v569
    %1370 = vmatprep.subr.mxu0 %v572
    %1371 = vmatpush1.msra.mxu0 %v571
    %1372 = vmatprep.subr.mxu0 %v574
    %1373 = vmatpush1.msra.mxu0 %v573
    %1374 = vmatprep.subr.mxu0 %v576
    %1375 = vmatpush1.msra.mxu0 %v575
    %1376 = vmatprep.subr.mxu0 %v578
    %1377 = vmatpush1.msra.mxu0 %v577
    %1378 = vmatprep.subr.mxu0 %v580
    %1379 = vmatpush1.msra.mxu0 %v579
    %1380 = vmatprep.mubr.f32.mxu0 %v781
    %1381 = vmatmul.mubr.f32.gmra.mrb[0].mxu0 %v779
    %v1382 = vpop.f32.mrb[0].mxu0
    %v1383 = vadd.f32 %v1312, %v1382
    %v1384 = vpop.f32.mrb[0].mxu0
    %v1385 = vadd.f32 %v1314, %v1384
    %1386 = vdwg.mxu0
    %1387 = vmatprep.subr.mxu0 %v582
    %1388 = vmatpush1.msra.mxu0 %v581
    %1389 = vmatprep.subr.mxu0 %v584
    %1390 = vmatpush1.msra.mxu0 %v583
    %1391 = vmatprep.subr.mxu0 %v586
    %1392 = vmatpush1.msra.mxu0 %v585
    %1393 = vmatprep.subr.mxu0 %v588
    %1394 = vmatpush1.msra.mxu0 %v587
    %1395 = vmatprep.subr.mxu0 %v590
    %1396 = vmatpush1.msra.mxu0 %v589
    %1397 = vmatprep.subr.mxu0 %v592
    %1398 = vmatpush1.msra.mxu0 %v591
    %1399 = vmatprep.subr.mxu0 %v594
    %1400 = vmatpush1.msra.mxu0 %v593
    %1401 = vmatprep.subr.mxu0 %v596
    %1402 = vmatpush1.msra.mxu0 %v595
    %1403 = vmatprep.subr.mxu0 %v598
    %1404 = vmatpush1.msra.mxu0 %v597
    %1405 = vmatprep.subr.mxu0 %v600
    %1406 = vmatpush1.msra.mxu0 %v599
    %1407 = vmatprep.subr.mxu0 %v602
    %1408 = vmatpush1.msra.mxu0 %v601
    %1409 = vmatprep.subr.mxu0 %v604
    %1410 = vmatpush1.msra.mxu0 %v603
    %1411 = vmatprep.subr.mxu0 %v606
    %1412 = vmatpush1.msra.mxu0 %v605
    %1413 = vmatprep.subr.mxu0 %v608
    %1414 = vmatpush1.msra.mxu0 %v607
    %1415 = vmatprep.subr.mxu0 %v610
    %1416 = vmatpush1.msra.mxu0 %v609
    %1417 = vmatprep.subr.mxu0 %v612
    %1418 = vmatpush1.msra.mxu0 %v611
    %1419 = vmatprep.subr.mxu0 %v614
    %1420 = vmatpush1.msra.mxu0 %v613
    %1421 = vmatprep.subr.mxu0 %v616
    %1422 = vmatpush1.msra.mxu0 %v615
    %1423 = vmatprep.subr.mxu0 %v618
    %1424 = vmatpush1.msra.mxu0 %v617
    %1425 = vmatprep.subr.mxu0 %v620
    %1426 = vmatpush1.msra.mxu0 %v619
    %1427 = vmatprep.subr.mxu0 %v622
    %1428 = vmatpush1.msra.mxu0 %v621
    %1429 = vmatprep.subr.mxu0 %v624
    %1430 = vmatpush1.msra.mxu0 %v623
    %1431 = vmatprep.subr.mxu0 %v626
    %1432 = vmatpush1.msra.mxu0 %v625
    %1433 = vmatprep.subr.mxu0 %v628
    %1434 = vmatpush1.msra.mxu0 %v627
    %1435 = vmatprep.subr.mxu0 %v630
    %1436 = vmatpush1.msra.mxu0 %v629
    %1437 = vmatprep.subr.mxu0 %v632
    %1438 = vmatpush1.msra.mxu0 %v631
    %1439 = vmatprep.subr.mxu0 %v634
    %1440 = vmatpush1.msra.mxu0 %v633
    %1441 = vmatprep.subr.mxu0 %v636
    %1442 = vmatpush1.msra.mxu0 %v635
    %1443 = vmatprep.subr.mxu0 %v638
    %1444 = vmatpush1.msra.mxu0 %v637
    %1445 = vmatprep.subr.mxu0 %v640
    %1446 = vmatpush1.msra.mxu0 %v639
    %1447 = vmatprep.subr.mxu0 %v642
    %1448 = vmatpush1.msra.mxu0 %v641
    %1449 = vmatprep.subr.mxu0 %v644
    %1450 = vmatpush1.msra.mxu0 %v643
    %1451 = vmatprep.mubr.f32.mxu0 %v797
    %1452 = vmatmul.mubr.f32.gmra.mrb[0].mxu0 %v789
    %v1453 = vpop.f32.mrb[0].mxu0
    %v1454 = vadd.f32 %v1383, %v1453
    %v1455 = vpop.f32.mrb[0].mxu0
    %v1456 = vadd.f32 %v1385, %v1455
    %1457 = vdwg.mxu0
    %1458 = vmatprep.subr.mxu0 %v646
    %1459 = vmatpush1.msra.mxu0 %v645
    %1460 = vmatprep.subr.mxu0 %v648
    %1461 = vmatpush1.msra.mxu0 %v647
    %1462 = vmatprep.subr.mxu0 %v650
    %1463 = vmatpush1.msra.mxu0 %v649
    %1464 = vmatprep.subr.mxu0 %v652
    %1465 = vmatpush1.msra.mxu0 %v651
    %1466 = vmatprep.subr.mxu0 %v654
    %1467 = vmatpush1.msra.mxu0 %v653
    %1468 = vmatprep.subr.mxu0 %v656
    %1469 = vmatpush1.msra.mxu0 %v655
    %1470 = vmatprep.subr.mxu0 %v658
    %1471 = vmatpush1.msra.mxu0 %v657
    %1472 = vmatprep.subr.mxu0 %v660
    %1473 = vmatpush1.msra.mxu0 %v659
    %1474 = vmatprep.subr.mxu0 %v662
    %1475 = vmatpush1.msra.mxu0 %v661
    %1476 = vmatprep.subr.mxu0 %v664
    %1477 = vmatpush1.msra.mxu0 %v663
    %1478 = vmatprep.subr.mxu0 %v666
    %1479 = vmatpush1.msra.mxu0 %v665
    %1480 = vmatprep.subr.mxu0 %v668
    %1481 = vmatpush1.msra.mxu0 %v667
    %1482 = vmatprep.subr.mxu0 %v670
    %1483 = vmatpush1.msra.mxu0 %v669
    %1484 = vmatprep.subr.mxu0 %v672
    %1485 = vmatpush1.msra.mxu0 %v671
    %1486 = vmatprep.subr.mxu0 %v674
    %1487 = vmatpush1.msra.mxu0 %v673
    %1488 = vmatprep.subr.mxu0 %v676
    %1489 = vmatpush1.msra.mxu0 %v675
    %1490 = vmatprep.subr.mxu0 %v678
    %1491 = vmatpush1.msra.mxu0 %v677
    %1492 = vmatprep.subr.mxu0 %v680
    %1493 = vmatpush1.msra.mxu0 %v679
    %1494 = vmatprep.subr.mxu0 %v682
    %1495 = vmatpush1.msra.mxu0 %v681
    %1496 = vmatprep.subr.mxu0 %v684
    %1497 = vmatpush1.msra.mxu0 %v683
    %1498 = vmatprep.subr.mxu0 %v686
    %1499 = vmatpush1.msra.mxu0 %v685
    %1500 = vmatprep.subr.mxu0 %v688
    %1501 = vmatpush1.msra.mxu0 %v687
    %1502 = vmatprep.subr.mxu0 %v690
    %1503 = vmatpush1.msra.mxu0 %v689
    %1504 = vmatprep.subr.mxu0 %v692
    %1505 = vmatpush1.msra.mxu0 %v691
    %1506 = vmatprep.subr.mxu0 %v694
    %1507 = vmatpush1.msra.mxu0 %v693
    %1508 = vmatprep.subr.mxu0 %v696
    %1509 = vmatpush1.msra.mxu0 %v695
    %1510 = vmatprep.subr.mxu0 %v698
    %1511 = vmatpush1.msra.mxu0 %v697
    %1512 = vmatprep.subr.mxu0 %v700
    %1513 = vmatpush1.msra.mxu0 %v699
    %1514 = vmatprep.subr.mxu0 %v702
    %1515 = vmatpush1.msra.mxu0 %v701
    %1516 = vmatprep.subr.mxu0 %v704
    %1517 = vmatpush1.msra.mxu0 %v703
    %1518 = vmatprep.subr.mxu0 %v706
    %1519 = vmatpush1.msra.mxu0 %v705
    %1520 = vmatprep.subr.mxu0 %v708
    %1521 = vmatpush1.msra.mxu0 %v707
    %1522 = vmatprep.mubr.f32.mxu0 %v798
    %1523 = vmatmul.mubr.f32.gmra.mrb[0].mxu0 %v796
    %v1524 = vpop.f32.mrb[0].mxu0
    %v1525 = vadd.f32 %v1454, %v1524
    %v1526 = vpop.f32.mrb[0].mxu0
    %v1527 = vadd.f32 %v1456, %v1526
    %1528 = vdwg.mxu0
    %v1531 = vcombine.low %v1525, %v1527
    %v1533 = vunpack.c.l.s4 1983009808
    %v1534 = vunpack.c.0.s8 %v1533
    %v1535 = vlaneseq
    %v1536 = vshrl.u32 %v1535, 7
    %v1537 = vsub.s32 %v1534, %v1536
    %v1538 = vrot.slane %v1531, %v1537
    %v1540 = vadd.f32 %v63, %v1538
    %1541 = vst [vmem:[#allocation2] sm:$0xf] %v1540
    // Predicated region
    $region38: #{cnn_forward.3} parent=1 // pred_check
      %p1542 = pneg %p58
    $region39: #{cnn_forward.3} parent=1 // pred_check_branch
      %1544 = sbr.rel (%p1542) target = $region41
    $region40: #{cnn_forward.3} parent=1 // pred_region
      %v1545 = vld [vmem:[#allocation2] sm:$0xf]
      %v1546 = vld [vmem:[#allocation6] sm:$0x3]
      %v1548 = vlaneseq
      %v1549 = vshrl.u32 %v1548, 7
      %v1550 = vsub.s32 0, %v1549
      %v1551 = vrot.slane %v1546, %v1550
      %v1552 = vlaneseq
      %v1553 = vshrl.u32 %v1552, 7
      %v1554 = vsub.s32 1, %v1553
      %v1555 = vrot.slane %v1546, %v1554
      %v1556 = vcombine.low %v1551, %v1555
      %v1558 = vunpack.c.l.s4 1983009808
      %v1559 = vunpack.c.0.s8 %v1558
      %v1560 = vlaneseq
      %v1561 = vshrl.u32 %v1560, 7
      %v1562 = vsub.s32 %v1559, %v1561
      %v1563 = vrot.slane %v1556, %v1562
      %v1565 = vadd.f32 %v1545, %v1563
      %v1566 = vmax.f32 %v1565, 0.0
      %v1567 = vld [vmem:[%s3] sm:$0xff]
      %v1568 = vld [vmem:[%s3 + $0x8] sm:$0xff]
      %v1569 = vld [vmem:[%s3 + $0x10] sm:$0xff]
      %v1570 = vld [vmem:[%s3 + $0x18] sm:$0xff]
      %v1571 = vld [vmem:[%s3 + $0x20] sm:$0xff]
      %v1572 = vld [vmem:[%s3 + $0x28] sm:$0xff]
      %v1573 = vld [vmem:[%s3 + $0x30] sm:$0xff]
      %v1574 = vld [vmem:[%s3 + $0x38] sm:$0xff]
      %v1575 = vld [vmem:[%s3 + $0x40] sm:$0xff]
      %v1576 = vld [vmem:[%s3 + $0x48] sm:$0xff]
      %v1577 = vld [vmem:[%s3 + $0x50] sm:$0xff]
      %v1578 = vld [vmem:[%s3 + $0x58] sm:$0xff]
      %v1579 = vld [vmem:[%s3 + $0x60] sm:$0xff]
      %v1580 = vld [vmem:[%s3 + $0x68] sm:$0xff]
      %v1581 = vld [vmem:[%s3 + $0x70] sm:$0xff]
      %v1582 = vld [vmem:[%s3 + $0x78] sm:$0xff]
      %v1583 = vld [vmem:[%s3 + $0x80] sm:$0xff]
      %v1584 = vld [vmem:[%s3 + $0x88] sm:$0xff]
      %v1585 = vld [vmem:[%s3 + $0x90] sm:$0xff]
      %v1586 = vld [vmem:[%s3 + $0x98] sm:$0xff]
      %v1587 = vld [vmem:[%s3 + $0xa0] sm:$0xff]
      %v1588 = vld [vmem:[%s3 + $0xa8] sm:$0xff]
      %v1589 = vld [vmem:[%s3 + $0xb0] sm:$0xff]
      %v1590 = vld [vmem:[%s3 + $0xb8] sm:$0xff]
      %v1591 = vld [vmem:[%s3 + $0xc0] sm:$0xff]
      %v1592 = vld [vmem:[%s3 + $0xc8] sm:$0xff]
      %v1593 = vld [vmem:[%s3 + $0xd0] sm:$0xff]
      %v1594 = vld [vmem:[%s3 + $0xd8] sm:$0xff]
      %v1595 = vld [vmem:[%s3 + $0xe0] sm:$0xff]
      %v1596 = vld [vmem:[%s3 + $0xe8] sm:$0xff]
      %v1597 = vld [vmem:[%s3 + $0xf0] sm:$0xff]
      %v1598 = vld [vmem:[%s3 + $0xf8] sm:$0xff]
      %v1599 = vld [vmem:[#allocation8] sm:$0x1]
      %v1601 = vlaneseq
      %v1602 = vshrl.u32 %v1601, 7
      %v1603 = vsub.s32 0, %v1602
      %v1604 = vrot.slane %v1599, %v1603
      %v1608 = vunpack.c.l.s4 1983009808
      %v1609 = vunpack.c.0.s8 %v1608
      %v1610 = vlaneseq
      %v1611 = vshrl.u32 %v1610, 7
      %v1612 = vsub.s32 %v1609, %v1611
      %v1613 = vrot.slane %v1566, %v1612
      %v1614 = vcombine.high %v1613, %v1613
      %1617 = vmatprep.subr.mxu0 0.0
      %1618 = vmatpush1.msra.mxu0 %v1567
      %1619 = vmatprep.subr.mxu0 0.0
      %1620 = vmatpush1.msra.mxu0 %v1568
      %1621 = vmatprep.subr.mxu0 0.0
      %1622 = vmatpush1.msra.mxu0 %v1569
      %1623 = vmatprep.subr.mxu0 0.0
      %1624 = vmatpush1.msra.mxu0 %v1570
      %1625 = vmatprep.subr.mxu0 0.0
      %1626 = vmatpush1.msra.mxu0 %v1571
      %1627 = vmatprep.subr.mxu0 0.0
      %1628 = vmatpush1.msra.mxu0 %v1572
      %1629 = vmatprep.subr.mxu0 0.0
      %1630 = vmatpush1.msra.mxu0 %v1573
      %1631 = vmatprep.subr.mxu0 0.0
      %1632 = vmatpush1.msra.mxu0 %v1574
      %1633 = vmatprep.subr.mxu0 0.0
      %1634 = vmatpush1.msra.mxu0 %v1575
      %1635 = vmatprep.subr.mxu0 0.0
      %1636 = vmatpush1.msra.mxu0 %v1576
      %1637 = vmatprep.subr.mxu0 0.0
      %1638 = vmatpush1.msra.mxu0 %v1577
      %1639 = vmatprep.subr.mxu0 0.0
      %1640 = vmatpush1.msra.mxu0 %v1578
      %1641 = vmatprep.subr.mxu0 0.0
      %1642 = vmatpush1.msra.mxu0 %v1579
      %1643 = vmatprep.subr.mxu0 0.0
      %1644 = vmatpush1.msra.mxu0 %v1580
      %1645 = vmatprep.subr.mxu0 0.0
      %1646 = vmatpush1.msra.mxu0 %v1581
      %1647 = vmatprep.subr.mxu0 0.0
      %1648 = vmatpush1.msra.mxu0 %v1582
      %1649 = vmatprep.subr.mxu0 0.0
      %1650 = vmatpush1.msra.mxu0 %v1583
      %1651 = vmatprep.subr.mxu0 0.0
      %1652 = vmatpush1.msra.mxu0 %v1584
      %1653 = vmatprep.subr.mxu0 0.0
      %1654 = vmatpush1.msra.mxu0 %v1585
      %1655 = vmatprep.subr.mxu0 0.0
      %1656 = vmatpush1.msra.mxu0 %v1586
      %1657 = vmatprep.subr.mxu0 0.0
      %1658 = vmatpush1.msra.mxu0 %v1587
      %1659 = vmatprep.subr.mxu0 0.0
      %1660 = vmatpush1.msra.mxu0 %v1588
      %1661 = vmatprep.subr.mxu0 0.0
      %1662 = vmatpush1.msra.mxu0 %v1589
      %1663 = vmatprep.subr.mxu0 0.0
      %1664 = vmatpush1.msra.mxu0 %v1590
      %1665 = vmatprep.subr.mxu0 0.0
      %1666 = vmatpush1.msra.mxu0 %v1591
      %1667 = vmatprep.subr.mxu0 0.0
      %1668 = vmatpush1.msra.mxu0 %v1592
      %1669 = vmatprep.subr.mxu0 0.0
      %1670 = vmatpush1.msra.mxu0 %v1593
      %1671 = vmatprep.subr.mxu0 0.0
      %1672 = vmatpush1.msra.mxu0 %v1594
      %1673 = vmatprep.subr.mxu0 0.0
      %1674 = vmatpush1.msra.mxu0 %v1595
      %1675 = vmatprep.subr.mxu0 0.0
      %1676 = vmatpush1.msra.mxu0 %v1596
      %1677 = vmatprep.subr.mxu0 0.0
      %1678 = vmatpush1.msra.mxu0 %v1597
      %1679 = vmatprep.subr.mxu0 0.0
      %1680 = vmatpush1.msra.mxu0 %v1598
      %1681 = vmatprep.mubr.f32.mxu0 %v1614
      %1682 = vmatmul.mubr.f32.gmra.mrb[0].mxu0 %v1613
      %v1683 = vpop.f32.mrb[0].mxu0
      %v1684 = vadd.f32 %v1604, %v1683
      %v1685 = vpop.f32.mrb[0].mxu0
      %1686 = vdwg.mxu0
      %vm1687 = vcmask 238592
      %1688 = vst.msk [vmem:[#allocation9] sm:$0x3] %vm1687, %v1684
    $region41: #{cnn_forward.3} parent=1 // pred_fallthru
      _
    // Predicated region
    $region42: #{cnn_forward.3} parent=1 // pred_check
      _
    $region43: #{cnn_forward.3} parent=1 // pred_check_branch
      %1690 = sbr.rel (0) target = $region45
    $region44: #{cnn_forward.3} parent=1 // pred_region
      %s1692 = ssub.s32 32, 32
      %1693 = vsyncadd [#allocation5], %s1692
      %s1695 = sshll.u32 [#allocation9], 4
      %s1696 = int_to_ptr.vmem [resolvable:$true] %s1695
      %1698 = dma.vmem_to_hbm [thread:$0]  %s1696, 32, %s5, [#allocation5]
    $region45: #{cnn_forward.3} parent=1 // pred_fallthru
      _
    // Predicated region
    $region46: #{cnn_forward.3} parent=1 // pred_check
      _
    $region47: #{cnn_forward.3} parent=1 // pred_check_branch
      %1700 = sbr.rel (0) target = $region49
    $region48: #{cnn_forward.3} parent=1 // pred_region
      %1701 = dma.done [#allocation5], 32
    $region49: #{cnn_forward.3} parent=1 // pred_fallthru
      _
    %1702 = vsyncpa [#allocation4], 1
    %1703 = vsyncpa [#allocation7], 1
    %1704 = vsyncpa [#allocation5], 1

// kernel: cnn_forward.2
$region0: #{cnn_forward.2}
  #allocation0 [shape = 'u32[]', space=smem, size = 0x4, offset = 0x4, fixed_abs, tag = 'smem constant byte address 0x4 - core index']
  #allocation1 [shape = 'u32[144,128]{1,0:T(1,128)}', space=vmem, size = 0x12000, scoped, tag = 'internal scratch']
  #allocation2 [shape = 'f32[1,12,18,16]{3,2,1,0:T(8,128)}', space=vmem, size = 0x24000, scoped, tag = 'scratch operand']
  #allocation3 [shape = 'f32[1,7,10,32]{3,2,1,0:T(8,128)}', space=vmem, size = 0xe000, scoped, tag = 'scratch operand']
  %s0 = inlined_call_operand.vmem [shape: f32[2,12,18,3], index: 0, kind: input, shape index: {}]
  %s1 = inlined_call_operand.vmem [shape: f32[27,16], index: 1, kind: input, shape index: {}]
  %s2 = inlined_call_operand.hbm [shape: f32[1,16], index: 2, kind: input, shape index: {}]
  %s3 = inlined_call_operand.vmem [shape: f32[144,32], index: 3, kind: input, shape index: {}]
  %s4 = inlined_call_operand.hbm [shape: f32[1,32], index: 4, kind: input, shape index: {}]
  %s5 = inlined_call_operand.vmem [shape: f32[288,64], index: 5, kind: input, shape index: {}]
  %s6 = inlined_call_operand.hbm [shape: f32[1,64], index: 6, kind: input, shape index: {}]
  %s7 = inlined_call_operand.vmem [shape: f32[2,40,64], index: 7, kind: output, shape index: {}]
  %s8 = sld [smem:[#allocation0]]
  $region73: #{cnn_forward.2} parent=0
    _
  %s10 = ssub.s32 1, %s8
  %s11 = scalar_select 0, %s10, %s8
  $region1: #{cnn_forward.2} parent=0
    #allocation4 [shape = 'u8[512]{0}', space=vmem, size = 0x400, scoped, tag = 'input window, operand 2, single buffered']
    #allocation5 [shape = 's32[2]{0}', space=sflag, size = 0x8, scoped, tag = 'scoped memory for cnn_forward.2']
    #allocation6 [shape = 'u8[512]{0}', space=vmem, size = 0x400, scoped, tag = 'input window, operand 4, single buffered']
    #allocation7 [shape = 's32[1]{0}', space=sflag, size = 0x4, scoped, tag = 'scoped memory for cnn_forward.2']
    #allocation8 [shape = 'u8[512]{0}', space=vmem, size = 0x400, scoped, tag = 'input window, operand 6, single buffered']
    %12 = vsyncpa [#allocation5], 0
    %13 = vsyncpa [#allocation7], 0
    loop: start=0, step=1, limit=4
    $region2: #{cnn_forward.2} parent=1 // loop_pre_header
      _
    $region3: #{cnn_forward.2} parent=1 // loop_header
      %s15 = sphi 0, %s19
      %p16 = scmp.ge.s32.totalorder %s15, 4
      %s25 = sphi 0, %s27
      %s28 = sphi 0, %s25
      %s29 = sphi 0, %s28
      %s45 = sphi 0, %s29
      %s49 = sphi 0, %s49
      %s51 = sphi 0, %s49
      %s52 = sphi 0, %s51
      %s66 = sphi 0, %s52
      %s70 = sphi 0, %s70
      %s72 = sphi 0, %s70
      %s73 = sphi 0, %s72
      %s87 = sphi 0, %s73
      %s91 = sphi 0, %s91
      %s93 = sphi 0, %s91
      %s94 = sphi 0, %s93
      %s108 = sphi 0, %s94
      %s112 = sphi 0, %s112
      %s114 = sphi 0, %s112
      %s115 = sphi 0, %s114
      %s129 = sphi 0, %s115
      %s133 = sphi 0, %s133
      %s135 = sphi 0, %s133
      %s136 = sphi 0, %s135
      %s150 = sphi 0, %s136
      %s154 = sphi 0, %s154
      %s156 = sphi 0, %s154
      %s157 = sphi 0, %s156
      %s171 = sphi 0, %s157
      %s177 = sphi 0, %s179
      %s180 = sphi 0, %s177
      %s181 = sphi 0, %s180
      %s197 = sphi 0, %s181
    $region4: #{cnn_forward.2} parent=1 // loop_header_branch
      %18 = sbr.rel (%p16) target = $region8
    $region5: #{cnn_forward.2} parent=1 // loop_body
      %s20 = ssub.s32 %s15, 1
      %s21 = ssub.s32 %s15, 2
      %s22 = sadd.s32 %s15, 1
      %s23 = ssub.s32 %s15, %s22
      %p24 = scmp.eq.s32.totalorder %s23, 0
      %s26 = sadd.s32 %s25, 1
      %s27 = scalar_select %p24, %s25, %s26
      %p30 = pneg %p24
      %p31 = scmp.eq.s32.totalorder %s15, 1
      %p32 = por %p30, %p31
      %p33 = scmp.ne.s32.totalorder %s25, %s28
      %p34 = scmp.eq.s32.totalorder %s15, 0
      %p35 = por %p33, %p34
      %p36 = scmp.ne.s32.totalorder %s25, %s28
      %p37 = scmp.eq.s32.totalorder %s20, 1
      %p38 = por %p36, %p37
      %p39 = scmp.ne.s32.totalorder %s28, %s29
      %p40 = scmp.eq.s32.totalorder %s20, 0
      %p41 = por %p39, %p40
      %p42 = scmp.ne.s32.totalorder %s28, %s29
      %p43 = scmp.eq.s32.totalorder %s21, 1
      %p44 = por %p42, %p43
      %p46 = scmp.ne.s32.totalorder %s29, %s45
      %p47 = scmp.eq.s32.totalorder %s21, 0
      %p48 = por %p46, %p47
      %s50 = sadd.s32 %s49, 1
      %p53 = scmp.eq.s32.totalorder %s15, 1
      %p54 = scmp.ne.s32.totalorder %s49, %s51
      %p55 = scmp.eq.s32.totalorder %s15, 0
      %p56 = por %p54, %p55
      %p57 = scmp.ne.s32.totalorder %s49, %s51
      %p58 = scmp.eq.s32.totalorder %s20, 1
      %p59 = por %p57, %p58
      %p60 = scmp.ne.s32.totalorder %s51, %s52
      %p61 = scmp.eq.s32.totalorder %s20, 0
      %p62 = por %p60, %p61
      %p63 = scmp.ne.s32.totalorder %s51, %s52
      %p64 = scmp.eq.s32.totalorder %s21, 1
      %p65 = por %p63, %p64
      %p67 = scmp.ne.s32.totalorder %s52, %s66
      %p68 = scmp.eq.s32.totalorder %s21, 0
      %p69 = por %p67, %p68
      %s71 = sadd.s32 %s70, 1
      %p74 = scmp.eq.s32.totalorder %s15, 1
      %p75 = scmp.ne.s32.totalorder %s70, %s72
      %p76 = scmp.eq.s32.totalorder %s15, 0
      %p77 = por %p75, %p76
      %p78 = scmp.ne.s32.totalorder %s70, %s72
      %p79 = scmp.eq.s32.totalorder %s20, 1
      %p80 = por %p78, %p79
      %p81 = scmp.ne.s32.totalorder %s72, %s73
      %p82 = scmp.eq.s32.totalorder %s20, 0
      %p83 = por %p81, %p82
      %p84 = scmp.ne.s32.totalorder %s72, %s73
      %p85 = scmp.eq.s32.totalorder %s21, 1
      %p86 = por %p84, %p85
      %p88 = scmp.ne.s32.totalorder %s73, %s87
      %p89 = scmp.eq.s32.totalorder %s21, 0
      %p90 = por %p88, %p89
      %s92 = sadd.s32 %s91, 1
      %p95 = scmp.eq.s32.totalorder %s15, 1
      %p96 = scmp.ne.s32.totalorder %s91, %s93
      %p97 = scmp.eq.s32.totalorder %s15, 0
      %p98 = por %p96, %p97
      %p99 = scmp.ne.s32.totalorder %s91, %s93
      %p100 = scmp.eq.s32.totalorder %s20, 1
      %p101 = por %p99, %p100
      %p102 = scmp.ne.s32.totalorder %s93, %s94
      %p103 = scmp.eq.s32.totalorder %s20, 0
      %p104 = por %p102, %p103
      %p105 = scmp.ne.s32.totalorder %s93, %s94
      %p106 = scmp.eq.s32.totalorder %s21, 1
      %p107 = por %p105, %p106
      %p109 = scmp.ne.s32.totalorder %s94, %s108
      %p110 = scmp.eq.s32.totalorder %s21, 0
      %p111 = por %p109, %p110
      %s113 = sadd.s32 %s112, 1
      %p116 = scmp.eq.s32.totalorder %s15, 1
      %p117 = scmp.ne.s32.totalorder %s112, %s114
      %p118 = scmp.eq.s32.totalorder %s15, 0
      %p119 = por %p117, %p118
      %p120 = scmp.ne.s32.totalorder %s112, %s114
      %p121 = scmp.eq.s32.totalorder %s20, 1
      %p122 = por %p120, %p121
      %p123 = scmp.ne.s32.totalorder %s114, %s115
      %p124 = scmp.eq.s32.totalorder %s20, 0
      %p125 = por %p123, %p124
      %p126 = scmp.ne.s32.totalorder %s114, %s115
      %p127 = scmp.eq.s32.totalorder %s21, 1
      %p128 = por %p126, %p127
      %p130 = scmp.ne.s32.totalorder %s115, %s129
      %p131 = scmp.eq.s32.totalorder %s21, 0
      %p132 = por %p130, %p131
      %s134 = sadd.s32 %s133, 1
      %p137 = scmp.eq.s32.totalorder %s15, 1
      %p138 = scmp.ne.s32.totalorder %s133, %s135
      %p139 = scmp.eq.s32.totalorder %s15, 0
      %p140 = por %p138, %p139
      %p141 = scmp.ne.s32.totalorder %s133, %s135
      %p142 = scmp.eq.s32.totalorder %s20, 1
      %p143 = por %p141, %p142
      %p144 = scmp.ne.s32.totalorder %s135, %s136
      %p145 = scmp.eq.s32.totalorder %s20, 0
      %p146 = por %p144, %p145
      %p147 = scmp.ne.s32.totalorder %s135, %s136
      %p148 = scmp.eq.s32.totalorder %s21, 1
      %p149 = por %p147, %p148
      %p151 = scmp.ne.s32.totalorder %s136, %s150
      %p152 = scmp.eq.s32.totalorder %s21, 0
      %p153 = por %p151, %p152
      %s155 = sadd.s32 %s154, 1
      %p158 = scmp.eq.s32.totalorder %s15, 1
      %p159 = scmp.ne.s32.totalorder %s154, %s156
      %p160 = scmp.eq.s32.totalorder %s15, 0
      %p161 = por %p159, %p160
      %p162 = scmp.ne.s32.totalorder %s154, %s156
      %p163 = scmp.eq.s32.totalorder %s20, 1
      %p164 = por %p162, %p163
      %p165 = scmp.ne.s32.totalorder %s156, %s157
      %p166 = scmp.eq.s32.totalorder %s20, 0
      %p167 = por %p165, %p166
      %p168 = scmp.ne.s32.totalorder %s156, %s157
      %p169 = scmp.eq.s32.totalorder %s21, 1
      %p170 = por %p168, %p169
      %p172 = scmp.ne.s32.totalorder %s157, %s171
      %p173 = scmp.eq.s32.totalorder %s21, 0
      %p174 = por %p172, %p173
      %s175 = ssub.s32 %s15, %s22
      %p176 = scmp.eq.s32.totalorder %s175, 0
      %s178 = sadd.s32 %s177, 1
      %s179 = scalar_select %p176, %s177, %s178
      %p182 = pneg %p176
      %p183 = scmp.eq.s32.totalorder %s15, 1
      %p184 = por %p182, %p183
      %p185 = scmp.ne.s32.totalorder %s177, %s180
      %p186 = scmp.eq.s32.totalorder %s15, 0
      %p187 = por %p185, %p186
      %p188 = scmp.ne.s32.totalorder %s177, %s180
      %p189 = scmp.eq.s32.totalorder %s20, 1
      %p190 = por %p188, %p189
      %p191 = scmp.ne.s32.totalorder %s180, %s181
      %p192 = scmp.eq.s32.totalorder %s20, 0
      %p193 = por %p191, %p192
      %p194 = scmp.ne.s32.totalorder %s180, %s181
      %p195 = scmp.eq.s32.totalorder %s21, 1
      %p196 = por %p194, %p195
      %p198 = scmp.ne.s32.totalorder %s181, %s197
      %p199 = scmp.eq.s32.totalorder %s21, 0
      %p200 = por %p198, %p199
      %p201 = scmp.le.s32.totalorder 1, %s15
      %p202 = scmp.lt.s32.totalorder %s15, 3
      %p203 = pnand %p201, %p202
      %p204 = pneg %p203
      // Predicated region
      $region9: #{cnn_forward.2} parent=5 // pred_check
        _
      $region10: #{cnn_forward.2} parent=5 // pred_check_branch
        %206 = sbr.rel (%p203) target = $region12
      $region11: #{cnn_forward.2} parent=5 // pred_region
        %s207 = ssub.s32 %s15, 1
        // Predicated region
        $region13: #{cnn_forward.2} parent=11 // pred_check
          %p208 = pneg %p62
        $region14: #{cnn_forward.2} parent=11 // pred_check_branch
          %210 = sbr.rel (%p208) target = $region16
        $region15: #{cnn_forward.2} parent=11 // pred_region
          _
        $region16: #{cnn_forward.2} parent=11 // pred_fallthru
          _
        // Predicated region
        $region17: #{cnn_forward.2} parent=11 // pred_check
          %p211 = pneg %p83
        $region18: #{cnn_forward.2} parent=11 // pred_check_branch
          %213 = sbr.rel (%p211) target = $region20
        $region19: #{cnn_forward.2} parent=11 // pred_region
          %s215 = ssub.s32 16, 16
          %216 = vsyncadd [#allocation5], %s215
          %s218 = sshll.u32 [#allocation4], 4
          %s219 = int_to_ptr.vmem [resolvable:$true] %s218
          %221 = dma.hbm_to_vmem [thread:$0]  %s2, 16, %s219, [#allocation5]
        $region20: #{cnn_forward.2} parent=11 // pred_fallthru
          _
        // Predicated region
        $region21: #{cnn_forward.2} parent=11 // pred_check
          %p222 = pneg %p104
        $region22: #{cnn_forward.2} parent=11 // pred_check_branch
          %224 = sbr.rel (%p222) target = $region24
        $region23: #{cnn_forward.2} parent=11 // pred_region
          _
        $region24: #{cnn_forward.2} parent=11 // pred_fallthru
          _
        // Predicated region
        $region25: #{cnn_forward.2} parent=11 // pred_check
          %p225 = pneg %p125
        $region26: #{cnn_forward.2} parent=11 // pred_check_branch
          %227 = sbr.rel (%p225) target = $region28
        $region27: #{cnn_forward.2} parent=11 // pred_region
          %s229 = ssub.s32 16, 16
          %230 = vsyncadd [#allocation7], %s229
          %s232 = sshll.u32 [#allocation6], 4
          %s233 = int_to_ptr.vmem [resolvable:$true] %s232
          %235 = dma.hbm_to_vmem [thread:$0]  %s4, 16, %s233, [#allocation7]
        $region28: #{cnn_forward.2} parent=11 // pred_fallthru
          _
        // Predicated region
        $region29: #{cnn_forward.2} parent=11 // pred_check
          %p236 = pneg %p146
        $region30: #{cnn_forward.2} parent=11 // pred_check_branch
          %238 = sbr.rel (%p236) target = $region32
        $region31: #{cnn_forward.2} parent=11 // pred_region
          _
        $region32: #{cnn_forward.2} parent=11 // pred_fallthru
          _
        // Predicated region
        $region33: #{cnn_forward.2} parent=11 // pred_check
          %p239 = pneg %p167
        $region34: #{cnn_forward.2} parent=11 // pred_check_branch
          %241 = sbr.rel (%p239) target = $region36
        $region35: #{cnn_forward.2} parent=11 // pred_region
          %s243 = ssub.s32 16, 16
          %244 = vsyncadd [#allocation7], %s243
          %s246 = sshll.u32 [#allocation8], 4
          %s247 = int_to_ptr.vmem [resolvable:$true] %s246
          %249 = dma.hbm_to_vmem [thread:$0]  %s6, 16, %s247, [#allocation7]
        $region36: #{cnn_forward.2} parent=11 // pred_fallthru
          _
      $region12: #{cnn_forward.2} parent=5 // pred_fallthru
        _
      %p250 = scmp.lt.s32.totalorder %s15, 2
      // Predicated region
      $region37: #{cnn_forward.2} parent=5 // pred_check
        %p251 = pneg %p250
      $region38: #{cnn_forward.2} parent=5 // pred_check_branch
        %253 = sbr.rel (%p251) target = $region40
      $region39: #{cnn_forward.2} parent=5 // pred_region
        // Predicated region
        $region41: #{cnn_forward.2} parent=39 // pred_check
          %p254 = pneg %p35
        $region42: #{cnn_forward.2} parent=39 // pred_check_branch
          %256 = sbr.rel (%p254) target = $region44
        $region43: #{cnn_forward.2} parent=39 // pred_region
          %p257 = scmp.lt.s32.totalorder %s15, 1
          %s258 = scalar_select %p257, %s15, 1
          %s259 = smul.addr %s258, 36
          %s260 = smul.addr %s259, 8
          %s261 = scalar_lea.vmem %s0, %s260
        $region44: #{cnn_forward.2} parent=39 // pred_fallthru
          _
      $region40: #{cnn_forward.2} parent=5 // pred_fallthru
        _
      %p262 = scmp.le.s32.totalorder 1, %s15
      %p263 = scmp.lt.s32.totalorder %s15, 3
      %p264 = pnand %p262, %p263
      %p265 = pneg %p264
      // Predicated region
      $region45: #{cnn_forward.2} parent=5 // pred_check
        _
      $region46: #{cnn_forward.2} parent=5 // pred_check_branch
        %267 = sbr.rel (%p264) target = $region48
      $region47: #{cnn_forward.2} parent=5 // pred_region
        %s268 = ssub.s32 %s15, 1
        // Predicated region
        $region49: #{cnn_forward.2} parent=47 // pred_check
          %p269 = pneg %p83
        $region50: #{cnn_forward.2} parent=47 // pred_check_branch
          %271 = sbr.rel (%p269) target = $region52
        $region51: #{cnn_forward.2} parent=47 // pred_region
          %272 = dma.done [#allocation5], 16
        $region52: #{cnn_forward.2} parent=47 // pred_fallthru
          _
        // Predicated region
        $region53: #{cnn_forward.2} parent=47 // pred_check
          %p273 = pneg %p125
        $region54: #{cnn_forward.2} parent=47 // pred_check_branch
          %275 = sbr.rel (%p273) target = $region56
        $region55: #{cnn_forward.2} parent=47 // pred_region
          %276 = dma.done [#allocation7], 16
        $region56: #{cnn_forward.2} parent=47 // pred_fallthru
          _
        // Predicated region
        $region57: #{cnn_forward.2} parent=47 // pred_check
          %p277 = pneg %p167
        $region58: #{cnn_forward.2} parent=47 // pred_check_branch
          %279 = sbr.rel (%p277) target = $region60
        $region59: #{cnn_forward.2} parent=47 // pred_region
          %280 = dma.done [#allocation7], 16
        $region60: #{cnn_forward.2} parent=47 // pred_fallthru
          _
        %p281 = scmp.lt.s32.totalorder %s20, 1
        %s282 = scalar_select %p281, %s20, 1
        %s283 = smul.addr %s282, 36
        %s284 = smul.addr %s283, 8
        %s285 = scalar_lea.vmem %s0, %s284
        %p286 = pneg %p41
        %p287 = pneg %p38
        %p288 = pneg %p62
        %p289 = pneg %p59
        %p290 = pneg %p83
        %p291 = pneg %p80
        %p292 = pneg %p104
        %p293 = pneg %p101
        %p294 = pneg %p125
        %p295 = pneg %p122
        %p296 = pneg %p146
        %p297 = pneg %p143
        %p298 = pneg %p167
        %p299 = pneg %p164
        %p300 = pneg %p193
        %p301 = pneg %p190
        %p302 = scmp.lt.s32.totalorder %s20, 1
        %s303 = scalar_select %p302, %s20, 1
        %s304 = smul.addr %s303, 5
        %s305 = smul.addr %s304, 8
        %s306 = scalar_lea.vmem %s7, %s305
        %p307 = scmp.lt.s32.totalorder %s20, 1
        %s308 = scalar_select %p307, %s20, 1
        %s309 = smul.addr %s308, 36
        %s310 = smul.addr %s309, 8
        %s311 = scalar_lea.vmem %s0, %s310
        %p312 = scmp.lt.s32.totalorder %s20, 1
        %s313 = scalar_select %p312, %s20, 1
        %s314 = smul.addr %s313, 5
        %s315 = smul.addr %s314, 8
        %s316 = scalar_lea.vmem %s7, %s315
        %v317 = vld [vmem:[%s311] sm:$0xff]
        %v318 = vld [vmem:[%s311 + $0x8] sm:$0xff]
        %v319 = vld [vmem:[%s311 + $0x10] sm:$0x3]
        %v320 = vld [vmem:[%s311 + $0x18] sm:$0xff]
        %v321 = vld [vmem:[%s311 + $0x20] sm:$0xff]
        %v322 = vld [vmem:[%s311 + $0x28] sm:$0x3]
        %v323 = vld [vmem:[%s311 + $0x30] sm:$0xff]
        %v324 = vld [vmem:[%s311 + $0x38] sm:$0xff]
        %v325 = vld [vmem:[%s311 + $0x40] sm:$0x3]
        %v326 = vld [vmem:[%s311 + $0x48] sm:$0xff]
        %v327 = vld [vmem:[%s311 + $0x50] sm:$0xff]
        %v328 = vld [vmem:[%s311 + $0x58] sm:$0x3]
        %v329 = vld [vmem:[%s311 + $0x60] sm:$0xff]
        %v330 = vld [vmem:[%s311 + $0x68] sm:$0xff]
        %v331 = vld [vmem:[%s311 + $0x70] sm:$0x3]
        %v332 = vld [vmem:[%s311 + $0x78] sm:$0xff]
        %v333 = vld [vmem:[%s311 + $0x80] sm:$0xff]
        %v334 = vld [vmem:[%s311 + $0x88] sm:$0x3]
        %v335 = vld [vmem:[%s311 + $0x90] sm:$0xff]
        %v336 = vld [vmem:[%s311 + $0x98] sm:$0xff]
        %v337 = vld [vmem:[%s311 + $0xa0] sm:$0x3]
        %v338 = vld [vmem:[%s311 + $0xa8] sm:$0xff]
        %v339 = vld [vmem:[%s311 + $0xb0] sm:$0xff]
        %v340 = vld [vmem:[%s311 + $0xb8] sm:$0x3]
        %v341 = vld [vmem:[%s311 + $0xc0] sm:$0xff]
        %v342 = vld [vmem:[%s311 + $0xc8] sm:$0xff]
        %v343 = vld [vmem:[%s311 + $0xd0] sm:$0x3]
        %v344 = vld [vmem:[%s311 + $0xd8] sm:$0xff]
        %v345 = vld [vmem:[%s311 + $0xe0] sm:$0xff]
        %v346 = vld [vmem:[%s311 + $0xe8] sm:$0x3]
        %v347 = vld [vmem:[%s311 + $0xf0] sm:$0xff]
        %v348 = vld [vmem:[%s311 + $0xf8] sm:$0xff]
        %v349 = vld [vmem:[%s311 + $0x100] sm:$0x3]
        %v350 = vld [vmem:[%s311 + $0x108] sm:$0xff]
        %v351 = vld [vmem:[%s311 + $0x110] sm:$0xff]
        %v352 = vld [vmem:[%s311 + $0x118] sm:$0x3]
        %vm383 = vcmask 1046528
        %v384 = vrot.slane %v317, 1
        %v385 = vrot.slane %v318, 1
        %v386 = vsel %vm383, %v384, %v385
        %v387 = vrot.slane %v319, 1
        %v388 = vsel %vm383, %v385, %v387
        %v389 = vrot.slane %v320, 1
        %v390 = vrot.slane %v321, 1
        %v391 = vsel %vm383, %v389, %v390
        %v392 = vrot.slane %v322, 1
        %v393 = vsel %vm383, %v390, %v392
        %v394 = vrot.slane %v323, 1
        %v395 = vrot.slane %v324, 1
        %v396 = vsel %vm383, %v394, %v395
        %v397 = vrot.slane %v325, 1
        %v398 = vsel %vm383, %v395, %v397
        %v399 = vrot.slane %v326, 1
        %v400 = vrot.slane %v327, 1
        %v401 = vsel %vm383, %v399, %v400
        %v402 = vrot.slane %v328, 1
        %v403 = vsel %vm383, %v400, %v402
        %v404 = vrot.slane %v329, 1
        %v405 = vrot.slane %v330, 1
        %v406 = vsel %vm383, %v404, %v405
        %v407 = vrot.slane %v331, 1
        %v408 = vsel %vm383, %v405, %v407
        %v409 = vrot.slane %v332, 1
        %v410 = vrot.slane %v333, 1
        %v411 = vsel %vm383, %v409, %v410
        %v412 = vrot.slane %v334, 1
        %v413 = vsel %vm383, %v410, %v412
        %v414 = vrot.slane %v335, 1
        %v415 = vrot.slane %v336, 1
        %v416 = vsel %vm383, %v414, %v415
        %v417 = vrot.slane %v337, 1
        %v418 = vsel %vm383, %v415, %v417
        %v419 = vrot.slane %v338, 1
        %v420 = vrot.slane %v339, 1
        %v421 = vsel %vm383, %v419, %v420
        %v422 = vrot.slane %v340, 1
        %v423 = vsel %vm383, %v420, %v422
        %v424 = vrot.slane %v341, 1
        %v425 = vrot.slane %v342, 1
        %v426 = vsel %vm383, %v424, %v425
        %v427 = vrot.slane %v343, 1
        %v428 = vsel %vm383, %v425, %v427
        %v429 = vrot.slane %v344, 1
        %v430 = vrot.slane %v345, 1
        %v431 = vsel %vm383, %v429, %v430
        %v432 = vrot.slane %v346, 1
        %v433 = vsel %vm383, %v430, %v432
        %434 = vrot.lane.b32.xlu0 %v386, 3
        %v435 = vpop.permute.xlu0 %434
        %436 = vrot.lane.b32.xlu0 %v388, 3
        %v437 = vpop.permute.xlu0 %436
        %438 = vrot.lane.b32.xlu0 %v391, 3
        %v439 = vpop.permute.xlu0 %438
        %440 = vrot.lane.b32.xlu0 %v393, 3
        %v441 = vpop.permute.xlu0 %440
        %442 = vrot.lane.b32.xlu0 %v396, 3
        %v443 = vpop.permute.xlu0 %442
        %444 = vrot.lane.b32.xlu0 %v398, 3
        %v445 = vpop.permute.xlu0 %444
        %446 = vrot.lane.b32.xlu0 %v401, 3
        %v447 = vpop.permute.xlu0 %446
        %448 = vrot.lane.b32.xlu0 %v403, 3
        %v449 = vpop.permute.xlu0 %448
        %450 = vrot.lane.b32.xlu0 %v406, 3
        %v451 = vpop.permute.xlu0 %450
        %452 = vrot.lane.b32.xlu0 %v408, 3
        %v453 = vpop.permute.xlu0 %452
        %454 = vrot.lane.b32.xlu0 %v411, 3
        %v455 = vpop.permute.xlu0 %454
        %456 = vrot.lane.b32.xlu0 %v413, 3
        %v457 = vpop.permute.xlu0 %456
        %458 = vrot.lane.b32.xlu0 %v416, 3
        %v459 = vpop.permute.xlu0 %458
        %460 = vrot.lane.b32.xlu0 %v418, 3
        %v461 = vpop.permute.xlu0 %460
        %462 = vrot.lane.b32.xlu0 %v421, 3
        %v463 = vpop.permute.xlu0 %462
        %464 = vrot.lane.b32.xlu0 %v423, 3
        %v465 = vpop.permute.xlu0 %464
        %466 = vrot.lane.b32.xlu0 %v426, 3
        %v467 = vpop.permute.xlu0 %466
        %468 = vrot.lane.b32.xlu0 %v428, 3
        %v469 = vpop.permute.xlu0 %468
        %470 = vrot.lane.b32.xlu0 %v431, 3
        %v471 = vpop.permute.xlu0 %470
        %472 = vrot.lane.b32.xlu0 %v433, 3
        %v473 = vpop.permute.xlu0 %472
        %vm494 = vcmask 1045504
        %v495 = vrot.slane %v317, 2
        %v496 = vrot.slane %v318, 2
        %v497 = vsel %vm494, %v495, %v496
        %v498 = vrot.slane %v319, 2
        %v499 = vsel %vm494, %v496, %v498
        %v500 = vrot.slane %v320, 2
        %v501 = vrot.slane %v321, 2
        %v502 = vsel %vm494, %v500, %v501
        %v503 = vrot.slane %v322, 2
        %v504 = vsel %vm494, %v501, %v503
        %v505 = vrot.slane %v323, 2
        %v506 = vrot.slane %v324, 2
        %v507 = vsel %vm494, %v505, %v506
        %v508 = vrot.slane %v325, 2
        %v509 = vsel %vm494, %v506, %v508
        %v510 = vrot.slane %v326, 2
        %v511 = vrot.slane %v327, 2
        %v512 = vsel %vm494, %v510, %v511
        %v513 = vrot.slane %v328, 2
        %v514 = vsel %vm494, %v511, %v513
        %v515 = vrot.slane %v329, 2
        %v516 = vrot.slane %v330, 2
        %v517 = vsel %vm494, %v515, %v516
        %v518 = vrot.slane %v331, 2
        %v519 = vsel %vm494, %v516, %v518
        %v520 = vrot.slane %v332, 2
        %v521 = vrot.slane %v333, 2
        %v522 = vsel %vm494, %v520, %v521
        %v523 = vrot.slane %v334, 2
        %v524 = vsel %vm494, %v521, %v523
        %v525 = vrot.slane %v335, 2
        %v526 = vrot.slane %v336, 2
        %v527 = vsel %vm494, %v525, %v526
        %v528 = vrot.slane %v337, 2
        %v529 = vsel %vm494, %v526, %v528
        %v530 = vrot.slane %v338, 2
        %v531 = vrot.slane %v339, 2
        %v532 = vsel %vm494, %v530, %v531
        %v533 = vrot.slane %v340, 2
        %v534 = vsel %vm494, %v531, %v533
        %v535 = vrot.slane %v341, 2
        %v536 = vrot.slane %v342, 2
        %v537 = vsel %vm494, %v535, %v536
        %v538 = vrot.slane %v343, 2
        %v539 = vsel %vm494, %v536, %v538
        %v540 = vrot.slane %v344, 2
        %v541 = vrot.slane %v345, 2
        %v542 = vsel %vm494, %v540, %v541
        %v543 = vrot.slane %v346, 2
        %v544 = vsel %vm494, %v541, %v543
        %545 = vrot.lane.b32.xlu0 %v497, 6
        %v546 = vpop.permute.xlu0 %545
        %547 = vrot.lane.b32.xlu0 %v499, 6
        %v548 = vpop.permute.xlu0 %547
        %549 = vrot.lane.b32.xlu0 %v502, 6
        %v550 = vpop.permute.xlu0 %549
        %551 = vrot.lane.b32.xlu0 %v504, 6
        %v552 = vpop.permute.xlu0 %551
        %553 = vrot.lane.b32.xlu0 %v507, 6
        %v554 = vpop.permute.xlu0 %553
        %555 = vrot.lane.b32.xlu0 %v509, 6
        %v556 = vpop.permute.xlu0 %555
        %557 = vrot.lane.b32.xlu0 %v512, 6
        %v558 = vpop.permute.xlu0 %557
        %559 = vrot.lane.b32.xlu0 %v514, 6
        %v560 = vpop.permute.xlu0 %559
        %561 = vrot.lane.b32.xlu0 %v517, 6
        %v562 = vpop.permute.xlu0 %561
        %563 = vrot.lane.b32.xlu0 %v519, 6
        %v564 = vpop.permute.xlu0 %563
        %565 = vrot.lane.b32.xlu0 %v522, 6
        %v566 = vpop.permute.xlu0 %565
        %567 = vrot.lane.b32.xlu0 %v524, 6
        %v568 = vpop.permute.xlu0 %567
        %569 = vrot.lane.b32.xlu0 %v527, 6
        %v570 = vpop.permute.xlu0 %569
        %571 = vrot.lane.b32.xlu0 %v529, 6
        %v572 = vpop.permute.xlu0 %571
        %573 = vrot.lane.b32.xlu0 %v532, 6
        %v574 = vpop.permute.xlu0 %573
        %575 = vrot.lane.b32.xlu0 %v534, 6
        %v576 = vpop.permute.xlu0 %575
        %577 = vrot.lane.b32.xlu0 %v537, 6
        %v578 = vpop.permute.xlu0 %577
        %579 = vrot.lane.b32.xlu0 %v539, 6
        %v580 = vpop.permute.xlu0 %579
        %581 = vrot.lane.b32.xlu0 %v542, 6
        %v582 = vpop.permute.xlu0 %581
        %583 = vrot.lane.b32.xlu0 %v544, 6
        %v584 = vpop.permute.xlu0 %583
        %607 = vrot.lane.b32.xlu0 %v320, 9
        %v608 = vpop.permute.xlu0 %607
        %609 = vrot.lane.b32.xlu0 %v321, 9
        %v610 = vpop.permute.xlu0 %609
        %611 = vrot.lane.b32.xlu0 %v323, 9
        %v612 = vpop.permute.xlu0 %611
        %613 = vrot.lane.b32.xlu0 %v324, 9
        %v614 = vpop.permute.xlu0 %613
        %615 = vrot.lane.b32.xlu0 %v326, 9
        %v616 = vpop.permute.xlu0 %615
        %617 = vrot.lane.b32.xlu0 %v327, 9
        %v618 = vpop.permute.xlu0 %617
        %619 = vrot.lane.b32.xlu0 %v329, 9
        %v620 = vpop.permute.xlu0 %619
        %621 = vrot.lane.b32.xlu0 %v330, 9
        %v622 = vpop.permute.xlu0 %621
        %623 = vrot.lane.b32.xlu0 %v332, 9
        %v624 = vpop.permute.xlu0 %623
        %625 = vrot.lane.b32.xlu0 %v333, 9
        %v626 = vpop.permute.xlu0 %625
        %627 = vrot.lane.b32.xlu0 %v335, 9
        %v628 = vpop.permute.xlu0 %627
        %629 = vrot.lane.b32.xlu0 %v336, 9
        %v630 = vpop.permute.xlu0 %629
        %631 = vrot.lane.b32.xlu0 %v338, 9
        %v632 = vpop.permute.xlu0 %631
        %633 = vrot.lane.b32.xlu0 %v339, 9
        %v634 = vpop.permute.xlu0 %633
        %635 = vrot.lane.b32.xlu0 %v341, 9
        %v636 = vpop.permute.xlu0 %635
        %637 = vrot.lane.b32.xlu0 %v342, 9
        %v638 = vpop.permute.xlu0 %637
        %639 = vrot.lane.b32.xlu0 %v344, 9
        %v640 = vpop.permute.xlu0 %639
        %641 = vrot.lane.b32.xlu0 %v345, 9
        %v642 = vpop.permute.xlu0 %641
        %643 = vrot.lane.b32.xlu0 %v347, 9
        %v644 = vpop.permute.xlu0 %643
        %645 = vrot.lane.b32.xlu0 %v348, 9
        %v646 = vpop.permute.xlu0 %645
        %v668 = vrot.slane %v347, 1
        %v669 = vrot.slane %v348, 1
        %v670 = vsel %vm383, %v668, %v669
        %v671 = vrot.slane %v349, 1
        %v672 = vsel %vm383, %v669, %v671
        %673 = vrot.lane.b32.xlu0 %v391, 12
        %v674 = vpop.permute.xlu0 %673
        %675 = vrot.lane.b32.xlu0 %v393, 12
        %v676 = vpop.permute.xlu0 %675
        %677 = vrot.lane.b32.xlu0 %v396, 12
        %v678 = vpop.permute.xlu0 %677
        %679 = vrot.lane.b32.xlu0 %v398, 12
        %v680 = vpop.permute.xlu0 %679
        %681 = vrot.lane.b32.xlu0 %v401, 12
        %v682 = vpop.permute.xlu0 %681
        %683 = vrot.lane.b32.xlu0 %v403, 12
        %v684 = vpop.permute.xlu0 %683
        %685 = vrot.lane.b32.xlu0 %v406, 12
        %v686 = vpop.permute.xlu0 %685
        %687 = vrot.lane.b32.xlu0 %v408, 12
        %v688 = vpop.permute.xlu0 %687
        %689 = vrot.lane.b32.xlu0 %v411, 12
        %v690 = vpop.permute.xlu0 %689
        %691 = vrot.lane.b32.xlu0 %v413, 12
        %v692 = vpop.permute.xlu0 %691
        %693 = vrot.lane.b32.xlu0 %v416, 12
        %v694 = vpop.permute.xlu0 %693
        %695 = vrot.lane.b32.xlu0 %v418, 12
        %v696 = vpop.permute.xlu0 %695
        %697 = vrot.lane.b32.xlu0 %v421, 12
        %v698 = vpop.permute.xlu0 %697
        %699 = vrot.lane.b32.xlu0 %v423, 12
        %v700 = vpop.permute.xlu0 %699
        %701 = vrot.lane.b32.xlu0 %v426, 12
        %v702 = vpop.permute.xlu0 %701
        %703 = vrot.lane.b32.xlu0 %v428, 12
        %v704 = vpop.permute.xlu0 %703
        %705 = vrot.lane.b32.xlu0 %v431, 12
        %v706 = vpop.permute.xlu0 %705
        %707 = vrot.lane.b32.xlu0 %v433, 12
        %v708 = vpop.permute.xlu0 %707
        %709 = vrot.lane.b32.xlu0 %v670, 12
        %v710 = vpop.permute.xlu0 %709
        %711 = vrot.lane.b32.xlu0 %v672, 12
        %v712 = vpop.permute.xlu0 %711
        %v733 = vrot.slane %v347, 2
        %v734 = vrot.slane %v348, 2
        %v735 = vsel %vm494, %v733, %v734
        %v736 = vrot.slane %v349, 2
        %v737 = vsel %vm494, %v734, %v736
        %738 = vrot.lane.b32.xlu0 %v502, 15
        %v739 = vpop.permute.xlu0 %738
        %740 = vrot.lane.b32.xlu0 %v504, 15
        %v741 = vpop.permute.xlu0 %740
        %742 = vrot.lane.b32.xlu0 %v507, 15
        %v743 = vpop.permute.xlu0 %742
        %744 = vrot.lane.b32.xlu0 %v509, 15
        %v745 = vpop.permute.xlu0 %744
        %746 = vrot.lane.b32.xlu0 %v512, 15
        %v747 = vpop.permute.xlu0 %746
        %748 = vrot.lane.b32.xlu0 %v514, 15
        %v749 = vpop.permute.xlu0 %748
        %750 = vrot.lane.b32.xlu0 %v517, 15
        %v751 = vpop.permute.xlu0 %750
        %752 = vrot.lane.b32.xlu0 %v519, 15
        %v753 = vpop.permute.xlu0 %752
        %754 = vrot.lane.b32.xlu0 %v522, 15
        %v755 = vpop.permute.xlu0 %754
        %756 = vrot.lane.b32.xlu0 %v524, 15
        %v757 = vpop.permute.xlu0 %756
        %758 = vrot.lane.b32.xlu0 %v527, 15
        %v759 = vpop.permute.xlu0 %758
        %760 = vrot.lane.b32.xlu0 %v529, 15
        %v761 = vpop.permute.xlu0 %760
        %762 = vrot.lane.b32.xlu0 %v532, 15
        %v763 = vpop.permute.xlu0 %762
        %764 = vrot.lane.b32.xlu0 %v534, 15
        %v765 = vpop.permute.xlu0 %764
        %766 = vrot.lane.b32.xlu0 %v537, 15
        %v767 = vpop.permute.xlu0 %766
        %768 = vrot.lane.b32.xlu0 %v539, 15
        %v769 = vpop.permute.xlu0 %768
        %770 = vrot.lane.b32.xlu0 %v542, 15
        %v771 = vpop.permute.xlu0 %770
        %772 = vrot.lane.b32.xlu0 %v544, 15
        %v773 = vpop.permute.xlu0 %772
        %774 = vrot.lane.b32.xlu0 %v735, 15
        %v775 = vpop.permute.xlu0 %774
        %776 = vrot.lane.b32.xlu0 %v737, 15
        %v777 = vpop.permute.xlu0 %776
        %800 = vrot.lane.b32.xlu0 %v323, 18
        %v801 = vpop.permute.xlu0 %800
        %802 = vrot.lane.b32.xlu0 %v324, 18
        %v803 = vpop.permute.xlu0 %802
        %804 = vrot.lane.b32.xlu0 %v326, 18
        %v805 = vpop.permute.xlu0 %804
        %806 = vrot.lane.b32.xlu0 %v327, 18
        %v807 = vpop.permute.xlu0 %806
        %808 = vrot.lane.b32.xlu0 %v329, 18
        %v809 = vpop.permute.xlu0 %808
        %810 = vrot.lane.b32.xlu0 %v330, 18
        %v811 = vpop.permute.xlu0 %810
        %812 = vrot.lane.b32.xlu0 %v332, 18
        %v813 = vpop.permute.xlu0 %812
        %814 = vrot.lane.b32.xlu0 %v333, 18
        %v815 = vpop.permute.xlu0 %814
        %816 = vrot.lane.b32.xlu0 %v335, 18
        %v817 = vpop.permute.xlu0 %816
        %818 = vrot.lane.b32.xlu0 %v336, 18
        %v819 = vpop.permute.xlu0 %818
        %820 = vrot.lane.b32.xlu0 %v338, 18
        %v821 = vpop.permute.xlu0 %820
        %822 = vrot.lane.b32.xlu0 %v339, 18
        %v823 = vpop.permute.xlu0 %822
        %824 = vrot.lane.b32.xlu0 %v341, 18
        %v825 = vpop.permute.xlu0 %824
        %826 = vrot.lane.b32.xlu0 %v342, 18
        %v827 = vpop.permute.xlu0 %826
        %828 = vrot.lane.b32.xlu0 %v344, 18
        %v829 = vpop.permute.xlu0 %828
        %830 = vrot.lane.b32.xlu0 %v345, 18
        %v831 = vpop.permute.xlu0 %830
        %832 = vrot.lane.b32.xlu0 %v347, 18
        %v833 = vpop.permute.xlu0 %832
        %834 = vrot.lane.b32.xlu0 %v348, 18
        %v835 = vpop.permute.xlu0 %834
        %836 = vrot.lane.b32.xlu0 %v350, 18
        %v837 = vpop.permute.xlu0 %836
        %838 = vrot.lane.b32.xlu0 %v351, 18
        %v839 = vpop.permute.xlu0 %838
        %v861 = vrot.slane %v350, 1
        %v862 = vrot.slane %v351, 1
        %v863 = vsel %vm383, %v861, %v862
        %v864 = vrot.slane %v352, 1
        %v865 = vsel %vm383, %v862, %v864
        %866 = vrot.lane.b32.xlu0 %v396, 21
        %v867 = vpop.permute.xlu0 %866
        %868 = vrot.lane.b32.xlu0 %v398, 21
        %v869 = vpop.permute.xlu0 %868
        %870 = vrot.lane.b32.xlu0 %v401, 21
        %v871 = vpop.permute.xlu0 %870
        %872 = vrot.lane.b32.xlu0 %v403, 21
        %v873 = vpop.permute.xlu0 %872
        %874 = vrot.lane.b32.xlu0 %v406, 21
        %v875 = vpop.permute.xlu0 %874
        %876 = vrot.lane.b32.xlu0 %v408, 21
        %v877 = vpop.permute.xlu0 %876
        %878 = vrot.lane.b32.xlu0 %v411, 21
        %v879 = vpop.permute.xlu0 %878
        %880 = vrot.lane.b32.xlu0 %v413, 21
        %v881 = vpop.permute.xlu0 %880
        %882 = vrot.lane.b32.xlu0 %v416, 21
        %v883 = vpop.permute.xlu0 %882
        %884 = vrot.lane.b32.xlu0 %v418, 21
        %v885 = vpop.permute.xlu0 %884
        %886 = vrot.lane.b32.xlu0 %v421, 21
        %v887 = vpop.permute.xlu0 %886
        %888 = vrot.lane.b32.xlu0 %v423, 21
        %v889 = vpop.permute.xlu0 %888
        %890 = vrot.lane.b32.xlu0 %v426, 21
        %v891 = vpop.permute.xlu0 %890
        %892 = vrot.lane.b32.xlu0 %v428, 21
        %v893 = vpop.permute.xlu0 %892
        %894 = vrot.lane.b32.xlu0 %v431, 21
        %v895 = vpop.permute.xlu0 %894
        %896 = vrot.lane.b32.xlu0 %v433, 21
        %v897 = vpop.permute.xlu0 %896
        %898 = vrot.lane.b32.xlu0 %v670, 21
        %v899 = vpop.permute.xlu0 %898
        %900 = vrot.lane.b32.xlu0 %v672, 21
        %v901 = vpop.permute.xlu0 %900
        %902 = vrot.lane.b32.xlu0 %v863, 21
        %v903 = vpop.permute.xlu0 %902
        %904 = vrot.lane.b32.xlu0 %v865, 21
        %v905 = vpop.permute.xlu0 %904
        %v926 = vrot.slane %v350, 2
        %v927 = vrot.slane %v351, 2
        %v928 = vsel %vm494, %v926, %v927
        %v929 = vrot.slane %v352, 2
        %v930 = vsel %vm494, %v927, %v929
        %931 = vrot.lane.b32.xlu0 %v507, 24
        %v932 = vpop.permute.xlu0 %931
        %933 = vrot.lane.b32.xlu0 %v509, 24
        %v934 = vpop.permute.xlu0 %933
        %935 = vrot.lane.b32.xlu0 %v512, 24
        %v936 = vpop.permute.xlu0 %935
        %937 = vrot.lane.b32.xlu0 %v514, 24
        %v938 = vpop.permute.xlu0 %937
        %939 = vrot.lane.b32.xlu0 %v517, 24
        %v940 = vpop.permute.xlu0 %939
        %941 = vrot.lane.b32.xlu0 %v519, 24
        %v942 = vpop.permute.xlu0 %941
        %943 = vrot.lane.b32.xlu0 %v522, 24
        %v944 = vpop.permute.xlu0 %943
        %945 = vrot.lane.b32.xlu0 %v524, 24
        %v946 = vpop.permute.xlu0 %945
        %947 = vrot.lane.b32.xlu0 %v527, 24
        %v948 = vpop.permute.xlu0 %947
        %949 = vrot.lane.b32.xlu0 %v529, 24
        %v950 = vpop.permute.xlu0 %949
        %951 = vrot.lane.b32.xlu0 %v532, 24
        %v952 = vpop.permute.xlu0 %951
        %953 = vrot.lane.b32.xlu0 %v534, 24
        %v954 = vpop.permute.xlu0 %953
        %955 = vrot.lane.b32.xlu0 %v537, 24
        %v956 = vpop.permute.xlu0 %955
        %957 = vrot.lane.b32.xlu0 %v539, 24
        %v958 = vpop.permute.xlu0 %957
        %959 = vrot.lane.b32.xlu0 %v542, 24
        %v960 = vpop.permute.xlu0 %959
        %961 = vrot.lane.b32.xlu0 %v544, 24
        %v962 = vpop.permute.xlu0 %961
        %963 = vrot.lane.b32.xlu0 %v735, 24
        %v964 = vpop.permute.xlu0 %963
        %965 = vrot.lane.b32.xlu0 %v737, 24
        %v966 = vpop.permute.xlu0 %965
        %967 = vrot.lane.b32.xlu0 %v928, 24
        %v968 = vpop.permute.xlu0 %967
        %969 = vrot.lane.b32.xlu0 %v930, 24
        %v970 = vpop.permute.xlu0 %969
        %vm991 = vcmask 23552
        %v992 = vsel %vm991, %v317, %v435
        %v993 = vsel %vm991, %v318, %v437
        %v994 = vsel %vm991, %v320, %v439
        %v995 = vsel %vm991, %v321, %v441
        %v996 = vsel %vm991, %v323, %v443
        %v997 = vsel %vm991, %v324, %v445
        %v998 = vsel %vm991, %v326, %v447
        %v999 = vsel %vm991, %v327, %v449
        %v1000 = vsel %vm991, %v329, %v451
        %v1001 = vsel %vm991, %v330, %v453
        %v1002 = vsel %vm991, %v332, %v455
        %v1003 = vsel %vm991, %v333, %v457
        %v1004 = vsel %vm991, %v335, %v459
        %v1005 = vsel %vm991, %v336, %v461
        %v1006 = vsel %vm991, %v338, %v463
        %v1007 = vsel %vm991, %v339, %v465
        %v1008 = vsel %vm991, %v341, %v467
        %v1009 = vsel %vm991, %v342, %v469
        %v1010 = vsel %vm991, %v344, %v471
        %v1011 = vsel %vm991, %v345, %v473
        %vm1012 = vcmask 48128
        %v1013 = vsel %vm1012, %v992, %v546
        %v1014 = vsel %vm1012, %v993, %v548
        %v1015 = vsel %vm1012, %v994, %v550
        %v1016 = vsel %vm1012, %v995, %v552
        %v1017 = vsel %vm1012, %v996, %v554
        %v1018 = vsel %vm1012, %v997, %v556
        %v1019 = vsel %vm1012, %v998, %v558
        %v1020 = vsel %vm1012, %v999, %v560
        %v1021 = vsel %vm1012, %v1000, %v562
        %v1022 = vsel %vm1012, %v1001, %v564
        %v1023 = vsel %vm1012, %v1002, %v566
        %v1024 = vsel %vm1012, %v1003, %v568
        %v1025 = vsel %vm1012, %v1004, %v570
        %v1026 = vsel %vm1012, %v1005, %v572
        %v1027 = vsel %vm1012, %v1006, %v574
        %v1028 = vsel %vm1012, %v1007, %v576
        %v1029 = vsel %vm1012, %v1008, %v578
        %v1030 = vsel %vm1012, %v1009, %v580
        %v1031 = vsel %vm1012, %v1010, %v582
        %v1032 = vsel %vm1012, %v1011, %v584
        %vm1033 = vcmask 72704
        %v1034 = vsel %vm1033, %v1013, %v608
        %v1035 = vsel %vm1033, %v1014, %v610
        %v1036 = vsel %vm1033, %v1015, %v612
        %v1037 = vsel %vm1033, %v1016, %v614
        %v1038 = vsel %vm1033, %v1017, %v616
        %v1039 = vsel %vm1033, %v1018, %v618
        %v1040 = vsel %vm1033, %v1019, %v620
        %v1041 = vsel %vm1033, %v1020, %v622
        %v1042 = vsel %vm1033, %v1021, %v624
        %v1043 = vsel %vm1033, %v1022, %v626
        %v1044 = vsel %vm1033, %v1023, %v628
        %v1045 = vsel %vm1033, %v1024, %v630
        %v1046 = vsel %vm1033, %v1025, %v632
        %v1047 = vsel %vm1033, %v1026, %v634
        %v1048 = vsel %vm1033, %v1027, %v636
        %v1049 = vsel %vm1033, %v1028, %v638
        %v1050 = vsel %vm1033, %v1029, %v640
        %v1051 = vsel %vm1033, %v1030, %v642
        %v1052 = vsel %vm1033, %v1031, %v644
        %v1053 = vsel %vm1033, %v1032, %v646
        %vm1054 = vcmask 97280
        %v1055 = vsel %vm1054, %v1034, %v674
        %v1056 = vsel %vm1054, %v1035, %v676
        %v1057 = vsel %vm1054, %v1036, %v678
        %v1058 = vsel %vm1054, %v1037, %v680
        %v1059 = vsel %vm1054, %v1038, %v682
        %v1060 = vsel %vm1054, %v1039, %v684
        %v1061 = vsel %vm1054, %v1040, %v686
        %v1062 = vsel %vm1054, %v1041, %v688
        %v1063 = vsel %vm1054, %v1042, %v690
        %v1064 = vsel %vm1054, %v1043, %v692
        %v1065 = vsel %vm1054, %v1044, %v694
        %v1066 = vsel %vm1054, %v1045, %v696
        %v1067 = vsel %vm1054, %v1046, %v698
        %v1068 = vsel %vm1054, %v1047, %v700
        %v1069 = vsel %vm1054, %v1048, %v702
        %v1070 = vsel %vm1054, %v1049, %v704
        %v1071 = vsel %vm1054, %v1050, %v706
        %v1072 = vsel %vm1054, %v1051, %v708
        %v1073 = vsel %vm1054, %v1052, %v710
        %v1074 = vsel %vm1054, %v1053, %v712
        %vm1075 = vcmask 121856
        %v1076 = vsel %vm1075, %v1055, %v739
        %v1077 = vsel %vm1075, %v1056, %v741
        %v1078 = vsel %vm1075, %v1057, %v743
        %v1079 = vsel %vm1075, %v1058, %v745
        %v1080 = vsel %vm1075, %v1059, %v747
        %v1081 = vsel %vm1075, %v1060, %v749
        %v1082 = vsel %vm1075, %v1061, %v751
        %v1083 = vsel %vm1075, %v1062, %v753
        %v1084 = vsel %vm1075, %v1063, %v755
        %v1085 = vsel %vm1075, %v1064, %v757
        %v1086 = vsel %vm1075, %v1065, %v759
        %v1087 = vsel %vm1075, %v1066, %v761
        %v1088 = vsel %vm1075, %v1067, %v763
        %v1089 = vsel %vm1075, %v1068, %v765
        %v1090 = vsel %vm1075, %v1069, %v767
        %v1091 = vsel %vm1075, %v1070, %v769
        %v1092 = vsel %vm1075, %v1071, %v771
        %v1093 = vsel %vm1075, %v1072, %v773
        %v1094 = vsel %vm1075, %v1073, %v775
        %v1095 = vsel %vm1075, %v1074, %v777
        %vm1096 = vcmask 146432
        %v1097 = vsel %vm1096, %v1076, %v801
        %v1098 = vsel %vm1096, %v1077, %v803
        %v1099 = vsel %vm1096, %v1078, %v805
        %v1100 = vsel %vm1096, %v1079, %v807
        %v1101 = vsel %vm1096, %v1080, %v809
        %v1102 = vsel %vm1096, %v1081, %v811
        %v1103 = vsel %vm1096, %v1082, %v813
        %v1104 = vsel %vm1096, %v1083, %v815
        %v1105 = vsel %vm1096, %v1084, %v817
        %v1106 = vsel %vm1096, %v1085, %v819
        %v1107 = vsel %vm1096, %v1086, %v821
        %v1108 = vsel %vm1096, %v1087, %v823
        %v1109 = vsel %vm1096, %v1088, %v825
        %v1110 = vsel %vm1096, %v1089, %v827
        %v1111 = vsel %vm1096, %v1090, %v829
        %v1112 = vsel %vm1096, %v1091, %v831
        %v1113 = vsel %vm1096, %v1092, %v833
        %v1114 = vsel %vm1096, %v1093, %v835
        %v1115 = vsel %vm1096, %v1094, %v837
        %v1116 = vsel %vm1096, %v1095, %v839
        %vm1117 = vcmask 171008
        %v1118 = vsel %vm1117, %v1097, %v867
        %v1119 = vsel %vm1117, %v1098, %v869
        %v1120 = vsel %vm1117, %v1099, %v871
        %v1121 = vsel %vm1117, %v1100, %v873
        %v1122 = vsel %vm1117, %v1101, %v875
        %v1123 = vsel %vm1117, %v1102, %v877
        %v1124 = vsel %vm1117, %v1103, %v879
        %v1125 = vsel %vm1117, %v1104, %v881
        %v1126 = vsel %vm1117, %v1105, %v883
        %v1127 = vsel %vm1117, %v1106, %v885
        %v1128 = vsel %vm1117, %v1107, %v887
        %v1129 = vsel %vm1117, %v1108, %v889
        %v1130 = vsel %vm1117, %v1109, %v891
        %v1131 = vsel %vm1117, %v1110, %v893
        %v1132 = vsel %vm1117, %v1111, %v895
        %v1133 = vsel %vm1117, %v1112, %v897
        %v1134 = vsel %vm1117, %v1113, %v899
        %v1135 = vsel %vm1117, %v1114, %v901
        %v1136 = vsel %vm1117, %v1115, %v903
        %v1137 = vsel %vm1117, %v1116, %v905
        %vm1138 = vcmask 195584
        %v1139 = vsel %vm1138, %v1118, %v932
        %v1140 = vsel %vm1138, %v1119, %v934
        %v1141 = vsel %vm1138, %v1120, %v936
        %v1142 = vsel %vm1138, %v1121, %v938
        %v1143 = vsel %vm1138, %v1122, %v940
        %v1144 = vsel %vm1138, %v1123, %v942
        %v1145 = vsel %vm1138, %v1124, %v944
        %v1146 = vsel %vm1138, %v1125, %v946
        %v1147 = vsel %vm1138, %v1126, %v948
        %v1148 = vsel %vm1138, %v1127, %v950
        %v1149 = vsel %vm1138, %v1128, %v952
        %v1150 = vsel %vm1138, %v1129, %v954
        %v1151 = vsel %vm1138, %v1130, %v956
        %v1152 = vsel %vm1138, %v1131, %v958
        %v1153 = vsel %vm1138, %v1132, %v960
        %v1154 = vsel %vm1138, %v1133, %v962
        %v1155 = vsel %vm1138, %v1134, %v964
        %v1156 = vsel %vm1138, %v1135, %v966
        %v1157 = vsel %vm1138, %v1136, %v968
        %v1158 = vsel %vm1138, %v1137, %v970
        %v1159 = vld [vmem:[%s1] sm:$0xff]
        %v1160 = vld [vmem:[%s1 + $0x8] sm:$0xff]
        %v1161 = vld [vmem:[%s1 + $0x10] sm:$0xff]
        %v1162 = vld [vmem:[%s1 + $0x18] sm:$0x7]
        %v1163 = vld [vmem:[#allocation4] sm:$0x1]
        %v1165 = vlaneseq
        %v1166 = vshrl.u32 %v1165, 7
        %v1167 = vsub.s32 0, %v1166
        %v1168 = vrot.slane %v1163, %v1167
        %vm1170 = vcmask 220160
        %v1172 = vsel %vm1170, %v1139, 0
        %v1175 = vsel %vm1170, %v1140, 0
        %v1178 = vsel %vm1170, %v1141, 0
        %v1181 = vsel %vm1170, %v1142, 0
        %v1184 = vsel %vm1170, %v1143, 0
        %v1187 = vsel %vm1170, %v1144, 0
        %v1190 = vsel %vm1170, %v1145, 0
        %v1193 = vsel %vm1170, %v1146, 0
        %v1196 = vsel %vm1170, %v1147, 0
        %v1199 = vsel %vm1170, %v1148, 0
        %v1202 = vsel %vm1170, %v1149, 0
        %v1205 = vsel %vm1170, %v1150, 0
        %v1208 = vsel %vm1170, %v1151, 0
        %v1211 = vsel %vm1170, %v1152, 0
        %v1214 = vsel %vm1170, %v1153, 0
        %v1217 = vsel %vm1170, %v1154, 0
        %v1220 = vsel %vm1170, %v1155, 0
        %v1223 = vsel %vm1170, %v1156, 0
        %v1226 = vsel %vm1170, %v1157, 0
        %v1229 = vsel %vm1170, %v1158, 0
        %vm1231 = vcmask 1042432
        %v1233 = vsel %vm1231, %v1162, 0
        %1235 = vmatprep.subr.mxu0 0.0
        %1236 = vmatpush1.msra.mxu0 %v1159
        %1237 = vmatprep.subr.mxu0 0.0
        %1238 = vmatpush1.msra.mxu0 %v1160
        %1239 = vmatprep.subr.mxu0 0.0
        %1240 = vmatpush1.msra.mxu0 %v1161
        %1241 = vmatprep.subr.mxu0 0.0
        %1242 = vmatpush1.msra.mxu0 %v1233
        %1243 = vmatprep.subr.mxu0 0.0
        %1244 = vmatpush1.msra.mxu0 0.0
        %1245 = vmatprep.subr.mxu0 0.0
        %1246 = vmatpush1.msra.mxu0 0.0
        %1247 = vmatprep.subr.mxu0 0.0
        %1248 = vmatpush1.msra.mxu0 0.0
        %1249 = vmatprep.subr.mxu0 0.0
        %1250 = vmatpush1.msra.mxu0 0.0
        %1251 = vmatprep.subr.mxu0 0.0
        %1252 = vmatpush1.msra.mxu0 0.0
        %1253 = vmatprep.subr.mxu0 0.0
        %1254 = vmatpush1.msra.mxu0 0.0
        %1255 = vmatprep.subr.mxu0 0.0
        %1256 = vmatpush1.msra.mxu0 0.0
        %1257 = vmatprep.subr.mxu0 0.0
        %1258 = vmatpush1.msra.mxu0 0.0
        %1259 = vmatprep.subr.mxu0 0.0
        %1260 = vmatpush1.msra.mxu0 0.0
        %1261 = vmatprep.subr.mxu0 0.0
        %1262 = vmatpush1.msra.mxu0 0.0
        %1263 = vmatprep.subr.mxu0 0.0
        %1264 = vmatpush1.msra.mxu0 0.0
        %1265 = vmatprep.subr.mxu0 0.0
        %1266 = vmatpush1.msra.mxu0 0.0
        %1267 = vmatprep.subr.mxu0 0.0
        %1268 = vmatpush1.msra.mxu0 0.0
        %1269 = vmatprep.subr.mxu0 0.0
        %1270 = vmatpush1.msra.mxu0 0.0
        %1271 = vmatprep.subr.mxu0 0.0
        %1272 = vmatpush1.msra.mxu0 0.0
        %1273 = vmatprep.subr.mxu0 0.0
        %1274 = vmatpush1.msra.mxu0 0.0
        %1275 = vmatprep.subr.mxu0 0.0
        %1276 = vmatpush1.msra.mxu0 0.0
        %1277 = vmatprep.subr.mxu0 0.0
        %1278 = vmatpush1.msra.mxu0 0.0
        %1279 = vmatprep.subr.mxu0 0.0
        %1280 = vmatpush1.msra.mxu0 0.0
        %1281 = vmatprep.subr.mxu0 0.0
        %1282 = vmatpush1.msra.mxu0 0.0
        %1283 = vmatprep.subr.mxu0 0.0
        %1284 = vmatpush1.msra.mxu0 0.0
        %1285 = vmatprep.subr.mxu0 0.0
        %1286 = vmatpush1.msra.mxu0 0.0
        %1287 = vmatprep.subr.mxu0 0.0
        %1288 = vmatpush1.msra.mxu0 0.0
        %1289 = vmatprep.subr.mxu0 0.0
        %1290 = vmatpush1.msra.mxu0 0.0
        %1291 = vmatprep.subr.mxu0 0.0
        %1292 = vmatpush1.msra.mxu0 0.0
        %1293 = vmatprep.subr.mxu0 0.0
        %1294 = vmatpush1.msra.mxu0 0.0
        %1295 = vmatprep.subr.mxu0 0.0
        %1296 = vmatpush1.msra.mxu0 0.0
        %1297 = vmatprep.subr.mxu0 0.0
        %1298 = vmatpush1.msra.mxu0 0.0
        %1299 = vmatprep.mubr.f32.mxu0 0.0
        %1300 = vmatmul.mubr.f32.gmra.mrb[0].mxu0 %v1172
        %v1301 = vpop.f32.mrb[0].mxu0
        %v1302 = vadd.f32 %v1168, %v1301
        %v1303 = vpop.f32.mrb[0].mxu0
        %1304 = vmatprep.mubr.f32.mxu0 0.0
        %1305 = vmatmul.mubr.f32.gmra.mrb[0].mxu0 %v1175
        %v1306 = vpop.f32.mrb[0].mxu0
        %v1307 = vadd.f32 %v1168, %v1306
        %v1308 = vpop.f32.mrb[0].mxu0
        %1309 = vmatprep.mubr.f32.mxu0 0.0
        %1310 = vmatmul.mubr.f32.gmra.mrb[0].mxu0 %v1178
        %v1311 = vpop.f32.mrb[0].mxu0
        %v1312 = vadd.f32 %v1168, %v1311
        %v1313 = vpop.f32.mrb[0].mxu0
        %1314 = vmatprep.mubr.f32.mxu0 0.0
        %1315 = vmatmul.mubr.f32.gmra.mrb[0].mxu0 %v1181
        %v1316 = vpop.f32.mrb[0].mxu0
        %v1317 = vadd.f32 %v1168, %v1316
        %v1318 = vpop.f32.mrb[0].mxu0
        %1319 = vmatprep.mubr.f32.mxu0 0.0
        %1320 = vmatmul.mubr.f32.gmra.mrb[0].mxu0 %v1184
        %v1321 = vpop.f32.mrb[0].mxu0
        %v1322 = vadd.f32 %v1168, %v1321
        %v1323 = vpop.f32.mrb[0].mxu0
        %1324 = vmatprep.mubr.f32.mxu0 0.0
        %1325 = vmatmul.mubr.f32.gmra.mrb[0].mxu0 %v1187
        %v1326 = vpop.f32.mrb[0].mxu0
        %v1327 = vadd.f32 %v1168, %v1326
        %v1328 = vpop.f32.mrb[0].mxu0
        %1329 = vmatprep.mubr.f32.mxu0 0.0
        %1330 = vmatmul.mubr.f32.gmra.mrb[0].mxu0 %v1190
        %v1331 = vpop.f32.mrb[0].mxu0
        %v1332 = vadd.f32 %v1168, %v1331
        %v1333 = vpop.f32.mrb[0].mxu0
        %1334 = vmatprep.mubr.f32.mxu0 0.0
        %1335 = vmatmul.mubr.f32.gmra.mrb[0].mxu0 %v1193
        %v1336 = vpop.f32.mrb[0].mxu0
        %v1337 = vadd.f32 %v1168, %v1336
        %v1338 = vpop.f32.mrb[0].mxu0
        %1339 = vmatprep.mubr.f32.mxu0 0.0
        %1340 = vmatmul.mubr.f32.gmra.mrb[0].mxu0 %v1196
        %v1341 = vpop.f32.mrb[0].mxu0
        %v1342 = vadd.f32 %v1168, %v1341
        %v1343 = vpop.f32.mrb[0].mxu0
        %1344 = vmatprep.mubr.f32.mxu0 0.0
        %1345 = vmatmul.mubr.f32.gmra.mrb[0].mxu0 %v1199
        %v1346 = vpop.f32.mrb[0].mxu0
        %v1347 = vadd.f32 %v1168, %v1346
        %v1348 = vpop.f32.mrb[0].mxu0
        %1349 = vmatprep.mubr.f32.mxu0 0.0
        %1350 = vmatmul.mubr.f32.gmra.mrb[0].mxu0 %v1202
        %v1351 = vpop.f32.mrb[0].mxu0
        %v1352 = vadd.f32 %v1168, %v1351
        %v1353 = vpop.f32.mrb[0].mxu0
        %1354 = vmatprep.mubr.f32.mxu0 0.0
        %1355 = vmatmul.mubr.f32.gmra.mrb[0].mxu0 %v1205
        %v1356 = vpop.f32.mrb[0].mxu0
        %v1357 = vadd.f32 %v1168, %v1356
        %v1358 = vpop.f32.mrb[0].mxu0
        %1359 = vmatprep.mubr.f32.mxu0 0.0
        %1360 = vmatmul.mubr.f32.gmra.mrb[0].mxu0 %v1208
        %v1361 = vpop.f32.mrb[0].mxu0
        %v1362 = vadd.f32 %v1168, %v1361
        %v1363 = vpop.f32.mrb[0].mxu0
        %1364 = vmatprep.mubr.f32.mxu0 0.0
        %1365 = vmatmul.mubr.f32.gmra.mrb[0].mxu0 %v1211
        %v1366 = vpop.f32.mrb[0].mxu0
        %v1367 = vadd.f32 %v1168, %v1366
        %v1368 = vpop.f32.mrb[0].mxu0
        %1369 = vmatprep.mubr.f32.mxu0 0.0
        %1370 = vmatmul.mubr.f32.gmra.mrb[0].mxu0 %v1214
        %v1371 = vpop.f32.mrb[0].mxu0
        %v1372 = vadd.f32 %v1168, %v1371
        %v1373 = vpop.f32.mrb[0].mxu0
        %1374 = vmatprep.mubr.f32.mxu0 0.0
        %1375 = vmatmul.mubr.f32.gmra.mrb[0].mxu0 %v1217
        %v1376 = vpop.f32.mrb[0].mxu0
        %v1377 = vadd.f32 %v1168, %v1376
        %v1378 = vpop.f32.mrb[0].mxu0
        %1379 = vmatprep.mubr.f32.mxu0 0.0
        %1380 = vmatmul.mubr.f32.gmra.mrb[0].mxu0 %v1220
        %v1381 = vpop.f32.mrb[0].mxu0
        %v1382 = vadd.f32 %v1168, %v1381
        %v1383 = vpop.f32.mrb[0].mxu0
        %1384 = vmatprep.mubr.f32.mxu0 0.0
        %1385 = vmatmul.mubr.f32.gmra.mrb[0].mxu0 %v1223
        %v1386 = vpop.f32.mrb[0].mxu0
        %v1387 = vadd.f32 %v1168, %v1386
        %v1388 = vpop.f32.mrb[0].mxu0
        %1389 = vmatprep.mubr.f32.mxu0 0.0
        %1390 = vmatmul.mubr.f32.gmra.mrb[0].mxu0 %v1226
        %v1391 = vpop.f32.mrb[0].mxu0
        %v1392 = vadd.f32 %v1168, %v1391
        %v1393 = vpop.f32.mrb[0].mxu0
        %1394 = vmatprep.mubr.f32.mxu0 0.0
        %1395 = vmatmul.mubr.f32.gmra.mrb[0].mxu0 %v1229
        %v1396 = vpop.f32.mrb[0].mxu0
        %v1397 = vadd.f32 %v1168, %v1396
        %v1398 = vpop.f32.mrb[0].mxu0
        %1399 = vdwg.mxu0
        %v1400 = vmax.f32 %v1302, 0.0
        %v1401 = vmax.f32 %v1307, 0.0
        %v1402 = vmax.f32 %v1312, 0.0
        %v1403 = vmax.f32 %v1317, 0.0
        %v1404 = vmax.f32 %v1322, 0.0
        %v1405 = vmax.f32 %v1327, 0.0
        %v1406 = vmax.f32 %v1332, 0.0
        %v1407 = vmax.f32 %v1337, 0.0
        %v1408 = vmax.f32 %v1342, 0.0
        %v1409 = vmax.f32 %v1347, 0.0
        %v1410 = vmax.f32 %v1352, 0.0
        %v1411 = vmax.f32 %v1357, 0.0
        %v1412 = vmax.f32 %v1362, 0.0
        %v1413 = vmax.f32 %v1367, 0.0
        %v1414 = vmax.f32 %v1372, 0.0
        %v1415 = vmax.f32 %v1377, 0.0
        %v1416 = vmax.f32 %v1382, 0.0
        %v1417 = vmax.f32 %v1387, 0.0
        %v1418 = vmax.f32 %v1392, 0.0
        %v1419 = vmax.f32 %v1397, 0.0
        %vm1420 = vcmask 130048
        %1421 = vst.msk [vmem:[#allocation2] sm:$0xff] %vm1420, 0.0
        %1422 = vst.msk [vmem:[#allocation2 + $0x8] sm:$0xff] %vm1420, 0.0
        %vm1423 = vcmask 123904
        %1424 = vst.msk [vmem:[#allocation2 + $0x10] sm:$0x3] %vm1423, 0.0
        %s1425 = scalar_lea.vmem [#allocation2], 264
        %1426 = vst.msk [vmem:[%s1425] sm:$0xff] %vm1420, 0.0
        %1427 = vst.msk [vmem:[%s1425 + $0x8] sm:$0xff] %vm1420, 0.0
        %1428 = vst.msk [vmem:[%s1425 + $0x10] sm:$0x3] %vm1423, 0.0
        %vm1429 = vcmask 122880
        %1430 = vst.msk [vmem:[#allocation2] sm:$0x1] %vm1429, 0.0
        %1431 = vst.msk [vmem:[#allocation2 + $0x18] sm:$0x1] %vm1429, 0.0
        %1432 = vst.msk [vmem:[#allocation2 + $0x30] sm:$0x1] %vm1429, 0.0
        %1433 = vst.msk [vmem:[#allocation2 + $0x48] sm:$0x1] %vm1429, 0.0
        %1434 = vst.msk [vmem:[#allocation2 + $0x60] sm:$0x1] %vm1429, 0.0
        %1435 = vst.msk [vmem:[#allocation2 + $0x78] sm:$0x1] %vm1429, 0.0
        %1436 = vst.msk [vmem:[#allocation2 + $0x90] sm:$0x1] %vm1429, 0.0
        %1437 = vst.msk [vmem:[#allocation2 + $0xa8] sm:$0x1] %vm1429, 0.0
        %1438 = vst.msk [vmem:[#allocation2 + $0xc0] sm:$0x1] %vm1429, 0.0
        %1439 = vst.msk [vmem:[#allocation2 + $0xd8] sm:$0x1] %vm1429, 0.0
        %1440 = vst.msk [vmem:[#allocation2 + $0xf0] sm:$0x1] %vm1429, 0.0
        %1441 = vst.msk [vmem:[#allocation2 + $0x108] sm:$0x1] %vm1429, 0.0
        %1442 = vst.msk [vmem:[#allocation2 + $0x11] sm:$0x1] %vm1429, 0.0
        %1443 = vst.msk [vmem:[#allocation2 + $0x29] sm:$0x1] %vm1429, 0.0
        %1444 = vst.msk [vmem:[#allocation2 + $0x41] sm:$0x1] %vm1429, 0.0
        %1445 = vst.msk [vmem:[#allocation2 + $0x59] sm:$0x1] %vm1429, 0.0
        %1446 = vst.msk [vmem:[#allocation2 + $0x71] sm:$0x1] %vm1429, 0.0
        %1447 = vst.msk [vmem:[#allocation2 + $0x89] sm:$0x1] %vm1429, 0.0
        %1448 = vst.msk [vmem:[#allocation2 + $0xa1] sm:$0x1] %vm1429, 0.0
        %1449 = vst.msk [vmem:[#allocation2 + $0xb9] sm:$0x1] %vm1429, 0.0
        %1450 = vst.msk [vmem:[#allocation2 + $0xd1] sm:$0x1] %vm1429, 0.0
        %1451 = vst.msk [vmem:[#allocation2 + $0xe9] sm:$0x1] %vm1429, 0.0
        %1452 = vst.msk [vmem:[#allocation2 + $0x101] sm:$0x1] %vm1429, 0.0
        %1453 = vst.msk [vmem:[#allocation2 + $0x119] sm:$0x1] %vm1429, 0.0
        %s1454 = scalar_lea.vmem [#allocation2], 24
        %1455 = vst.msk [vmem:[%s1454 + $0x1] sm:$0xff] %vm1420, %v1400
        %1456 = vst.msk [vmem:[%s1454 + $0x9] sm:$0xff] %vm1420, %v1401
        %1457 = vst.msk [vmem:[%s1454 + $0x19] sm:$0xff] %vm1420, %v1402
        %1458 = vst.msk [vmem:[%s1454 + $0x21] sm:$0xff] %vm1420, %v1403
        %1459 = vst.msk [vmem:[%s1454 + $0x31] sm:$0xff] %vm1420, %v1404
        %1460 = vst.msk [vmem:[%s1454 + $0x39] sm:$0xff] %vm1420, %v1405
        %1461 = vst.msk [vmem:[%s1454 + $0x49] sm:$0xff] %vm1420, %v1406
        %1462 = vst.msk [vmem:[%s1454 + $0x51] sm:$0xff] %vm1420, %v1407
        %1463 = vst.msk [vmem:[%s1454 + $0x61] sm:$0xff] %vm1420, %v1408
        %1464 = vst.msk [vmem:[%s1454 + $0x69] sm:$0xff] %vm1420, %v1409
        %1465 = vst.msk [vmem:[%s1454 + $0x79] sm:$0xff] %vm1420, %v1410
        %1466 = vst.msk [vmem:[%s1454 + $0x81] sm:$0xff] %vm1420, %v1411
        %1467 = vst.msk [vmem:[%s1454 + $0x91] sm:$0xff] %vm1420, %v1412
        %1468 = vst.msk [vmem:[%s1454 + $0x99] sm:$0xff] %vm1420, %v1413
        %1469 = vst.msk [vmem:[%s1454 + $0xa9] sm:$0xff] %vm1420, %v1414
        %1470 = vst.msk [vmem:[%s1454 + $0xb1] sm:$0xff] %vm1420, %v1415
        %1471 = vst.msk [vmem:[%s1454 + $0xc1] sm:$0xff] %vm1420, %v1416
        %1472 = vst.msk [vmem:[%s1454 + $0xc9] sm:$0xff] %vm1420, %v1417
        %1473 = vst.msk [vmem:[%s1454 + $0xd9] sm:$0xff] %vm1420, %v1418
        %1474 = vst.msk [vmem:[%s1454 + $0xe1] sm:$0xff] %vm1420, %v1419
        %v1475 = vld [vmem:[#allocation2] sm:$0xff]
        %v1476 = vld [vmem:[#allocation2 + $0x8] sm:$0xff]
        %v1477 = vld [vmem:[#allocation2 + $0x10] sm:$0x3]
        %v1478 = vld [vmem:[#allocation2 + $0x18] sm:$0xff]
        %v1479 = vld [vmem:[#allocation2 + $0x20] sm:$0xff]
        %v1480 = vld [vmem:[#allocation2 + $0x28] sm:$0x3]
        %v1481 = vld [vmem:[#allocation2 + $0x30] sm:$0xff]
        %v1482 = vld [vmem:[#allocation2 + $0x38] sm:$0xff]
        %v1483 = vld [vmem:[#allocation2 + $0x40] sm:$0x3]
        %v1484 = vld [vmem:[#allocation2 + $0x48] sm:$0xff]
        %v1485 = vld [vmem:[#allocation2 + $0x50] sm:$0xff]
        %v1486 = vld [vmem:[#allocation2 + $0x58] sm:$0x3]
        %v1487 = vld [vmem:[#allocation2 + $0x60] sm:$0xff]
        %v1488 = vld [vmem:[#allocation2 + $0x68] sm:$0xff]
        %v1489 = vld [vmem:[#allocation2 + $0x70] sm:$0x3]
        %v1490 = vld [vmem:[#allocation2 + $0x78] sm:$0xff]
        %v1491 = vld [vmem:[#allocation2 + $0x80] sm:$0xff]
        %v1492 = vld [vmem:[#allocation2 + $0x88] sm:$0x3]
        %v1493 = vld [vmem:[#allocation2 + $0x90] sm:$0xff]
        %v1494 = vld [vmem:[#allocation2 + $0x98] sm:$0xff]
        %v1495 = vld [vmem:[#allocation2 + $0xa0] sm:$0x3]
        %v1496 = vld [vmem:[#allocation2 + $0xa8] sm:$0xff]
        %v1497 = vld [vmem:[#allocation2 + $0xb0] sm:$0xff]
        %v1498 = vld [vmem:[#allocation2 + $0xb8] sm:$0x3]
        %v1499 = vld [vmem:[#allocation2 + $0xc0] sm:$0xff]
        %v1500 = vld [vmem:[#allocation2 + $0xc8] sm:$0xff]
        %v1501 = vld [vmem:[#allocation2 + $0xd0] sm:$0x3]
        %v1502 = vld [vmem:[#allocation2 + $0xd8] sm:$0xff]
        %v1503 = vld [vmem:[#allocation2 + $0xe0] sm:$0xff]
        %v1504 = vld [vmem:[#allocation2 + $0xe8] sm:$0x3]
        %v1505 = vld [vmem:[#allocation2 + $0xf0] sm:$0xff]
        %v1506 = vld [vmem:[#allocation2 + $0xf8] sm:$0xff]
        %v1507 = vld [vmem:[#allocation2 + $0x100] sm:$0x3]
        %v1508 = vld [vmem:[#allocation2 + $0x108] sm:$0xff]
        %v1509 = vld [vmem:[#allocation2 + $0x110] sm:$0xff]
        %v1510 = vld [vmem:[#allocation2 + $0x118] sm:$0x3]
        %v1541 = vrot.slane %v1475, 1
        %v1542 = vrot.slane %v1476, 1
        %v1543 = vsel %vm383, %v1541, %v1542
        %v1544 = vrot.slane %v1477, 1
        %v1545 = vsel %vm383, %v1542, %v1544
        %v1546 = vrot.slane %v1478, 1
        %v1547 = vrot.slane %v1479, 1
        %v1548 = vsel %vm383, %v1546, %v1547
        %v1549 = vrot.slane %v1480, 1
        %v1550 = vsel %vm383, %v1547, %v1549
        %v1551 = vrot.slane %v1481, 1
        %v1552 = vrot.slane %v1482, 1
        %v1553 = vsel %vm383, %v1551, %v1552
        %v1554 = vrot.slane %v1483, 1
        %v1555 = vsel %vm383, %v1552, %v1554
        %v1556 = vrot.slane %v1484, 1
        %v1557 = vrot.slane %v1485, 1
        %v1558 = vsel %vm383, %v1556, %v1557
        %v1559 = vrot.slane %v1486, 1
        %v1560 = vsel %vm383, %v1557, %v1559
        %v1561 = vrot.slane %v1487, 1
        %v1562 = vrot.slane %v1488, 1
        %v1563 = vsel %vm383, %v1561, %v1562
        %v1564 = vrot.slane %v1489, 1
        %v1565 = vsel %vm383, %v1562, %v1564
        %v1566 = vrot.slane %v1490, 1
        %v1567 = vrot.slane %v1491, 1
        %v1568 = vsel %vm383, %v1566, %v1567
        %v1569 = vrot.slane %v1492, 1
        %v1570 = vsel %vm383, %v1567, %v1569
        %v1571 = vrot.slane %v1493, 1
        %v1572 = vrot.slane %v1494, 1
        %v1573 = vsel %vm383, %v1571, %v1572
        %v1574 = vrot.slane %v1495, 1
        %v1575 = vsel %vm383, %v1572, %v1574
        %v1576 = vrot.slane %v1496, 1
        %v1577 = vrot.slane %v1497, 1
        %v1578 = vsel %vm383, %v1576, %v1577
        %v1579 = vrot.slane %v1498, 1
        %v1580 = vsel %vm383, %v1577, %v1579
        %v1581 = vrot.slane %v1499, 1
        %v1582 = vrot.slane %v1500, 1
        %v1583 = vsel %vm383, %v1581, %v1582
        %v1584 = vrot.slane %v1501, 1
        %v1585 = vsel %vm383, %v1582, %v1584
        %v1586 = vrot.slane %v1502, 1
        %v1587 = vrot.slane %v1503, 1
        %v1588 = vsel %vm383, %v1586, %v1587
        %v1589 = vrot.slane %v1504, 1
        %v1590 = vsel %vm383, %v1587, %v1589
        %1591 = vrot.lane.b32.xlu0 %v1543, 16
        %v1592 = vpop.permute.xlu0 %1591
        %1593 = vrot.lane.b32.xlu0 %v1545, 16
        %v1594 = vpop.permute.xlu0 %1593
        %1595 = vrot.lane.b32.xlu0 %v1548, 16
        %v1596 = vpop.permute.xlu0 %1595
        %1597 = vrot.lane.b32.xlu0 %v1550, 16
        %v1598 = vpop.permute.xlu0 %1597
        %1599 = vrot.lane.b32.xlu0 %v1553, 16
        %v1600 = vpop.permute.xlu0 %1599
        %1601 = vrot.lane.b32.xlu0 %v1555, 16
        %v1602 = vpop.permute.xlu0 %1601
        %1603 = vrot.lane.b32.xlu0 %v1558, 16
        %v1604 = vpop.permute.xlu0 %1603
        %1605 = vrot.lane.b32.xlu0 %v1560, 16
        %v1606 = vpop.permute.xlu0 %1605
        %1607 = vrot.lane.b32.xlu0 %v1563, 16
        %v1608 = vpop.permute.xlu0 %1607
        %1609 = vrot.lane.b32.xlu0 %v1565, 16
        %v1610 = vpop.permute.xlu0 %1609
        %1611 = vrot.lane.b32.xlu0 %v1568, 16
        %v1612 = vpop.permute.xlu0 %1611
        %1613 = vrot.lane.b32.xlu0 %v1570, 16
        %v1614 = vpop.permute.xlu0 %1613
        %1615 = vrot.lane.b32.xlu0 %v1573, 16
        %v1616 = vpop.permute.xlu0 %1615
        %1617 = vrot.lane.b32.xlu0 %v1575, 16
        %v1618 = vpop.permute.xlu0 %1617
        %1619 = vrot.lane.b32.xlu0 %v1578, 16
        %v1620 = vpop.permute.xlu0 %1619
        %1621 = vrot.lane.b32.xlu0 %v1580, 16
        %v1622 = vpop.permute.xlu0 %1621
        %1623 = vrot.lane.b32.xlu0 %v1583, 16
        %v1624 = vpop.permute.xlu0 %1623
        %1625 = vrot.lane.b32.xlu0 %v1585, 16
        %v1626 = vpop.permute.xlu0 %1625
        %1627 = vrot.lane.b32.xlu0 %v1588, 16
        %v1628 = vpop.permute.xlu0 %1627
        %1629 = vrot.lane.b32.xlu0 %v1590, 16
        %v1630 = vpop.permute.xlu0 %1629
        %v1651 = vrot.slane %v1475, 2
        %v1652 = vrot.slane %v1476, 2
        %v1653 = vsel %vm494, %v1651, %v1652
        %v1654 = vrot.slane %v1477, 2
        %v1655 = vsel %vm494, %v1652, %v1654
        %v1656 = vrot.slane %v1478, 2
        %v1657 = vrot.slane %v1479, 2
        %v1658 = vsel %vm494, %v1656, %v1657
        %v1659 = vrot.slane %v1480, 2
        %v1660 = vsel %vm494, %v1657, %v1659
        %v1661 = vrot.slane %v1481, 2
        %v1662 = vrot.slane %v1482, 2
        %v1663 = vsel %vm494, %v1661, %v1662
        %v1664 = vrot.slane %v1483, 2
        %v1665 = vsel %vm494, %v1662, %v1664
        %v1666 = vrot.slane %v1484, 2
        %v1667 = vrot.slane %v1485, 2
        %v1668 = vsel %vm494, %v1666, %v1667
        %v1669 = vrot.slane %v1486, 2
        %v1670 = vsel %vm494, %v1667, %v1669
        %v1671 = vrot.slane %v1487, 2
        %v1672 = vrot.slane %v1488, 2
        %v1673 = vsel %vm494, %v1671, %v1672
        %v1674 = vrot.slane %v1489, 2
        %v1675 = vsel %vm494, %v1672, %v1674
        %v1676 = vrot.slane %v1490, 2
        %v1677 = vrot.slane %v1491, 2
        %v1678 = vsel %vm494, %v1676, %v1677
        %v1679 = vrot.slane %v1492, 2
        %v1680 = vsel %vm494, %v1677, %v1679
        %v1681 = vrot.slane %v1493, 2
        %v1682 = vrot.slane %v1494, 2
        %v1683 = vsel %vm494, %v1681, %v1682
        %v1684 = vrot.slane %v1495, 2
        %v1685 = vsel %vm494, %v1682, %v1684
        %v1686 = vrot.slane %v1496, 2
        %v1687 = vrot.slane %v1497, 2
        %v1688 = vsel %vm494, %v1686, %v1687
        %v1689 = vrot.slane %v1498, 2
        %v1690 = vsel %vm494, %v1687, %v1689
        %v1691 = vrot.slane %v1499, 2
        %v1692 = vrot.slane %v1500, 2
        %v1693 = vsel %vm494, %v1691, %v1692
        %v1694 = vrot.slane %v1501, 2
        %v1695 = vsel %vm494, %v1692, %v1694
        %v1696 = vrot.slane %v1502, 2
        %v1697 = vrot.slane %v1503, 2
        %v1698 = vsel %vm494, %v1696, %v1697
        %v1699 = vrot.slane %v1504, 2
        %v1700 = vsel %vm494, %v1697, %v1699
        %1701 = vrot.lane.b32.xlu0 %v1653, 32
        %v1702 = vpop.permute.xlu0 %1701
        %1703 = vrot.lane.b32.xlu0 %v1655, 32
        %v1704 = vpop.permute.xlu0 %1703
        %1705 = vrot.lane.b32.xlu0 %v1658, 32
        %v1706 = vpop.permute.xlu0 %1705
        %1707 = vrot.lane.b32.xlu0 %v1660, 32
        %v1708 = vpop.permute.xlu0 %1707
        %1709 = vrot.lane.b32.xlu0 %v1663, 32
        %v1710 = vpop.permute.xlu0 %1709
        %1711 = vrot.lane.b32.xlu0 %v1665, 32
        %v1712 = vpop.permute.xlu0 %1711
        %1713 = vrot.lane.b32.xlu0 %v1668, 32
        %v1714 = vpop.permute.xlu0 %1713
        %1715 = vrot.lane.b32.xlu0 %v1670, 32
        %v1716 = vpop.permute.xlu0 %1715
        %1717 = vrot.lane.b32.xlu0 %v1673, 32
        %v1718 = vpop.permute.xlu0 %1717
        %1719 = vrot.lane.b32.xlu0 %v1675, 32
        %v1720 = vpop.permute.xlu0 %1719
        %1721 = vrot.lane.b32.xlu0 %v1678, 32
        %v1722 = vpop.permute.xlu0 %1721
        %1723 = vrot.lane.b32.xlu0 %v1680, 32
        %v1724 = vpop.permute.xlu0 %1723
        %1725 = vrot.lane.b32.xlu0 %v1683, 32
        %v1726 = vpop.permute.xlu0 %1725
        %1727 = vrot.lane.b32.xlu0 %v1685, 32
        %v1728 = vpop.permute.xlu0 %1727
        %1729 = vrot.lane.b32.xlu0 %v1688, 32
        %v1730 = vpop.permute.xlu0 %1729
        %1731 = vrot.lane.b32.xlu0 %v1690, 32
        %v1732 = vpop.permute.xlu0 %1731
        %1733 = vrot.lane.b32.xlu0 %v1693, 32
        %v1734 = vpop.permute.xlu0 %1733
        %1735 = vrot.lane.b32.xlu0 %v1695, 32
        %v1736 = vpop.permute.xlu0 %1735
        %1737 = vrot.lane.b32.xlu0 %v1698, 32
        %v1738 = vpop.permute.xlu0 %1737
        %1739 = vrot.lane.b32.xlu0 %v1700, 32
        %v1740 = vpop.permute.xlu0 %1739
        %1763 = vrot.lane.b32.xlu0 %v1478, 48
        %v1764 = vpop.permute.xlu0 %1763
        %1765 = vrot.lane.b32.xlu0 %v1479, 48
        %v1766 = vpop.permute.xlu0 %1765
        %1767 = vrot.lane.b32.xlu0 %v1481, 48
        %v1768 = vpop.permute.xlu0 %1767
        %1769 = vrot.lane.b32.xlu0 %v1482, 48
        %v1770 = vpop.permute.xlu0 %1769
        %1771 = vrot.lane.b32.xlu0 %v1484, 48
        %v1772 = vpop.permute.xlu0 %1771
        %1773 = vrot.lane.b32.xlu0 %v1485, 48
        %v1774 = vpop.permute.xlu0 %1773
        %1775 = vrot.lane.b32.xlu0 %v1487, 48
        %v1776 = vpop.permute.xlu0 %1775
        %1777 = vrot.lane.b32.xlu0 %v1488, 48
        %v1778 = vpop.permute.xlu0 %1777
        %1779 = vrot.lane.b32.xlu0 %v1490, 48
        %v1780 = vpop.permute.xlu0 %1779
        %1781 = vrot.lane.b32.xlu0 %v1491, 48
        %v1782 = vpop.permute.xlu0 %1781
        %1783 = vrot.lane.b32.xlu0 %v1493, 48
        %v1784 = vpop.permute.xlu0 %1783
        %1785 = vrot.lane.b32.xlu0 %v1494, 48
        %v1786 = vpop.permute.xlu0 %1785
        %1787 = vrot.lane.b32.xlu0 %v1496, 48
        %v1788 = vpop.permute.xlu0 %1787
        %1789 = vrot.lane.b32.xlu0 %v1497, 48
        %v1790 = vpop.permute.xlu0 %1789
        %1791 = vrot.lane.b32.xlu0 %v1499, 48
        %v1792 = vpop.permute.xlu0 %1791
        %1793 = vrot.lane.b32.xlu0 %v1500, 48
        %v1794 = vpop.permute.xlu0 %1793
        %1795 = vrot.lane.b32.xlu0 %v1502, 48
        %v1796 = vpop.permute.xlu0 %1795
        %1797 = vrot.lane.b32.xlu0 %v1503, 48
        %v1798 = vpop.permute.xlu0 %1797
        %1799 = vrot.lane.b32.xlu0 %v1505, 48
        %v1800 = vpop.permute.xlu0 %1799
        %1801 = vrot.lane.b32.xlu0 %v1506, 48
        %v1802 = vpop.permute.xlu0 %1801
        %v1824 = vrot.slane %v1505, 1
        %v1825 = vrot.slane %v1506, 1
        %v1826 = vsel %vm383, %v1824, %v1825
        %v1827 = vrot.slane %v1507, 1
        %v1828 = vsel %vm383, %v1825, %v1827
        %1829 = vrot.lane.b32.xlu0 %v1548, 64
        %v1830 = vpop.permute.xlu0 %1829
        %1831 = vrot.lane.b32.xlu0 %v1550, 64
        %v1832 = vpop.permute.xlu0 %1831
        %1833 = vrot.lane.b32.xlu0 %v1553, 64
        %v1834 = vpop.permute.xlu0 %1833
        %1835 = vrot.lane.b32.xlu0 %v1555, 64
        %v1836 = vpop.permute.xlu0 %1835
        %1837 = vrot.lane.b32.xlu0 %v1558, 64
        %v1838 = vpop.permute.xlu0 %1837
        %1839 = vrot.lane.b32.xlu0 %v1560, 64
        %v1840 = vpop.permute.xlu0 %1839
        %1841 = vrot.lane.b32.xlu0 %v1563, 64
        %v1842 = vpop.permute.xlu0 %1841
        %1843 = vrot.lane.b32.xlu0 %v1565, 64
        %v1844 = vpop.permute.xlu0 %1843
        %1845 = vrot.lane.b32.xlu0 %v1568, 64
        %v1846 = vpop.permute.xlu0 %1845
        %1847 = vrot.lane.b32.xlu0 %v1570, 64
        %v1848 = vpop.permute.xlu0 %1847
        %1849 = vrot.lane.b32.xlu0 %v1573, 64
        %v1850 = vpop.permute.xlu0 %1849
        %1851 = vrot.lane.b32.xlu0 %v1575, 64
        %v1852 = vpop.permute.xlu0 %1851
        %1853 = vrot.lane.b32.xlu0 %v1578, 64
        %v1854 = vpop.permute.xlu0 %1853
        %1855 = vrot.lane.b32.xlu0 %v1580, 64
        %v1856 = vpop.permute.xlu0 %1855
        %1857 = vrot.lane.b32.xlu0 %v1583, 64
        %v1858 = vpop.permute.xlu0 %1857
        %1859 = vrot.lane.b32.xlu0 %v1585, 64
        %v1860 = vpop.permute.xlu0 %1859
        %1861 = vrot.lane.b32.xlu0 %v1588, 64
        %v1862 = vpop.permute.xlu0 %1861
        %1863 = vrot.lane.b32.xlu0 %v1590, 64
        %v1864 = vpop.permute.xlu0 %1863
        %1865 = vrot.lane.b32.xlu0 %v1826, 64
        %v1866 = vpop.permute.xlu0 %1865
        %1867 = vrot.lane.b32.xlu0 %v1828, 64
        %v1868 = vpop.permute.xlu0 %1867
        %v1889 = vrot.slane %v1505, 2
        %v1890 = vrot.slane %v1506, 2
        %v1891 = vsel %vm494, %v1889, %v1890
        %v1892 = vrot.slane %v1507, 2
        %v1893 = vsel %vm494, %v1890, %v1892
        %1894 = vrot.lane.b32.xlu0 %v1658, 80
        %v1895 = vpop.permute.xlu0 %1894
        %1896 = vrot.lane.b32.xlu0 %v1660, 80
        %v1897 = vpop.permute.xlu0 %1896
        %1898 = vrot.lane.b32.xlu0 %v1663, 80
        %v1899 = vpop.permute.xlu0 %1898
        %1900 = vrot.lane.b32.xlu0 %v1665, 80
        %v1901 = vpop.permute.xlu0 %1900
        %1902 = vrot.lane.b32.xlu0 %v1668, 80
        %v1903 = vpop.permute.xlu0 %1902
        %1904 = vrot.lane.b32.xlu0 %v1670, 80
        %v1905 = vpop.permute.xlu0 %1904
        %1906 = vrot.lane.b32.xlu0 %v1673, 80
        %v1907 = vpop.permute.xlu0 %1906
        %1908 = vrot.lane.b32.xlu0 %v1675, 80
        %v1909 = vpop.permute.xlu0 %1908
        %1910 = vrot.lane.b32.xlu0 %v1678, 80
        %v1911 = vpop.permute.xlu0 %1910
        %1912 = vrot.lane.b32.xlu0 %v1680, 80
        %v1913 = vpop.permute.xlu0 %1912
        %1914 = vrot.lane.b32.xlu0 %v1683, 80
        %v1915 = vpop.permute.xlu0 %1914
        %1916 = vrot.lane.b32.xlu0 %v1685, 80
        %v1917 = vpop.permute.xlu0 %1916
        %1918 = vrot.lane.b32.xlu0 %v1688, 80
        %v1919 = vpop.permute.xlu0 %1918
        %1920 = vrot.lane.b32.xlu0 %v1690, 80
        %v1921 = vpop.permute.xlu0 %1920
        %1922 = vrot.lane.b32.xlu0 %v1693, 80
        %v1923 = vpop.permute.xlu0 %1922
        %1924 = vrot.lane.b32.xlu0 %v1695, 80
        %v1925 = vpop.permute.xlu0 %1924
        %1926 = vrot.lane.b32.xlu0 %v1698, 80
        %v1927 = vpop.permute.xlu0 %1926
        %1928 = vrot.lane.b32.xlu0 %v1700, 80
        %v1929 = vpop.permute.xlu0 %1928
        %1930 = vrot.lane.b32.xlu0 %v1891, 80
        %v1931 = vpop.permute.xlu0 %1930
        %1932 = vrot.lane.b32.xlu0 %v1893, 80
        %v1933 = vpop.permute.xlu0 %1932
        %1956 = vrot.lane.b32.xlu0 %v1481, 96
        %v1957 = vpop.permute.xlu0 %1956
        %1958 = vrot.lane.b32.xlu0 %v1482, 96
        %v1959 = vpop.permute.xlu0 %1958
        %1960 = vrot.lane.b32.xlu0 %v1484, 96
        %v1961 = vpop.permute.xlu0 %1960
        %1962 = vrot.lane.b32.xlu0 %v1485, 96
        %v1963 = vpop.permute.xlu0 %1962
        %1964 = vrot.lane.b32.xlu0 %v1487, 96
        %v1965 = vpop.permute.xlu0 %1964
        %1966 = vrot.lane.b32.xlu0 %v1488, 96
        %v1967 = vpop.permute.xlu0 %1966
        %1968 = vrot.lane.b32.xlu0 %v1490, 96
        %v1969 = vpop.permute.xlu0 %1968
        %1970 = vrot.lane.b32.xlu0 %v1491, 96
        %v1971 = vpop.permute.xlu0 %1970
        %1972 = vrot.lane.b32.xlu0 %v1493, 96
        %v1973 = vpop.permute.xlu0 %1972
        %1974 = vrot.lane.b32.xlu0 %v1494, 96
        %v1975 = vpop.permute.xlu0 %1974
        %1976 = vrot.lane.b32.xlu0 %v1496, 96
        %v1977 = vpop.permute.xlu0 %1976
        %1978 = vrot.lane.b32.xlu0 %v1497, 96
        %v1979 = vpop.permute.xlu0 %1978
        %1980 = vrot.lane.b32.xlu0 %v1499, 96
        %v1981 = vpop.permute.xlu0 %1980
        %1982 = vrot.lane.b32.xlu0 %v1500, 96
        %v1983 = vpop.permute.xlu0 %1982
        %1984 = vrot.lane.b32.xlu0 %v1502, 96
        %v1985 = vpop.permute.xlu0 %1984
        %1986 = vrot.lane.b32.xlu0 %v1503, 96
        %v1987 = vpop.permute.xlu0 %1986
        %1988 = vrot.lane.b32.xlu0 %v1505, 96
        %v1989 = vpop.permute.xlu0 %1988
        %1990 = vrot.lane.b32.xlu0 %v1506, 96
        %v1991 = vpop.permute.xlu0 %1990
        %1992 = vrot.lane.b32.xlu0 %v1508, 96
        %v1993 = vpop.permute.xlu0 %1992
        %1994 = vrot.lane.b32.xlu0 %v1509, 96
        %v1995 = vpop.permute.xlu0 %1994
        %v2017 = vrot.slane %v1508, 1
        %v2018 = vrot.slane %v1509, 1
        %v2019 = vsel %vm383, %v2017, %v2018
        %v2020 = vrot.slane %v1510, 1
        %v2021 = vsel %vm383, %v2018, %v2020
        %2022 = vrot.lane.b32.xlu0 %v1553, 112
        %v2023 = vpop.permute.xlu0 %2022
        %2024 = vrot.lane.b32.xlu0 %v1555, 112
        %v2025 = vpop.permute.xlu0 %2024
        %2026 = vrot.lane.b32.xlu0 %v1558, 112
        %v2027 = vpop.permute.xlu0 %2026
        %2028 = vrot.lane.b32.xlu0 %v1560, 112
        %v2029 = vpop.permute.xlu0 %2028
        %2030 = vrot.lane.b32.xlu0 %v1563, 112
        %v2031 = vpop.permute.xlu0 %2030
        %2032 = vrot.lane.b32.xlu0 %v1565, 112
        %v2033 = vpop.permute.xlu0 %2032
        %2034 = vrot.lane.b32.xlu0 %v1568, 112
        %v2035 = vpop.permute.xlu0 %2034
        %2036 = vrot.lane.b32.xlu0 %v1570, 112
        %v2037 = vpop.permute.xlu0 %2036
        %2038 = vrot.lane.b32.xlu0 %v1573, 112
        %v2039 = vpop.permute.xlu0 %2038
        %2040 = vrot.lane.b32.xlu0 %v1575, 112
        %v2041 = vpop.permute.xlu0 %2040
        %2042 = vrot.lane.b32.xlu0 %v1578, 112
        %v2043 = vpop.permute.xlu0 %2042
        %2044 = vrot.lane.b32.xlu0 %v1580, 112
        %v2045 = vpop.permute.xlu0 %2044
        %2046 = vrot.lane.b32.xlu0 %v1583, 112
        %v2047 = vpop.permute.xlu0 %2046
        %2048 = vrot.lane.b32.xlu0 %v1585, 112
        %v2049 = vpop.permute.xlu0 %2048
        %2050 = vrot.lane.b32.xlu0 %v1588, 112
        %v2051 = vpop.permute.xlu0 %2050
        %2052 = vrot.lane.b32.xlu0 %v1590, 112
        %v2053 = vpop.permute.xlu0 %2052
        %2054 = vrot.lane.b32.xlu0 %v1826, 112
        %v2055 = vpop.permute.xlu0 %2054
        %2056 = vrot.lane.b32.xlu0 %v1828, 112
        %v2057 = vpop.permute.xlu0 %2056
        %2058 = vrot.lane.b32.xlu0 %v2019, 112
        %v2059 = vpop.permute.xlu0 %2058
        %2060 = vrot.lane.b32.xlu0 %v2021, 112
        %v2061 = vpop.permute.xlu0 %2060
        %v2082 = vrot.slane %v1508, 2
        %v2083 = vrot.slane %v1509, 2
        %v2084 = vsel %vm494, %v2082, %v2083
        %v2085 = vrot.slane %v1510, 2
        %v2086 = vsel %vm494, %v2083, %v2085
        %v2087 = vsel %vm1420, %v1475, %v1592
        %v2088 = vsel %vm1420, %v1476, %v1594
        %v2089 = vsel %vm1420, %v1478, %v1596
        %v2090 = vsel %vm1420, %v1479, %v1598
        %v2091 = vsel %vm1420, %v1481, %v1600
        %v2092 = vsel %vm1420, %v1482, %v1602
        %v2093 = vsel %vm1420, %v1484, %v1604
        %v2094 = vsel %vm1420, %v1485, %v1606
        %v2095 = vsel %vm1420, %v1487, %v1608
        %v2096 = vsel %vm1420, %v1488, %v1610
        %v2097 = vsel %vm1420, %v1490, %v1612
        %v2098 = vsel %vm1420, %v1491, %v1614
        %v2099 = vsel %vm1420, %v1493, %v1616
        %v2100 = vsel %vm1420, %v1494, %v1618
        %v2101 = vsel %vm1420, %v1496, %v1620
        %v2102 = vsel %vm1420, %v1497, %v1622
        %v2103 = vsel %vm1420, %v1499, %v1624
        %v2104 = vsel %vm1420, %v1500, %v1626
        %v2105 = vsel %vm1420, %v1502, %v1628
        %v2106 = vsel %vm1420, %v1503, %v1630
        %vm2107 = vcmask 261120
        %v2108 = vsel %vm2107, %v2087, %v1702
        %v2109 = vsel %vm2107, %v2088, %v1704
        %v2110 = vsel %vm2107, %v2089, %v1706
        %v2111 = vsel %vm2107, %v2090, %v1708
        %v2112 = vsel %vm2107, %v2091, %v1710
        %v2113 = vsel %vm2107, %v2092, %v1712
        %v2114 = vsel %vm2107, %v2093, %v1714
        %v2115 = vsel %vm2107, %v2094, %v1716
        %v2116 = vsel %vm2107, %v2095, %v1718
        %v2117 = vsel %vm2107, %v2096, %v1720
        %v2118 = vsel %vm2107, %v2097, %v1722
        %v2119 = vsel %vm2107, %v2098, %v1724
        %v2120 = vsel %vm2107, %v2099, %v1726
        %v2121 = vsel %vm2107, %v2100, %v1728
        %v2122 = vsel %vm2107, %v2101, %v1730
        %v2123 = vsel %vm2107, %v2102, %v1732
        %v2124 = vsel %vm2107, %v2103, %v1734
        %v2125 = vsel %vm2107, %v2104, %v1736
        %v2126 = vsel %vm2107, %v2105, %v1738
        %v2127 = vsel %vm2107, %v2106, %v1740
        %vm2128 = vcmask 392192
        %v2129 = vsel %vm2128, %v2108, %v1764
        %v2130 = vsel %vm2128, %v2109, %v1766
        %v2131 = vsel %vm2128, %v2110, %v1768
        %v2132 = vsel %vm2128, %v2111, %v1770
        %v2133 = vsel %vm2128, %v2112, %v1772
        %v2134 = vsel %vm2128, %v2113, %v1774
        %v2135 = vsel %vm2128, %v2114, %v1776
        %v2136 = vsel %vm2128, %v2115, %v1778
        %v2137 = vsel %vm2128, %v2116, %v1780
        %v2138 = vsel %vm2128, %v2117, %v1782
        %v2139 = vsel %vm2128, %v2118, %v1784
        %v2140 = vsel %vm2128, %v2119, %v1786
        %v2141 = vsel %vm2128, %v2120, %v1788
        %v2142 = vsel %vm2128, %v2121, %v1790
        %v2143 = vsel %vm2128, %v2122, %v1792
        %v2144 = vsel %vm2128, %v2123, %v1794
        %v2145 = vsel %vm2128, %v2124, %v1796
        %v2146 = vsel %vm2128, %v2125, %v1798
        %v2147 = vsel %vm2128, %v2126, %v1800
        %v2148 = vsel %vm2128, %v2127, %v1802
        %vm2149 = vcmask 523264
        %v2150 = vsel %vm2149, %v2129, %v1830
        %v2151 = vsel %vm2149, %v2130, %v1832
        %v2152 = vsel %vm2149, %v2131, %v1834
        %v2153 = vsel %vm2149, %v2132, %v1836
        %v2154 = vsel %vm2149, %v2133, %v1838
        %v2155 = vsel %vm2149, %v2134, %v1840
        %v2156 = vsel %vm2149, %v2135, %v1842
        %v2157 = vsel %vm2149, %v2136, %v1844
        %v2158 = vsel %vm2149, %v2137, %v1846
        %v2159 = vsel %vm2149, %v2138, %v1848
        %v2160 = vsel %vm2149, %v2139, %v1850
        %v2161 = vsel %vm2149, %v2140, %v1852
        %v2162 = vsel %vm2149, %v2141, %v1854
        %v2163 = vsel %vm2149, %v2142, %v1856
        %v2164 = vsel %vm2149, %v2143, %v1858
        %v2165 = vsel %vm2149, %v2144, %v1860
        %v2166 = vsel %vm2149, %v2145, %v1862
        %v2167 = vsel %vm2149, %v2146, %v1864
        %v2168 = vsel %vm2149, %v2147, %v1866
        %v2169 = vsel %vm2149, %v2148, %v1868
        %vm2170 = vcmask 654336
        %v2171 = vsel %vm2170, %v2150, %v1895
        %v2172 = vsel %vm2170, %v2151, %v1897
        %v2173 = vsel %vm2170, %v2152, %v1899
        %v2174 = vsel %vm2170, %v2153, %v1901
        %v2175 = vsel %vm2170, %v2154, %v1903
        %v2176 = vsel %vm2170, %v2155, %v1905
        %v2177 = vsel %vm2170, %v2156, %v1907
        %v2178 = vsel %vm2170, %v2157, %v1909
        %v2179 = vsel %vm2170, %v2158, %v1911
        %v2180 = vsel %vm2170, %v2159, %v1913
        %v2181 = vsel %vm2170, %v2160, %v1915
        %v2182 = vsel %vm2170, %v2161, %v1917
        %v2183 = vsel %vm2170, %v2162, %v1919
        %v2184 = vsel %vm2170, %v2163, %v1921
        %v2185 = vsel %vm2170, %v2164, %v1923
        %v2186 = vsel %vm2170, %v2165, %v1925
        %v2187 = vsel %vm2170, %v2166, %v1927
        %v2188 = vsel %vm2170, %v2167, %v1929
        %v2189 = vsel %vm2170, %v2168, %v1931
        %v2190 = vsel %vm2170, %v2169, %v1933
        %vm2191 = vcmask 785408
        %v2192 = vsel %vm2191, %v2171, %v1957
        %v2193 = vsel %vm2191, %v2172, %v1959
        %v2194 = vsel %vm2191, %v2173, %v1961
        %v2195 = vsel %vm2191, %v2174, %v1963
        %v2196 = vsel %vm2191, %v2175, %v1965
        %v2197 = vsel %vm2191, %v2176, %v1967
        %v2198 = vsel %vm2191, %v2177, %v1969
        %v2199 = vsel %vm2191, %v2178, %v1971
        %v2200 = vsel %vm2191, %v2179, %v1973
        %v2201 = vsel %vm2191, %v2180, %v1975
        %v2202 = vsel %vm2191, %v2181, %v1977
        %v2203 = vsel %vm2191, %v2182, %v1979
        %v2204 = vsel %vm2191, %v2183, %v1981
        %v2205 = vsel %vm2191, %v2184, %v1983
        %v2206 = vsel %vm2191, %v2185, %v1985
        %v2207 = vsel %vm2191, %v2186, %v1987
        %v2208 = vsel %vm2191, %v2187, %v1989
        %v2209 = vsel %vm2191, %v2188, %v1991
        %v2210 = vsel %vm2191, %v2189, %v1993
        %v2211 = vsel %vm2191, %v2190, %v1995
        %vm2212 = vcmask 916480
        %v2213 = vsel %vm2212, %v2192, %v2023
        %v2214 = vsel %vm2212, %v2193, %v2025
        %v2215 = vsel %vm2212, %v2194, %v2027
        %v2216 = vsel %vm2212, %v2195, %v2029
        %v2217 = vsel %vm2212, %v2196, %v2031
        %v2218 = vsel %vm2212, %v2197, %v2033
        %v2219 = vsel %vm2212, %v2198, %v2035
        %v2220 = vsel %vm2212, %v2199, %v2037
        %v2221 = vsel %vm2212, %v2200, %v2039
        %v2222 = vsel %vm2212, %v2201, %v2041
        %v2223 = vsel %vm2212, %v2202, %v2043
        %v2224 = vsel %vm2212, %v2203, %v2045
        %v2225 = vsel %vm2212, %v2204, %v2047
        %v2226 = vsel %vm2212, %v2205, %v2049
        %v2227 = vsel %vm2212, %v2206, %v2051
        %v2228 = vsel %vm2212, %v2207, %v2053
        %v2229 = vsel %vm2212, %v2208, %v2055
        %v2230 = vsel %vm2212, %v2209, %v2057
        %v2231 = vsel %vm2212, %v2210, %v2059
        %v2232 = vsel %vm2212, %v2211, %v2061
        %v2233 = vld [vmem:[%s3] sm:$0xff]
        %v2234 = vld [vmem:[%s3 + $0x8] sm:$0xff]
        %v2235 = vld [vmem:[%s3 + $0x10] sm:$0xff]
        %v2236 = vld [vmem:[%s3 + $0x18] sm:$0xff]
        %v2237 = vld [vmem:[%s3 + $0x20] sm:$0xff]
        %v2238 = vld [vmem:[%s3 + $0x28] sm:$0xff]
        %v2239 = vld [vmem:[%s3 + $0x30] sm:$0xff]
        %v2240 = vld [vmem:[%s3 + $0x38] sm:$0xff]
        %v2241 = vld [vmem:[%s3 + $0x40] sm:$0xff]
        %v2242 = vld [vmem:[%s3 + $0x48] sm:$0xff]
        %v2243 = vld [vmem:[%s3 + $0x50] sm:$0xff]
        %v2244 = vld [vmem:[%s3 + $0x58] sm:$0xff]
        %v2245 = vld [vmem:[%s3 + $0x60] sm:$0xff]
        %v2246 = vld [vmem:[%s3 + $0x68] sm:$0xff]
        %v2247 = vld [vmem:[%s3 + $0x70] sm:$0xff]
        %v2248 = vld [vmem:[%s3 + $0x78] sm:$0xff]
        %v2249 = vld [vmem:[%s3 + $0x80] sm:$0xff]
        %v2250 = vld [vmem:[%s3 + $0x88] sm:$0xff]
        %v2251 = vld [vmem:[#allocation6] sm:$0x1]
        %v2253 = vlaneseq
        %v2254 = vshrl.u32 %v2253, 7
        %v2255 = vsub.s32 0, %v2254
        %v2256 = vrot.slane %v2251, %v2255
        %v2258 = vsel %vm1420, %v1663, 0
        %v2260 = vsel %vm1420, %v1665, 0
        %v2262 = vsel %vm1420, %v1668, 0
        %v2264 = vsel %vm1420, %v1670, 0
        %v2266 = vsel %vm1420, %v1673, 0
        %v2268 = vsel %vm1420, %v1675, 0
        %v2270 = vsel %vm1420, %v1678, 0
        %v2272 = vsel %vm1420, %v1680, 0
        %v2274 = vsel %vm1420, %v1683, 0
        %v2276 = vsel %vm1420, %v1685, 0
        %v2278 = vsel %vm1420, %v1688, 0
        %v2280 = vsel %vm1420, %v1690, 0
        %v2282 = vsel %vm1420, %v1693, 0
        %v2284 = vsel %vm1420, %v1695, 0
        %v2286 = vsel %vm1420, %v1698, 0
        %v2288 = vsel %vm1420, %v1700, 0
        %v2290 = vsel %vm1420, %v1891, 0
        %v2292 = vsel %vm1420, %v1893, 0
        %v2294 = vsel %vm1420, %v2084, 0
        %v2296 = vsel %vm1420, %v2086, 0
        %2298 = vmatprep.subr.mxu0 0.0
        %2299 = vmatpush1.msra.mxu0 %v2233
        %2300 = vmatprep.subr.mxu0 0.0
        %2301 = vmatpush1.msra.mxu0 %v2234
        %2302 = vmatprep.subr.mxu0 0.0
        %2303 = vmatpush1.msra.mxu0 %v2235
        %2304 = vmatprep.subr.mxu0 0.0
        %2305 = vmatpush1.msra.mxu0 %v2236
        %2306 = vmatprep.subr.mxu0 0.0
        %2307 = vmatpush1.msra.mxu0 %v2237
        %2308 = vmatprep.subr.mxu0 0.0
        %2309 = vmatpush1.msra.mxu0 %v2238
        %2310 = vmatprep.subr.mxu0 0.0
        %2311 = vmatpush1.msra.mxu0 %v2239
        %2312 = vmatprep.subr.mxu0 0.0
        %2313 = vmatpush1.msra.mxu0 %v2240
        %2314 = vmatprep.subr.mxu0 0.0
        %2315 = vmatpush1.msra.mxu0 %v2241
        %2316 = vmatprep.subr.mxu0 0.0
        %2317 = vmatpush1.msra.mxu0 %v2242
        %2318 = vmatprep.subr.mxu0 0.0
        %2319 = vmatpush1.msra.mxu0 %v2243
        %2320 = vmatprep.subr.mxu0 0.0
        %2321 = vmatpush1.msra.mxu0 %v2244
        %2322 = vmatprep.subr.mxu0 0.0
        %2323 = vmatpush1.msra.mxu0 %v2245
        %2324 = vmatprep.subr.mxu0 0.0
        %2325 = vmatpush1.msra.mxu0 %v2246
        %2326 = vmatprep.subr.mxu0 0.0
        %2327 = vmatpush1.msra.mxu0 %v2247
        %2328 = vmatprep.subr.mxu0 0.0
        %2329 = vmatpush1.msra.mxu0 %v2248
        %2330 = vmatprep.subr.mxu0 0.0
        %2331 = vmatpush1.msra.mxu0 %v2249
        %2332 = vmatprep.subr.mxu0 0.0
        %2333 = vmatpush1.msra.mxu0 %v2250
        %2334 = vmatprep.subr.mxu0 0.0
        %2335 = vmatpush1.msra.mxu0 0.0
        %2336 = vmatprep.subr.mxu0 0.0
        %2337 = vmatpush1.msra.mxu0 0.0
        %2338 = vmatprep.subr.mxu0 0.0
        %2339 = vmatpush1.msra.mxu0 0.0
        %2340 = vmatprep.subr.mxu0 0.0
        %2341 = vmatpush1.msra.mxu0 0.0
        %2342 = vmatprep.subr.mxu0 0.0
        %2343 = vmatpush1.msra.mxu0 0.0
        %2344 = vmatprep.subr.mxu0 0.0
        %2345 = vmatpush1.msra.mxu0 0.0
        %2346 = vmatprep.subr.mxu0 0.0
        %2347 = vmatpush1.msra.mxu0 0.0
        %2348 = vmatprep.subr.mxu0 0.0
        %2349 = vmatpush1.msra.mxu0 0.0
        %2350 = vmatprep.subr.mxu0 0.0
        %2351 = vmatpush1.msra.mxu0 0.0
        %2352 = vmatprep.subr.mxu0 0.0
        %2353 = vmatpush1.msra.mxu0 0.0
        %2354 = vmatprep.subr.mxu0 0.0
        %2355 = vmatpush1.msra.mxu0 0.0
        %2356 = vmatprep.subr.mxu0 0.0
        %2357 = vmatpush1.msra.mxu0 0.0
        %2358 = vmatprep.subr.mxu0 0.0
        %2359 = vmatpush1.msra.mxu0 0.0
        %2360 = vmatprep.subr.mxu0 0.0
        %2361 = vmatpush1.msra.mxu0 0.0
        %2362 = vmatprep.mubr.f32.mxu0 %v2258
        %2363 = vmatmul.mubr.f32.gmra.mrb[0].mxu0 %v2213
        %v2364 = vpop.f32.mrb[0].mxu0
        %v2365 = vadd.f32 %v2256, %v2364
        %v2366 = vpop.f32.mrb[0].mxu0
        %2367 = vmatprep.mubr.f32.mxu0 %v2260
        %2368 = vmatmul.mubr.f32.gmra.mrb[0].mxu0 %v2214
        %v2369 = vpop.f32.mrb[0].mxu0
        %v2370 = vadd.f32 %v2256, %v2369
        %v2371 = vpop.f32.mrb[0].mxu0
        %2372 = vmatprep.mubr.f32.mxu0 %v2262
        %2373 = vmatmul.mubr.f32.gmra.mrb[0].mxu0 %v2215
        %v2374 = vpop.f32.mrb[0].mxu0
        %v2375 = vadd.f32 %v2256, %v2374
        %v2376 = vpop.f32.mrb[0].mxu0
        %2377 = vmatprep.mubr.f32.mxu0 %v2264
        %2378 = vmatmul.mubr.f32.gmra.mrb[0].mxu0 %v2216
        %v2379 = vpop.f32.mrb[0].mxu0
        %v2380 = vadd.f32 %v2256, %v2379
        %v2381 = vpop.f32.mrb[0].mxu0
        %2382 = vmatprep.mubr.f32.mxu0 %v2266
        %2383 = vmatmul.mubr.f32.gmra.mrb[0].mxu0 %v2217
        %v2384 = vpop.f32.mrb[0].mxu0
        %v2385 = vadd.f32 %v2256, %v2384
        %v2386 = vpop.f32.mrb[0].mxu0
        %2387 = vmatprep.mubr.f32.mxu0 %v2268
        %2388 = vmatmul.mubr.f32.gmra.mrb[0].mxu0 %v2218
        %v2389 = vpop.f32.mrb[0].mxu0
        %v2390 = vadd.f32 %v2256, %v2389
        %v2391 = vpop.f32.mrb[0].mxu0
        %2392 = vmatprep.mubr.f32.mxu0 %v2270
        %2393 = vmatmul.mubr.f32.gmra.mrb[0].mxu0 %v2219
        %v2394 = vpop.f32.mrb[0].mxu0
        %v2395 = vadd.f32 %v2256, %v2394
        %v2396 = vpop.f32.mrb[0].mxu0
        %2397 = vmatprep.mubr.f32.mxu0 %v2272
        %2398 = vmatmul.mubr.f32.gmra.mrb[0].mxu0 %v2220
        %v2399 = vpop.f32.mrb[0].mxu0
        %v2400 = vadd.f32 %v2256, %v2399
        %v2401 = vpop.f32.mrb[0].mxu0
        %2402 = vmatprep.mubr.f32.mxu0 %v2274
        %2403 = vmatmul.mubr.f32.gmra.mrb[0].mxu0 %v2221
        %v2404 = vpop.f32.mrb[0].mxu0
        %v2405 = vadd.f32 %v2256, %v2404
        %v2406 = vpop.f32.mrb[0].mxu0
        %2407 = vmatprep.mubr.f32.mxu0 %v2276
        %2408 = vmatmul.mubr.f32.gmra.mrb[0].mxu0 %v2222
        %v2409 = vpop.f32.mrb[0].mxu0
        %v2410 = vadd.f32 %v2256, %v2409
        %v2411 = vpop.f32.mrb[0].mxu0
        %2412 = vmatprep.mubr.f32.mxu0 %v2278
        %2413 = vmatmul.mubr.f32.gmra.mrb[0].mxu0 %v2223
        %v2414 = vpop.f32.mrb[0].mxu0
        %v2415 = vadd.f32 %v2256, %v2414
        %v2416 = vpop.f32.mrb[0].mxu0
        %2417 = vmatprep.mubr.f32.mxu0 %v2280
        %2418 = vmatmul.mubr.f32.gmra.mrb[0].mxu0 %v2224
        %v2419 = vpop.f32.mrb[0].mxu0
        %v2420 = vadd.f32 %v2256, %v2419
        %v2421 = vpop.f32.mrb[0].mxu0
        %2422 = vmatprep.mubr.f32.mxu0 %v2282
        %2423 = vmatmul.mubr.f32.gmra.mrb[0].mxu0 %v2225
        %v2424 = vpop.f32.mrb[0].mxu0
        %v2425 = vadd.f32 %v2256, %v2424
        %v2426 = vpop.f32.mrb[0].mxu0
        %2427 = vmatprep.mubr.f32.mxu0 %v2284
        %2428 = vmatmul.mubr.f32.gmra.mrb[0].mxu0 %v2226
        %v2429 = vpop.f32.mrb[0].mxu0
        %v2430 = vadd.f32 %v2256, %v2429
        %v2431 = vpop.f32.mrb[0].mxu0
        %2432 = vmatprep.mubr.f32.mxu0 %v2286
        %2433 = vmatmul.mubr.f32.gmra.mrb[0].mxu0 %v2227
        %v2434 = vpop.f32.mrb[0].mxu0
        %v2435 = vadd.f32 %v2256, %v2434
        %v2436 = vpop.f32.mrb[0].mxu0
        %2437 = vmatprep.mubr.f32.mxu0 %v2288
        %2438 = vmatmul.mubr.f32.gmra.mrb[0].mxu0 %v2228
        %v2439 = vpop.f32.mrb[0].mxu0
        %v2440 = vadd.f32 %v2256, %v2439
        %v2441 = vpop.f32.mrb[0].mxu0
        %2442 = vmatprep.mubr.f32.mxu0 %v2290
        %2443 = vmatmul.mubr.f32.gmra.mrb[0].mxu0 %v2229
        %v2444 = vpop.f32.mrb[0].mxu0
        %v2445 = vadd.f32 %v2256, %v2444
        %v2446 = vpop.f32.mrb[0].mxu0
        %2447 = vmatprep.mubr.f32.mxu0 %v2292
        %2448 = vmatmul.mubr.f32.gmra.mrb[0].mxu0 %v2230
        %v2449 = vpop.f32.mrb[0].mxu0
        %v2450 = vadd.f32 %v2256, %v2449
        %v2451 = vpop.f32.mrb[0].mxu0
        %2452 = vmatprep.mubr.f32.mxu0 %v2294
        %2453 = vmatmul.mubr.f32.gmra.mrb[0].mxu0 %v2231
        %v2454 = vpop.f32.mrb[0].mxu0
        %v2455 = vadd.f32 %v2256, %v2454
        %v2456 = vpop.f32.mrb[0].mxu0
        %2457 = vmatprep.mubr.f32.mxu0 %v2296
        %2458 = vmatmul.mubr.f32.gmra.mrb[0].mxu0 %v2232
        %v2459 = vpop.f32.mrb[0].mxu0
        %v2460 = vadd.f32 %v2256, %v2459
        %v2461 = vpop.f32.mrb[0].mxu0
        %2462 = vdwg.mxu0
        %v2463 = vmax.f32 %v2365, 0.0
        %v2464 = vmax.f32 %v2370, 0.0
        %v2465 = vmax.f32 %v2375, 0.0
        %v2466 = vmax.f32 %v2380, 0.0
        %v2467 = vmax.f32 %v2385, 0.0
        %v2468 = vmax.f32 %v2390, 0.0
        %v2469 = vmax.f32 %v2395, 0.0
        %v2470 = vmax.f32 %v2400, 0.0
        %v2471 = vmax.f32 %v2405, 0.0
        %v2472 = vmax.f32 %v2410, 0.0
        %v2473 = vmax.f32 %v2415, 0.0
        %v2474 = vmax.f32 %v2420, 0.0
        %v2475 = vmax.f32 %v2425, 0.0
        %v2476 = vmax.f32 %v2430, 0.0
        %v2477 = vmax.f32 %v2435, 0.0
        %v2478 = vmax.f32 %v2440, 0.0
        %v2479 = vmax.f32 %v2445, 0.0
        %v2480 = vmax.f32 %v2450, 0.0
        %v2481 = vmax.f32 %v2455, 0.0
        %v2482 = vmax.f32 %v2460, 0.0
        %v2483 = vmax.f32 %v2463, %v2465
        %v2484 = vmax.f32 %v2464, %v2466
        %v2485 = vmax.f32 %v2467, %v2469
        %v2486 = vmax.f32 %v2468, %v2470
        %v2487 = vmax.f32 %v2471, %v2473
        %v2488 = vmax.f32 %v2472, %v2474
        %v2489 = vmax.f32 %v2475, %v2477
        %v2490 = vmax.f32 %v2476, %v2478
        %v2491 = vmax.f32 %v2479, %v2481
        %v2492 = vmax.f32 %v2480, %v2482
        %v2503 = vcombine.high %v2483, %v2483
        %v2505 = vunpack.c.l.s4 1983009808
        %v2506 = vunpack.c.0.s8 %v2505
        %v2507 = vlaneseq
        %v2508 = vshrl.u32 %v2507, 7
        %v2509 = vsub.s32 %v2506, %v2508
        %v2510 = vrot.slane %v2483, %v2509
        %v2512 = vunpack.c.l.s4 1983009808
        %v2513 = vunpack.c.0.s8 %v2512
        %v2514 = vlaneseq
        %v2515 = vshrl.u32 %v2514, 7
        %v2516 = vsub.s32 %v2513, %v2515
        %v2517 = vrot.slane %v2503, %v2516
        %v2518 = vcombine.high %v2510, %v2510
        %v2519 = vcombine.high %v2517, %v2517
        %v2520 = vcombine.high %v2484, %v2484
        %v2522 = vunpack.c.l.s4 1983009808
        %v2523 = vunpack.c.0.s8 %v2522
        %v2524 = vlaneseq
        %v2525 = vshrl.u32 %v2524, 7
        %v2526 = vsub.s32 %v2523, %v2525
        %v2527 = vrot.slane %v2484, %v2526
        %v2529 = vunpack.c.l.s4 1983009808
        %v2530 = vunpack.c.0.s8 %v2529
        %v2531 = vlaneseq
        %v2532 = vshrl.u32 %v2531, 7
        %v2533 = vsub.s32 %v2530, %v2532
        %v2534 = vrot.slane %v2520, %v2533
        %v2535 = vcombine.high %v2527, %v2527
        %v2536 = vcombine.high %v2534, %v2534
        %v2537 = vcombine.high %v2485, %v2485
        %v2539 = vunpack.c.l.s4 1983009808
        %v2540 = vunpack.c.0.s8 %v2539
        %v2541 = vlaneseq
        %v2542 = vshrl.u32 %v2541, 7
        %v2543 = vsub.s32 %v2540, %v2542
        %v2544 = vrot.slane %v2485, %v2543
        %v2546 = vunpack.c.l.s4 1983009808
        %v2547 = vunpack.c.0.s8 %v2546
        %v2548 = vlaneseq
        %v2549 = vshrl.u32 %v2548, 7
        %v2550 = vsub.s32 %v2547, %v2549
        %v2551 = vrot.slane %v2537, %v2550
        %v2552 = vcombine.high %v2544, %v2544
        %v2553 = vcombine.high %v2551, %v2551
        %v2554 = vcombine.high %v2486, %v2486
        %v2556 = vunpack.c.l.s4 1983009808
        %v2557 = vunpack.c.0.s8 %v2556
        %v2558 = vlaneseq
        %v2559 = vshrl.u32 %v2558, 7
        %v2560 = vsub.s32 %v2557, %v2559
        %v2561 = vrot.slane %v2486, %v2560
        %v2563 = vunpack.c.l.s4 1983009808
        %v2564 = vunpack.c.0.s8 %v2563
        %v2565 = vlaneseq
        %v2566 = vshrl.u32 %v2565, 7
        %v2567 = vsub.s32 %v2564, %v2566
        %v2568 = vrot.slane %v2554, %v2567
        %v2569 = vcombine.high %v2561, %v2561
        %v2570 = vcombine.high %v2568, %v2568
        %v2571 = vcombine.high %v2487, %v2487
        %v2573 = vunpack.c.l.s4 1983009808
        %v2574 = vunpack.c.0.s8 %v2573
        %v2575 = vlaneseq
        %v2576 = vshrl.u32 %v2575, 7
        %v2577 = vsub.s32 %v2574, %v2576
        %v2578 = vrot.slane %v2487, %v2577
        %v2580 = vunpack.c.l.s4 1983009808
        %v2581 = vunpack.c.0.s8 %v2580
        %v2582 = vlaneseq
        %v2583 = vshrl.u32 %v2582, 7
        %v2584 = vsub.s32 %v2581, %v2583
        %v2585 = vrot.slane %v2571, %v2584
        %v2586 = vcombine.high %v2578, %v2578
        %v2587 = vcombine.high %v2585, %v2585
        %v2588 = vcombine.high %v2488, %v2488
        %v2590 = vunpack.c.l.s4 1983009808
        %v2591 = vunpack.c.0.s8 %v2590
        %v2592 = vlaneseq
        %v2593 = vshrl.u32 %v2592, 7
        %v2594 = vsub.s32 %v2591, %v2593
        %v2595 = vrot.slane %v2488, %v2594
        %v2597 = vunpack.c.l.s4 1983009808
        %v2598 = vunpack.c.0.s8 %v2597
        %v2599 = vlaneseq
        %v2600 = vshrl.u32 %v2599, 7
        %v2601 = vsub.s32 %v2598, %v2600
        %v2602 = vrot.slane %v2588, %v2601
        %v2603 = vcombine.high %v2595, %v2595
        %v2604 = vcombine.high %v2602, %v2602
        %v2605 = vcombine.high %v2489, %v2489
        %v2607 = vunpack.c.l.s4 1983009808
        %v2608 = vunpack.c.0.s8 %v2607
        %v2609 = vlaneseq
        %v2610 = vshrl.u32 %v2609, 7
        %v2611 = vsub.s32 %v2608, %v2610
        %v2612 = vrot.slane %v2489, %v2611
        %v2614 = vunpack.c.l.s4 1983009808
        %v2615 = vunpack.c.0.s8 %v2614
        %v2616 = vlaneseq
        %v2617 = vshrl.u32 %v2616, 7
        %v2618 = vsub.s32 %v2615, %v2617
        %v2619 = vrot.slane %v2605, %v2618
        %v2620 = vcombine.high %v2612, %v2612
        %v2621 = vcombine.high %v2619, %v2619
        %v2622 = vcombine.high %v2490, %v2490
        %v2624 = vunpack.c.l.s4 1983009808
        %v2625 = vunpack.c.0.s8 %v2624
        %v2626 = vlaneseq
        %v2627 = vshrl.u32 %v2626, 7
        %v2628 = vsub.s32 %v2625, %v2627
        %v2629 = vrot.slane %v2490, %v2628
        %v2631 = vunpack.c.l.s4 1983009808
        %v2632 = vunpack.c.0.s8 %v2631
        %v2633 = vlaneseq
        %v2634 = vshrl.u32 %v2633, 7
        %v2635 = vsub.s32 %v2632, %v2634
        %v2636 = vrot.slane %v2622, %v2635
        %v2637 = vcombine.high %v2629, %v2629
        %v2638 = vcombine.high %v2636, %v2636
        %v2639 = vcombine.high %v2491, %v2491
        %v2641 = vunpack.c.l.s4 1983009808
        %v2642 = vunpack.c.0.s8 %v2641
        %v2643 = vlaneseq
        %v2644 = vshrl.u32 %v2643, 7
        %v2645 = vsub.s32 %v2642, %v2644
        %v2646 = vrot.slane %v2491, %v2645
        %v2648 = vunpack.c.l.s4 1983009808
        %v2649 = vunpack.c.0.s8 %v2648
        %v2650 = vlaneseq
        %v2651 = vshrl.u32 %v2650, 7
        %v2652 = vsub.s32 %v2649, %v2651
        %v2653 = vrot.slane %v2639, %v2652
        %v2654 = vcombine.high %v2646, %v2646
        %v2655 = vcombine.high %v2653, %v2653
        %v2656 = vcombine.high %v2492, %v2492
        %v2658 = vunpack.c.l.s4 1983009808
        %v2659 = vunpack.c.0.s8 %v2658
        %v2660 = vlaneseq
        %v2661 = vshrl.u32 %v2660, 7
        %v2662 = vsub.s32 %v2659, %v2661
        %v2663 = vrot.slane %v2492, %v2662
        %v2665 = vunpack.c.l.s4 1983009808
        %v2666 = vunpack.c.0.s8 %v2665
        %v2667 = vlaneseq
        %v2668 = vshrl.u32 %v2667, 7
        %v2669 = vsub.s32 %v2666, %v2668
        %v2670 = vrot.slane %v2656, %v2669
        %v2671 = vcombine.high %v2663, %v2663
        %v2672 = vcombine.high %v2670, %v2670
        %v2713 = vrot.slane %v2510, 7
        %v2714 = vrot.slane %v2713, 2
        %v2715 = vrot.slane %v2518, 7
        %v2716 = vrot.slane %v2715, 2
        %v2717 = vrot.slane %v2517, 7
        %v2718 = vrot.slane %v2717, 2
        %v2719 = vrot.slane %v2519, 7
        %v2720 = vrot.slane %v2719, 2
        %v2721 = vrot.slane %v2527, 7
        %v2722 = vrot.slane %v2721, 2
        %v2723 = vrot.slane %v2535, 7
        %v2724 = vrot.slane %v2723, 2
        %v2725 = vrot.slane %v2534, 7
        %v2726 = vrot.slane %v2725, 2
        %v2727 = vrot.slane %v2536, 7
        %v2728 = vrot.slane %v2727, 2
        %v2729 = vrot.slane %v2544, 7
        %v2730 = vrot.slane %v2729, 2
        %v2731 = vrot.slane %v2552, 7
        %v2732 = vrot.slane %v2731, 2
        %v2733 = vrot.slane %v2551, 7
        %v2734 = vrot.slane %v2733, 2
        %v2735 = vrot.slane %v2553, 7
        %v2736 = vrot.slane %v2735, 2
        %v2737 = vrot.slane %v2561, 7
        %v2738 = vrot.slane %v2737, 2
        %v2739 = vrot.slane %v2569, 7
        %v2740 = vrot.slane %v2739, 2
        %v2741 = vrot.slane %v2568, 7
        %v2742 = vrot.slane %v2741, 2
        %v2743 = vrot.slane %v2570, 7
        %v2744 = vrot.slane %v2743, 2
        %v2745 = vrot.slane %v2578, 7
        %v2746 = vrot.slane %v2745, 2
        %v2747 = vrot.slane %v2586, 7
        %v2748 = vrot.slane %v2747, 2
        %v2749 = vrot.slane %v2585, 7
        %v2750 = vrot.slane %v2749, 2
        %v2751 = vrot.slane %v2587, 7
        %v2752 = vrot.slane %v2751, 2
        %v2753 = vrot.slane %v2595, 7
        %v2754 = vrot.slane %v2753, 2
        %v2755 = vrot.slane %v2603, 7
        %v2756 = vrot.slane %v2755, 2
        %v2757 = vrot.slane %v2602, 7
        %v2758 = vrot.slane %v2757, 2
        %v2759 = vrot.slane %v2604, 7
        %v2760 = vrot.slane %v2759, 2
        %v2761 = vrot.slane %v2612, 7
        %v2762 = vrot.slane %v2761, 2
        %v2763 = vrot.slane %v2620, 7
        %v2764 = vrot.slane %v2763, 2
        %v2765 = vrot.slane %v2619, 7
        %v2766 = vrot.slane %v2765, 2
        %v2767 = vrot.slane %v2621, 7
        %v2768 = vrot.slane %v2767, 2
        %v2769 = vrot.slane %v2629, 7
        %v2770 = vrot.slane %v2769, 2
        %v2771 = vrot.slane %v2637, 7
        %v2772 = vrot.slane %v2771, 2
        %v2773 = vrot.slane %v2636, 7
        %v2774 = vrot.slane %v2773, 2
        %v2775 = vrot.slane %v2638, 7
        %v2776 = vrot.slane %v2775, 2
        %v2777 = vrot.slane %v2646, 7
        %v2778 = vrot.slane %v2777, 2
        %v2779 = vrot.slane %v2654, 7
        %v2780 = vrot.slane %v2779, 2
        %v2781 = vrot.slane %v2653, 7
        %v2782 = vrot.slane %v2781, 2
        %v2783 = vrot.slane %v2655, 7
        %v2784 = vrot.slane %v2783, 2
        %v2785 = vrot.slane %v2663, 7
        %v2786 = vrot.slane %v2785, 2
        %v2787 = vrot.slane %v2671, 7
        %v2788 = vrot.slane %v2787, 2
        %v2789 = vrot.slane %v2670, 7
        %v2790 = vrot.slane %v2789, 2
        %v2791 = vrot.slane %v2672, 7
        %v2792 = vrot.slane %v2791, 2
        %v2833 = vmax.f32 %v2510, %v2714
        %v2834 = vmax.f32 %v2518, %v2716
        %v2835 = vmax.f32 %v2517, %v2718
        %v2836 = vmax.f32 %v2519, %v2720
        %v2837 = vmax.f32 %v2527, %v2722
        %v2838 = vmax.f32 %v2535, %v2724
        %v2839 = vmax.f32 %v2534, %v2726
        %v2840 = vmax.f32 %v2536, %v2728
        %v2841 = vmax.f32 %v2544, %v2730
        %v2842 = vmax.f32 %v2552, %v2732
        %v2843 = vmax.f32 %v2551, %v2734
        %v2844 = vmax.f32 %v2553, %v2736
        %v2845 = vmax.f32 %v2561, %v2738
        %v2846 = vmax.f32 %v2569, %v2740
        %v2847 = vmax.f32 %v2568, %v2742
        %v2848 = vmax.f32 %v2570, %v2744
        %v2849 = vmax.f32 %v2578, %v2746
        %v2850 = vmax.f32 %v2586, %v2748
        %v2851 = vmax.f32 %v2585, %v2750
        %v2852 = vmax.f32 %v2587, %v2752
        %v2853 = vmax.f32 %v2595, %v2754
        %v2854 = vmax.f32 %v2603, %v2756
        %v2855 = vmax.f32 %v2602, %v2758
        %v2856 = vmax.f32 %v2604, %v2760
        %v2857 = vmax.f32 %v2612, %v2762
        %v2858 = vmax.f32 %v2620, %v2764
        %v2859 = vmax.f32 %v2619, %v2766
        %v2860 = vmax.f32 %v2621, %v2768
        %v2861 = vmax.f32 %v2629, %v2770
        %v2862 = vmax.f32 %v2637, %v2772
        %v2863 = vmax.f32 %v2636, %v2774
        %v2864 = vmax.f32 %v2638, %v2776
        %v2865 = vmax.f32 %v2646, %v2778
        %v2866 = vmax.f32 %v2654, %v2780
        %v2867 = vmax.f32 %v2653, %v2782
        %v2868 = vmax.f32 %v2655, %v2784
        %v2869 = vmax.f32 %v2663, %v2786
        %v2870 = vmax.f32 %v2671, %v2788
        %v2871 = vmax.f32 %v2670, %v2790
        %v2872 = vmax.f32 %v2672, %v2792
        %2873 = vst.msk [vmem:[#allocation3] sm:$0xff] %vm2107, 0.0
        %vm2874 = vcmask 254976
        %2875 = vst.msk [vmem:[#allocation3 + $0x8] sm:$0x3] %vm2874, 0.0
        %s2876 = scalar_lea.vmem [#allocation3], 96
        %2877 = vst.msk [vmem:[%s2876] sm:$0xff] %vm2107, 0.0
        %2878 = vst.msk [vmem:[%s2876 + $0x8] sm:$0x3] %vm2874, 0.0
        %vm2879 = vcmask 253952
        %2880 = vst.msk [vmem:[#allocation3] sm:$0x1] %vm2879, 0.0
        %2881 = vst.msk [vmem:[#allocation3 + $0x10] sm:$0x1] %vm2879, 0.0
        %2882 = vst.msk [vmem:[#allocation3 + $0x20] sm:$0x1] %vm2879, 0.0
        %2883 = vst.msk [vmem:[#allocation3 + $0x30] sm:$0x1] %vm2879, 0.0
        %2884 = vst.msk [vmem:[#allocation3 + $0x40] sm:$0x1] %vm2879, 0.0
        %2885 = vst.msk [vmem:[#allocation3 + $0x50] sm:$0x1] %vm2879, 0.0
        %2886 = vst.msk [vmem:[#allocation3 + $0x60] sm:$0x1] %vm2879, 0.0
        %2887 = vst.msk [vmem:[#allocation3 + $0x9] sm:$0x1] %vm2879, 0.0
        %2888 = vst.msk [vmem:[#allocation3 + $0x19] sm:$0x1] %vm2879, 0.0
        %2889 = vst.msk [vmem:[#allocation3 + $0x29] sm:$0x1] %vm2879, 0.0
        %2890 = vst.msk [vmem:[#allocation3 + $0x39] sm:$0x1] %vm2879, 0.0
        %2891 = vst.msk [vmem:[#allocation3 + $0x49] sm:$0x1] %vm2879, 0.0
        %2892 = vst.msk [vmem:[#allocation3 + $0x59] sm:$0x1] %vm2879, 0.0
        %2893 = vst.msk [vmem:[#allocation3 + $0x69] sm:$0x1] %vm2879, 0.0
        %v2934 = vlaneseq
        %v2935 = vshrl.u32 %v2934, 7
        %v2936 = vsub.s32 0, %v2935
        %v2937 = vrot.slane %v2833, %v2936
        %v2938 = vlaneseq
        %v2939 = vshrl.u32 %v2938, 7
        %v2940 = vsub.s32 0, %v2939
        %v2941 = vrot.slane %v2834, %v2940
        %v2942 = vlaneseq
        %v2943 = vshrl.u32 %v2942, 7
        %v2944 = vsub.s32 0, %v2943
        %v2945 = vrot.slane %v2835, %v2944
        %v2946 = vlaneseq
        %v2947 = vshrl.u32 %v2946, 7
        %v2948 = vsub.s32 0, %v2947
        %v2949 = vrot.slane %v2836, %v2948
        %v2950 = vlaneseq
        %v2951 = vshrl.u32 %v2950, 7
        %v2952 = vsub.s32 0, %v2951
        %v2953 = vrot.slane %v2837, %v2952
        %v2954 = vlaneseq
        %v2955 = vshrl.u32 %v2954, 7
        %v2956 = vsub.s32 0, %v2955
        %v2957 = vrot.slane %v2838, %v2956
        %v2958 = vlaneseq
        %v2959 = vshrl.u32 %v2958, 7
        %v2960 = vsub.s32 0, %v2959
        %v2961 = vrot.slane %v2839, %v2960
        %v2962 = vlaneseq
        %v2963 = vshrl.u32 %v2962, 7
        %v2964 = vsub.s32 0, %v2963
        %v2965 = vrot.slane %v2840, %v2964
        %v2966 = vlaneseq
        %v2967 = vshrl.u32 %v2966, 7
        %v2968 = vsub.s32 0, %v2967
        %v2969 = vrot.slane %v2841, %v2968
        %v2970 = vlaneseq
        %v2971 = vshrl.u32 %v2970, 7
        %v2972 = vsub.s32 0, %v2971
        %v2973 = vrot.slane %v2842, %v2972
        %v2974 = vlaneseq
        %v2975 = vshrl.u32 %v2974, 7
        %v2976 = vsub.s32 0, %v2975
        %v2977 = vrot.slane %v2843, %v2976
        %v2978 = vlaneseq
        %v2979 = vshrl.u32 %v2978, 7
        %v2980 = vsub.s32 0, %v2979
        %v2981 = vrot.slane %v2844, %v2980
        %v2982 = vlaneseq
        %v2983 = vshrl.u32 %v2982, 7
        %v2984 = vsub.s32 0, %v2983
        %v2985 = vrot.slane %v2845, %v2984
        %v2986 = vlaneseq
        %v2987 = vshrl.u32 %v2986, 7
        %v2988 = vsub.s32 0, %v2987
        %v2989 = vrot.slane %v2846, %v2988
        %v2990 = vlaneseq
        %v2991 = vshrl.u32 %v2990, 7
        %v2992 = vsub.s32 0, %v2991
        %v2993 = vrot.slane %v2847, %v2992
        %v2994 = vlaneseq
        %v2995 = vshrl.u32 %v2994, 7
        %v2996 = vsub.s32 0, %v2995
        %v2997 = vrot.slane %v2848, %v2996
        %v2998 = vlaneseq
        %v2999 = vshrl.u32 %v2998, 7
        %v3000 = vsub.s32 0, %v2999
        %v3001 = vrot.slane %v2849, %v3000
        %v3002 = vlaneseq
        %v3003 = vshrl.u32 %v3002, 7
        %v3004 = vsub.s32 0, %v3003
        %v3005 = vrot.slane %v2850, %v3004
        %v3006 = vlaneseq
        %v3007 = vshrl.u32 %v3006, 7
        %v3008 = vsub.s32 0, %v3007
        %v3009 = vrot.slane %v2851, %v3008
        %v3010 = vlaneseq
        %v3011 = vshrl.u32 %v3010, 7
        %v3012 = vsub.s32 0, %v3011
        %v3013 = vrot.slane %v2852, %v3012
        %v3014 = vlaneseq
        %v3015 = vshrl.u32 %v3014, 7
        %v3016 = vsub.s32 0, %v3015
        %v3017 = vrot.slane %v2853, %v3016
        %v3018 = vlaneseq
        %v3019 = vshrl.u32 %v3018, 7
        %v3020 = vsub.s32 0, %v3019
        %v3021 = vrot.slane %v2854, %v3020
        %v3022 = vlaneseq
        %v3023 = vshrl.u32 %v3022, 7
        %v3024 = vsub.s32 0, %v3023
        %v3025 = vrot.slane %v2855, %v3024
        %v3026 = vlaneseq
        %v3027 = vshrl.u32 %v3026, 7
        %v3028 = vsub.s32 0, %v3027
        %v3029 = vrot.slane %v2856, %v3028
        %v3030 = vlaneseq
        %v3031 = vshrl.u32 %v3030, 7
        %v3032 = vsub.s32 0, %v3031
        %v3033 = vrot.slane %v2857, %v3032
        %v3034 = vlaneseq
        %v3035 = vshrl.u32 %v3034, 7
        %v3036 = vsub.s32 0, %v3035
        %v3037 = vrot.slane %v2858, %v3036
        %v3038 = vlaneseq
        %v3039 = vshrl.u32 %v3038, 7
        %v3040 = vsub.s32 0, %v3039
        %v3041 = vrot.slane %v2859, %v3040
        %v3042 = vlaneseq
        %v3043 = vshrl.u32 %v3042, 7
        %v3044 = vsub.s32 0, %v3043
        %v3045 = vrot.slane %v2860, %v3044
        %v3046 = vlaneseq
        %v3047 = vshrl.u32 %v3046, 7
        %v3048 = vsub.s32 0, %v3047
        %v3049 = vrot.slane %v2861, %v3048
        %v3050 = vlaneseq
        %v3051 = vshrl.u32 %v3050, 7
        %v3052 = vsub.s32 0, %v3051
        %v3053 = vrot.slane %v2862, %v3052
        %v3054 = vlaneseq
        %v3055 = vshrl.u32 %v3054, 7
        %v3056 = vsub.s32 0, %v3055
        %v3057 = vrot.slane %v2863, %v3056
        %v3058 = vlaneseq
        %v3059 = vshrl.u32 %v3058, 7
        %v3060 = vsub.s32 0, %v3059
        %v3061 = vrot.slane %v2864, %v3060
        %v3062 = vlaneseq
        %v3063 = vshrl.u32 %v3062, 7
        %v3064 = vsub.s32 0, %v3063
        %v3065 = vrot.slane %v2865, %v3064
        %v3066 = vlaneseq
        %v3067 = vshrl.u32 %v3066, 7
        %v3068 = vsub.s32 0, %v3067
        %v3069 = vrot.slane %v2866, %v3068
        %v3070 = vlaneseq
        %v3071 = vshrl.u32 %v3070, 7
        %v3072 = vsub.s32 0, %v3071
        %v3073 = vrot.slane %v2867, %v3072
        %v3074 = vlaneseq
        %v3075 = vshrl.u32 %v3074, 7
        %v3076 = vsub.s32 0, %v3075
        %v3077 = vrot.slane %v2868, %v3076
        %v3078 = vlaneseq
        %v3079 = vshrl.u32 %v3078, 7
        %v3080 = vsub.s32 0, %v3079
        %v3081 = vrot.slane %v2869, %v3080
        %v3082 = vlaneseq
        %v3083 = vshrl.u32 %v3082, 7
        %v3084 = vsub.s32 0, %v3083
        %v3085 = vrot.slane %v2870, %v3084
        %v3086 = vlaneseq
        %v3087 = vshrl.u32 %v3086, 7
        %v3088 = vsub.s32 0, %v3087
        %v3089 = vrot.slane %v2871, %v3088
        %v3090 = vlaneseq
        %v3091 = vshrl.u32 %v3090, 7
        %v3092 = vsub.s32 0, %v3091
        %v3093 = vrot.slane %v2872, %v3092
        %vm3094 = vcmask 1041409
        %v3095 = vsel %vm3094, %v2941, %v2937
        %vm3096 = vcmask 1042434
        %v3097 = vsel %vm3096, %v2945, %v3095
        %vm3098 = vcmask 1043459
        %v3099 = vsel %vm3098, %v2949, %v3097
        %vm3100 = vcmask 1044484
        %v3101 = vsel %vm3100, %v2953, %v3099
        %vm3102 = vcmask 1045509
        %v3103 = vsel %vm3102, %v2957, %v3101
        %vm3104 = vcmask 1046534
        %v3105 = vsel %vm3104, %v2961, %v3103
        %vm3106 = vcmask 1047559
        %v3107 = vsel %vm3106, %v2965, %v3105
        %v3108 = vsel %vm3094, %v2973, %v2969
        %v3109 = vsel %vm3096, %v2977, %v3108
        %v3110 = vsel %vm3098, %v2981, %v3109
        %v3111 = vsel %vm3100, %v2985, %v3110
        %v3112 = vsel %vm3102, %v2989, %v3111
        %v3113 = vsel %vm3104, %v2993, %v3112
        %v3114 = vsel %vm3106, %v2997, %v3113
        %v3115 = vsel %vm3094, %v3005, %v3001
        %v3116 = vsel %vm3096, %v3009, %v3115
        %v3117 = vsel %vm3098, %v3013, %v3116
        %v3118 = vsel %vm3100, %v3017, %v3117
        %v3119 = vsel %vm3102, %v3021, %v3118
        %v3120 = vsel %vm3104, %v3025, %v3119
        %v3121 = vsel %vm3106, %v3029, %v3120
        %v3122 = vsel %vm3094, %v3037, %v3033
        %v3123 = vsel %vm3096, %v3041, %v3122
        %v3124 = vsel %vm3098, %v3045, %v3123
        %v3125 = vsel %vm3100, %v3049, %v3124
        %v3126 = vsel %vm3102, %v3053, %v3125
        %v3127 = vsel %vm3104, %v3057, %v3126
        %v3128 = vsel %vm3106, %v3061, %v3127
        %v3129 = vsel %vm3094, %v3069, %v3065
        %v3130 = vsel %vm3096, %v3073, %v3129
        %v3131 = vsel %vm3098, %v3077, %v3130
        %v3132 = vsel %vm3100, %v3081, %v3131
        %v3133 = vsel %vm3102, %v3085, %v3132
        %v3134 = vsel %vm3104, %v3089, %v3133
        %v3135 = vsel %vm3106, %v3093, %v3134
        %s3141 = scalar_lea.vmem [#allocation3], 16
        %3142 = vst.msk [vmem:[%s3141 + $0x1] sm:$0xff] %vm2107, %v3107
        %3143 = vst.msk [vmem:[%s3141 + $0x11] sm:$0xff] %vm2107, %v3114
        %3144 = vst.msk [vmem:[%s3141 + $0x21] sm:$0xff] %vm2107, %v3121
        %3145 = vst.msk [vmem:[%s3141 + $0x31] sm:$0xff] %vm2107, %v3128
        %3146 = vst.msk [vmem:[%s3141 + $0x41] sm:$0xff] %vm2107, %v3135
        %v3147 = vld [vmem:[#allocation3] sm:$0xff]
        %v3148 = vld [vmem:[#allocation3 + $0x8] sm:$0x3]
        %v3149 = vld [vmem:[#allocation3 + $0x10] sm:$0xff]
        %v3150 = vld [vmem:[#allocation3 + $0x18] sm:$0x3]
        %v3151 = vld [vmem:[#allocation3 + $0x20] sm:$0xff]
        %v3152 = vld [vmem:[#allocation3 + $0x28] sm:$0x3]
        %v3153 = vld [vmem:[#allocation3 + $0x30] sm:$0xff]
        %v3154 = vld [vmem:[#allocation3 + $0x38] sm:$0x3]
        %v3155 = vld [vmem:[#allocation3 + $0x40] sm:$0xff]
        %v3156 = vld [vmem:[#allocation3 + $0x48] sm:$0x3]
        %v3157 = vld [vmem:[#allocation3 + $0x50] sm:$0xff]
        %v3158 = vld [vmem:[#allocation3 + $0x58] sm:$0x3]
        %v3159 = vld [vmem:[#allocation3 + $0x60] sm:$0xff]
        %v3160 = vld [vmem:[#allocation3 + $0x68] sm:$0x3]
        %v3171 = vrot.slane %v3147, 1
        %v3172 = vrot.slane %v3148, 1
        %v3173 = vsel %vm383, %v3171, %v3172
        %v3174 = vrot.slane %v3149, 1
        %v3175 = vrot.slane %v3150, 1
        %v3176 = vsel %vm383, %v3174, %v3175
        %v3177 = vrot.slane %v3151, 1
        %v3178 = vrot.slane %v3152, 1
        %v3179 = vsel %vm383, %v3177, %v3178
        %v3180 = vrot.slane %v3153, 1
        %v3181 = vrot.slane %v3154, 1
        %v3182 = vsel %vm383, %v3180, %v3181
        %v3183 = vrot.slane %v3155, 1
        %v3184 = vrot.slane %v3156, 1
        %v3185 = vsel %vm383, %v3183, %v3184
        %3186 = vrot.lane.b32.xlu0 %v3173, 32
        %v3187 = vpop.permute.xlu0 %3186
        %3188 = vrot.lane.b32.xlu0 %v3176, 32
        %v3189 = vpop.permute.xlu0 %3188
        %3190 = vrot.lane.b32.xlu0 %v3179, 32
        %v3191 = vpop.permute.xlu0 %3190
        %3192 = vrot.lane.b32.xlu0 %v3182, 32
        %v3193 = vpop.permute.xlu0 %3192
        %3194 = vrot.lane.b32.xlu0 %v3185, 32
        %v3195 = vpop.permute.xlu0 %3194
        %v3201 = vrot.slane %v3147, 2
        %v3202 = vrot.slane %v3148, 2
        %v3203 = vsel %vm494, %v3201, %v3202
        %v3204 = vrot.slane %v3149, 2
        %v3205 = vrot.slane %v3150, 2
        %v3206 = vsel %vm494, %v3204, %v3205
        %v3207 = vrot.slane %v3151, 2
        %v3208 = vrot.slane %v3152, 2
        %v3209 = vsel %vm494, %v3207, %v3208
        %v3210 = vrot.slane %v3153, 2
        %v3211 = vrot.slane %v3154, 2
        %v3212 = vsel %vm494, %v3210, %v3211
        %v3213 = vrot.slane %v3155, 2
        %v3214 = vrot.slane %v3156, 2
        %v3215 = vsel %vm494, %v3213, %v3214
        %3216 = vrot.lane.b32.xlu0 %v3203, 64
        %v3217 = vpop.permute.xlu0 %3216
        %3218 = vrot.lane.b32.xlu0 %v3206, 64
        %v3219 = vpop.permute.xlu0 %3218
        %3220 = vrot.lane.b32.xlu0 %v3209, 64
        %v3221 = vpop.permute.xlu0 %3220
        %3222 = vrot.lane.b32.xlu0 %v3212, 64
        %v3223 = vpop.permute.xlu0 %3222
        %3224 = vrot.lane.b32.xlu0 %v3215, 64
        %v3225 = vpop.permute.xlu0 %3224
        %3232 = vrot.lane.b32.xlu0 %v3149, 96
        %v3233 = vpop.permute.xlu0 %3232
        %3234 = vrot.lane.b32.xlu0 %v3151, 96
        %v3235 = vpop.permute.xlu0 %3234
        %3236 = vrot.lane.b32.xlu0 %v3153, 96
        %v3237 = vpop.permute.xlu0 %3236
        %3238 = vrot.lane.b32.xlu0 %v3155, 96
        %v3239 = vpop.permute.xlu0 %3238
        %3240 = vrot.lane.b32.xlu0 %v3157, 96
        %v3241 = vpop.permute.xlu0 %3240
        %v3248 = vrot.slane %v3157, 1
        %v3249 = vrot.slane %v3158, 1
        %v3250 = vsel %vm383, %v3248, %v3249
        %v3256 = vrot.slane %v3157, 2
        %v3257 = vrot.slane %v3158, 2
        %v3258 = vsel %vm494, %v3256, %v3257
        %3259 = vrot.lane.b32.xlu0 %v3206, 32
        %v3260 = vpop.permute.xlu0 %3259
        %3261 = vrot.lane.b32.xlu0 %v3209, 32
        %v3262 = vpop.permute.xlu0 %3261
        %3263 = vrot.lane.b32.xlu0 %v3212, 32
        %v3264 = vpop.permute.xlu0 %3263
        %3265 = vrot.lane.b32.xlu0 %v3215, 32
        %v3266 = vpop.permute.xlu0 %3265
        %3267 = vrot.lane.b32.xlu0 %v3258, 32
        %v3268 = vpop.permute.xlu0 %3267
        %3275 = vrot.lane.b32.xlu0 %v3151, 64
        %v3276 = vpop.permute.xlu0 %3275
        %3277 = vrot.lane.b32.xlu0 %v3153, 64
        %v3278 = vpop.permute.xlu0 %3277
        %3279 = vrot.lane.b32.xlu0 %v3155, 64
        %v3280 = vpop.permute.xlu0 %3279
        %3281 = vrot.lane.b32.xlu0 %v3157, 64
        %v3282 = vpop.permute.xlu0 %3281
        %3283 = vrot.lane.b32.xlu0 %v3159, 64
        %v3284 = vpop.permute.xlu0 %3283
        %v3291 = vrot.slane %v3159, 1
        %v3292 = vrot.slane %v3160, 1
        %v3293 = vsel %vm383, %v3291, %v3292
        %3294 = vrot.lane.b32.xlu0 %v3179, 96
        %v3295 = vpop.permute.xlu0 %3294
        %3296 = vrot.lane.b32.xlu0 %v3182, 96
        %v3297 = vpop.permute.xlu0 %3296
        %3298 = vrot.lane.b32.xlu0 %v3185, 96
        %v3299 = vpop.permute.xlu0 %3298
        %3300 = vrot.lane.b32.xlu0 %v3250, 96
        %v3301 = vpop.permute.xlu0 %3300
        %3302 = vrot.lane.b32.xlu0 %v3293, 96
        %v3303 = vpop.permute.xlu0 %3302
        %v3309 = vrot.slane %v3159, 2
        %v3310 = vrot.slane %v3160, 2
        %v3311 = vsel %vm494, %v3309, %v3310
        %v3312 = vsel %vm2107, %v3147, %v3187
        %v3313 = vsel %vm2107, %v3149, %v3189
        %v3314 = vsel %vm2107, %v3151, %v3191
        %v3315 = vsel %vm2107, %v3153, %v3193
        %v3316 = vsel %vm2107, %v3155, %v3195
        %v3317 = vsel %vm2149, %v3312, %v3217
        %v3318 = vsel %vm2149, %v3313, %v3219
        %v3319 = vsel %vm2149, %v3314, %v3221
        %v3320 = vsel %vm2149, %v3315, %v3223
        %v3321 = vsel %vm2149, %v3316, %v3225
        %v3322 = vsel %vm2191, %v3317, %v3233
        %v3323 = vsel %vm2191, %v3318, %v3235
        %v3324 = vsel %vm2191, %v3319, %v3237
        %v3325 = vsel %vm2191, %v3320, %v3239
        %v3326 = vsel %vm2191, %v3321, %v3241
        %v3327 = vsel %vm2107, %v3176, %v3260
        %v3328 = vsel %vm2107, %v3179, %v3262
        %v3329 = vsel %vm2107, %v3182, %v3264
        %v3330 = vsel %vm2107, %v3185, %v3266
        %v3331 = vsel %vm2107, %v3250, %v3268
        %v3332 = vsel %vm2149, %v3327, %v3276
        %v3333 = vsel %vm2149, %v3328, %v3278
        %v3334 = vsel %vm2149, %v3329, %v3280
        %v3335 = vsel %vm2149, %v3330, %v3282
        %v3336 = vsel %vm2149, %v3331, %v3284
        %v3337 = vsel %vm2191, %v3332, %v3295
        %v3338 = vsel %vm2191, %v3333, %v3297
        %v3339 = vsel %vm2191, %v3334, %v3299
        %v3340 = vsel %vm2191, %v3335, %v3301
        %v3341 = vsel %vm2191, %v3336, %v3303
        %v3342 = vld [vmem:[%s5] sm:$0xff]
        %v3343 = vld [vmem:[%s5 + $0x8] sm:$0xff]
        %v3344 = vld [vmem:[%s5 + $0x10] sm:$0xff]
        %v3345 = vld [vmem:[%s5 + $0x18] sm:$0xff]
        %v3346 = vld [vmem:[%s5 + $0x20] sm:$0xff]
        %v3347 = vld [vmem:[%s5 + $0x28] sm:$0xff]
        %v3348 = vld [vmem:[%s5 + $0x30] sm:$0xff]
        %v3349 = vld [vmem:[%s5 + $0x38] sm:$0xff]
        %v3350 = vld [vmem:[%s5 + $0x40] sm:$0xff]
        %v3351 = vld [vmem:[%s5 + $0x48] sm:$0xff]
        %v3352 = vld [vmem:[%s5 + $0x50] sm:$0xff]
        %v3353 = vld [vmem:[%s5 + $0x58] sm:$0xff]
        %v3354 = vld [vmem:[%s5 + $0x60] sm:$0xff]
        %v3355 = vld [vmem:[%s5 + $0x68] sm:$0xff]
        %v3356 = vld [vmem:[%s5 + $0x70] sm:$0xff]
        %v3357 = vld [vmem:[%s5 + $0x78] sm:$0xff]
        %v3358 = vld [vmem:[%s5 + $0x80] sm:$0xff]
        %v3359 = vld [vmem:[%s5 + $0x88] sm:$0xff]
        %v3360 = vld [vmem:[%s5 + $0x90] sm:$0xff]
        %v3361 = vld [vmem:[%s5 + $0x98] sm:$0xff]
        %v3362 = vld [vmem:[%s5 + $0xa0] sm:$0xff]
        %v3363 = vld [vmem:[%s5 + $0xa8] sm:$0xff]
        %v3364 = vld [vmem:[%s5 + $0xb0] sm:$0xff]
        %v3365 = vld [vmem:[%s5 + $0xb8] sm:$0xff]
        %v3366 = vld [vmem:[%s5 + $0xc0] sm:$0xff]
        %v3367 = vld [vmem:[%s5 + $0xc8] sm:$0xff]
        %v3368 = vld [vmem:[%s5 + $0xd0] sm:$0xff]
        %v3369 = vld [vmem:[%s5 + $0xd8] sm:$0xff]
        %v3370 = vld [vmem:[%s5 + $0xe0] sm:$0xff]
        %v3371 = vld [vmem:[%s5 + $0xe8] sm:$0xff]
        %v3372 = vld [vmem:[%s5 + $0xf0] sm:$0xff]
        %v3373 = vld [vmem:[%s5 + $0xf8] sm:$0xff]
        %v3374 = vld [vmem:[%s5 + $0x100] sm:$0xff]
        %v3375 = vld [vmem:[%s5 + $0x108] sm:$0xff]
        %v3376 = vld [vmem:[%s5 + $0x110] sm:$0xff]
        %v3377 = vld [vmem:[%s5 + $0x118] sm:$0xff]
        %v3378 = vld [vmem:[#allocation8] sm:$0x1]
        %v3380 = vlaneseq
        %v3381 = vshrl.u32 %v3380, 7
        %v3382 = vsub.s32 0, %v3381
        %v3383 = vrot.slane %v3378, %v3382
        %v3385 = vsel %vm2107, %v3209, 0
        %v3387 = vsel %vm2107, %v3212, 0
        %v3389 = vsel %vm2107, %v3215, 0
        %v3391 = vsel %vm2107, %v3258, 0
        %v3393 = vsel %vm2107, %v3311, 0
        %3395 = vmatprep.subr.mxu0 0.0
        %3396 = vmatpush1.msra.mxu0 %v3342
        %3397 = vmatprep.subr.mxu0 0.0
        %3398 = vmatpush1.msra.mxu0 %v3343
        %3399 = vmatprep.subr.mxu0 0.0
        %3400 = vmatpush1.msra.mxu0 %v3344
        %3401 = vmatprep.subr.mxu0 0.0
        %3402 = vmatpush1.msra.mxu0 %v3345
        %3403 = vmatprep.subr.mxu0 0.0
        %3404 = vmatpush1.msra.mxu0 %v3346
        %3405 = vmatprep.subr.mxu0 0.0
        %3406 = vmatpush1.msra.mxu0 %v3347
        %3407 = vmatprep.subr.mxu0 0.0
        %3408 = vmatpush1.msra.mxu0 %v3348
        %3409 = vmatprep.subr.mxu0 0.0
        %3410 = vmatpush1.msra.mxu0 %v3349
        %3411 = vmatprep.subr.mxu0 0.0
        %3412 = vmatpush1.msra.mxu0 %v3350
        %3413 = vmatprep.subr.mxu0 0.0
        %3414 = vmatpush1.msra.mxu0 %v3351
        %3415 = vmatprep.subr.mxu0 0.0
        %3416 = vmatpush1.msra.mxu0 %v3352
        %3417 = vmatprep.subr.mxu0 0.0
        %3418 = vmatpush1.msra.mxu0 %v3353
        %3419 = vmatprep.subr.mxu0 0.0
        %3420 = vmatpush1.msra.mxu0 %v3354
        %3421 = vmatprep.subr.mxu0 0.0
        %3422 = vmatpush1.msra.mxu0 %v3355
        %3423 = vmatprep.subr.mxu0 0.0
        %3424 = vmatpush1.msra.mxu0 %v3356
        %3425 = vmatprep.subr.mxu0 0.0
        %3426 = vmatpush1.msra.mxu0 %v3357
        %3427 = vmatprep.subr.mxu0 0.0
        %3428 = vmatpush1.msra.mxu0 %v3358
        %3429 = vmatprep.subr.mxu0 0.0
        %3430 = vmatpush1.msra.mxu0 %v3359
        %3431 = vmatprep.subr.mxu0 0.0
        %3432 = vmatpush1.msra.mxu0 %v3360
        %3433 = vmatprep.subr.mxu0 0.0
        %3434 = vmatpush1.msra.mxu0 %v3361
        %3435 = vmatprep.subr.mxu0 0.0
        %3436 = vmatpush1.msra.mxu0 %v3362
        %3437 = vmatprep.subr.mxu0 0.0
        %3438 = vmatpush1.msra.mxu0 %v3363
        %3439 = vmatprep.subr.mxu0 0.0
        %3440 = vmatpush1.msra.mxu0 %v3364
        %3441 = vmatprep.subr.mxu0 0.0
        %3442 = vmatpush1.msra.mxu0 %v3365
        %3443 = vmatprep.subr.mxu0 0.0
        %3444 = vmatpush1.msra.mxu0 %v3366
        %3445 = vmatprep.subr.mxu0 0.0
        %3446 = vmatpush1.msra.mxu0 %v3367
        %3447 = vmatprep.subr.mxu0 0.0
        %3448 = vmatpush1.msra.mxu0 %v3368
        %3449 = vmatprep.subr.mxu0 0.0
        %3450 = vmatpush1.msra.mxu0 %v3369
        %3451 = vmatprep.subr.mxu0 0.0
        %3452 = vmatpush1.msra.mxu0 %v3370
        %3453 = vmatprep.subr.mxu0 0.0
        %3454 = vmatpush1.msra.mxu0 %v3371
        %3455 = vmatprep.subr.mxu0 0.0
        %3456 = vmatpush1.msra.mxu0 %v3372
        %3457 = vmatprep.subr.mxu0 0.0
        %3458 = vmatpush1.msra.mxu0 %v3373
        %3459 = vmatprep.mubr.f32.mxu0 %v3337
        %3460 = vmatmul.mubr.f32.gmra.mrb[0].mxu0 %v3322
        %v3461 = vpop.f32.mrb[0].mxu0
        %v3462 = vadd.f32 %v3383, %v3461
        %v3463 = vpop.f32.mrb[0].mxu0
        %3464 = vmatprep.mubr.f32.mxu0 %v3338
        %3465 = vmatmul.mubr.f32.gmra.mrb[0].mxu0 %v3323
        %v3466 = vpop.f32.mrb[0].mxu0
        %v3467 = vadd.f32 %v3383, %v3466
        %v3468 = vpop.f32.mrb[0].mxu0
        %3469 = vmatprep.mubr.f32.mxu0 %v3339
        %3470 = vmatmul.mubr.f32.gmra.mrb[0].mxu0 %v3324
        %v3471 = vpop.f32.mrb[0].mxu0
        %v3472 = vadd.f32 %v3383, %v3471
        %v3473 = vpop.f32.mrb[0].mxu0
        %3474 = vmatprep.mubr.f32.mxu0 %v3340
        %3475 = vmatmul.mubr.f32.gmra.mrb[0].mxu0 %v3325
        %v3476 = vpop.f32.mrb[0].mxu0
        %v3477 = vadd.f32 %v3383, %v3476
        %v3478 = vpop.f32.mrb[0].mxu0
        %3479 = vmatprep.mubr.f32.mxu0 %v3341
        %3480 = vmatmul.mubr.f32.gmra.mrb[0].mxu0 %v3326
        %v3481 = vpop.f32.mrb[0].mxu0
        %v3482 = vadd.f32 %v3383, %v3481
        %v3483 = vpop.f32.mrb[0].mxu0
        %3484 = vdwg.mxu0
        %3485 = vmatprep.subr.mxu0 0.0
        %3486 = vmatpush1.msra.mxu0 %v3374
        %3487 = vmatprep.subr.mxu0 0.0
        %3488 = vmatpush1.msra.mxu0 %v3375
        %3489 = vmatprep.subr.mxu0 0.0
        %3490 = vmatpush1.msra.mxu0 %v3376
        %3491 = vmatprep.subr.mxu0 0.0
        %3492 = vmatpush1.msra.mxu0 %v3377
        %3493 = vmatprep.subr.mxu0 0.0
        %3494 = vmatpush1.msra.mxu0 0.0
        %3495 = vmatprep.subr.mxu0 0.0
        %3496 = vmatpush1.msra.mxu0 0.0
        %3497 = vmatprep.subr.mxu0 0.0
        %3498 = vmatpush1.msra.mxu0 0.0
        %3499 = vmatprep.subr.mxu0 0.0
        %3500 = vmatpush1.msra.mxu0 0.0
        %3501 = vmatprep.subr.mxu0 0.0
        %3502 = vmatpush1.msra.mxu0 0.0
        %3503 = vmatprep.subr.mxu0 0.0
        %3504 = vmatpush1.msra.mxu0 0.0
        %3505 = vmatprep.subr.mxu0 0.0
        %3506 = vmatpush1.msra.mxu0 0.0
        %3507 = vmatprep.subr.mxu0 0.0
        %3508 = vmatpush1.msra.mxu0 0.0
        %3509 = vmatprep.subr.mxu0 0.0
        %3510 = vmatpush1.msra.mxu0 0.0
        %3511 = vmatprep.subr.mxu0 0.0
        %3512 = vmatpush1.msra.mxu0 0.0
        %3513 = vmatprep.subr.mxu0 0.0
        %3514 = vmatpush1.msra.mxu0 0.0
        %3515 = vmatprep.subr.mxu0 0.0
        %3516 = vmatpush1.msra.mxu0 0.0
        %3517 = vmatprep.subr.mxu0 0.0
        %3518 = vmatpush1.msra.mxu0 0.0
        %3519 = vmatprep.subr.mxu0 0.0
        %3520 = vmatpush1.msra.mxu0 0.0
        %3521 = vmatprep.subr.mxu0 0.0
        %3522 = vmatpush1.msra.mxu0 0.0
        %3523 = vmatprep.subr.mxu0 0.0
        %3524 = vmatpush1.msra.mxu0 0.0
        %3525 = vmatprep.subr.mxu0 0.0
        %3526 = vmatpush1.msra.mxu0 0.0
        %3527 = vmatprep.subr.mxu0 0.0
        %3528 = vmatpush1.msra.mxu0 0.0
        %3529 = vmatprep.subr.mxu0 0.0
        %3530 = vmatpush1.msra.mxu0 0.0
        %3531 = vmatprep.subr.mxu0 0.0
        %3532 = vmatpush1.msra.mxu0 0.0
        %3533 = vmatprep.subr.mxu0 0.0
        %3534 = vmatpush1.msra.mxu0 0.0
        %3535 = vmatprep.subr.mxu0 0.0
        %3536 = vmatpush1.msra.mxu0 0.0
        %3537 = vmatprep.subr.mxu0 0.0
        %3538 = vmatpush1.msra.mxu0 0.0
        %3539 = vmatprep.subr.mxu0 0.0
        %3540 = vmatpush1.msra.mxu0 0.0
        %3541 = vmatprep.subr.mxu0 0.0
        %3542 = vmatpush1.msra.mxu0 0.0
        %3543 = vmatprep.subr.mxu0 0.0
        %3544 = vmatpush1.msra.mxu0 0.0
        %3545 = vmatprep.subr.mxu0 0.0
        %3546 = vmatpush1.msra.mxu0 0.0
        %3547 = vmatprep.subr.mxu0 0.0
        %3548 = vmatpush1.msra.mxu0 0.0
        %3549 = vmatprep.mubr.f32.mxu0 0.0
        %3550 = vmatmul.mubr.f32.gmra.mrb[0].mxu0 %v3385
        %v3551 = vpop.f32.mrb[0].mxu0
        %v3552 = vadd.f32 %v3462, %v3551
        %v3553 = vpop.f32.mrb[0].mxu0
        %3554 = vmatprep.mubr.f32.mxu0 0.0
        %3555 = vmatmul.mubr.f32.gmra.mrb[0].mxu0 %v3387
        %v3556 = vpop.f32.mrb[0].mxu0
        %v3557 = vadd.f32 %v3467, %v3556
        %v3558 = vpop.f32.mrb[0].mxu0
        %3559 = vmatprep.mubr.f32.mxu0 0.0
        %3560 = vmatmul.mubr.f32.gmra.mrb[0].mxu0 %v3389
        %v3561 = vpop.f32.mrb[0].mxu0
        %v3562 = vadd.f32 %v3472, %v3561
        %v3563 = vpop.f32.mrb[0].mxu0
        %3564 = vmatprep.mubr.f32.mxu0 0.0
        %3565 = vmatmul.mubr.f32.gmra.mrb[0].mxu0 %v3391
        %v3566 = vpop.f32.mrb[0].mxu0
        %v3567 = vadd.f32 %v3477, %v3566
        %v3568 = vpop.f32.mrb[0].mxu0
        %3569 = vmatprep.mubr.f32.mxu0 0.0
        %3570 = vmatmul.mubr.f32.gmra.mrb[0].mxu0 %v3393
        %v3571 = vpop.f32.mrb[0].mxu0
        %v3572 = vadd.f32 %v3482, %v3571
        %v3573 = vpop.f32.mrb[0].mxu0
        %3574 = vdwg.mxu0
        %v3575 = vmax.f32 %v3552, 0.0
        %v3576 = vmax.f32 %v3557, 0.0
        %v3577 = vmax.f32 %v3562, 0.0
        %v3578 = vmax.f32 %v3567, 0.0
        %v3579 = vmax.f32 %v3572, 0.0
        %3580 = vst.msk [vmem:[%s316] sm:$0xff] %vm2149, %v3575
        %3581 = vst.msk [vmem:[%s316 + $0x8] sm:$0xff] %vm2149, %v3576
        %3582 = vst.msk [vmem:[%s316 + $0x10] sm:$0xff] %vm2149, %v3577
        %3583 = vst.msk [vmem:[%s316 + $0x18] sm:$0xff] %vm2149, %v3578
        %3584 = vst.msk [vmem:[%s316 + $0x20] sm:$0xff] %vm2149, %v3579
        %p3585 = scmp.lt.s32.totalorder %s20, 1
        %s3586 = scalar_select %p3585, %s20, 1
        %s3587 = smul.addr %s3586, 5
        %s3588 = smul.addr %s3587, 8
        %s3589 = scalar_lea.vmem %s7, %s3588
        // Predicated region
        $region61: #{cnn_forward.2} parent=47 // pred_check
          %p3590 = pneg %p190
        $region62: #{cnn_forward.2} parent=47 // pred_check_branch
          %3592 = sbr.rel (%p3590) target = $region64
        $region63: #{cnn_forward.2} parent=47 // pred_region
          _
        $region64: #{cnn_forward.2} parent=47 // pred_fallthru
          _
      $region48: #{cnn_forward.2} parent=5 // pred_fallthru
        _
      %p3593 = scmp.le.s32.totalorder 2, %s15
      // Predicated region
      $region65: #{cnn_forward.2} parent=5 // pred_check
        %p3594 = pneg %p3593
      $region66: #{cnn_forward.2} parent=5 // pred_check_branch
        %3596 = sbr.rel (%p3594) target = $region68
      $region67: #{cnn_forward.2} parent=5 // pred_region
        %s3597 = ssub.s32 %s15, 2
        // Predicated region
        $region69: #{cnn_forward.2} parent=67 // pred_check
          %p3598 = pneg %p196
        $region70: #{cnn_forward.2} parent=67 // pred_check_branch
          %3600 = sbr.rel (%p3598) target = $region72
        $region71: #{cnn_forward.2} parent=67 // pred_region
          %p3601 = scmp.lt.s32.totalorder %s21, 1
          %s3602 = scalar_select %p3601, %s21, 1
          %s3603 = smul.addr %s3602, 5
          %s3604 = smul.addr %s3603, 8
          %s3605 = scalar_lea.vmem %s7, %s3604
        $region72: #{cnn_forward.2} parent=67 // pred_fallthru
          _
      $region68: #{cnn_forward.2} parent=5 // pred_fallthru
        _
    $region6: #{cnn_forward.2} parent=1 // loop_footer
      %s19 = sadd.s32 1, %s15
    $region7: #{cnn_forward.2} parent=1 // loop_footer_branch
      %14 = sbr.rel target = $region3
    $region8: #{cnn_forward.2} parent=1 // loop_exit
      _
    %3606 = vsyncpa [#allocation5], 1
    %s3607 = scalar_lea.sflag [#allocation5], 1
    %3608 = vsyncpa %s3607, 1
    %3609 = vsyncpa [#allocation7], 1

</llo_original>
